<compile_context>
chip_gen: v7x
topology: tpu7x:2x2x1
jax: 0.10.0
libtpu: 0.0.40
codegen_flags: <defaults>
</compile_context>

<pallas_src>
import functools

import jax
import jax.numpy as jnp
from jax import lax
from jax.experimental import pallas as pl
from jax.experimental.pallas import tpu as pltpu

BN_EPS = 1e-4


def _vmem_limit_bytes():
    """Per-chip VMEM budget (v7x has 64 MiB/TC vs 128 MiB on v5e/v6e)."""
    try:
        cap = getattr(pltpu.get_tpu_info(), "vmem_capacity_bytes", None)
        if cap:
            return int(0.7 * cap)
    except Exception:
        pass
    return 64 * 1024 * 1024


# ----------------------------- in-kernel helpers -----------------------------
def _elu(z):
    # ELU(alpha=1): z if z > 0 else exp(z) - 1
    return jnp.where(z > 0, z, jnp.expm1(z))


def _build_cols(x2d, W):
    """(HW, C) single-image tile -> (HW, 9*C) columns of a 3x3 SAME conv.

    Built entirely in VMEM/vregs (no HBM im2col). Vertical taps come from
    zero-padding the flattened pixel axis by W+1 rows per side. The width
    boundary is handled by masking the padded *source* image once per side
    (2 broadcast multiplies, hoisted out of the 9-tap loop); the mask is
    generated in-kernel with broadcasted_iota. Column order is (kh, kw, ci),
    matching w.reshape(9*Cin, Cout).
    """
    HW, C = x2d.shape
    pad = W + 1
    zrow = jnp.zeros((pad, C), x2d.dtype)
    xpad = jnp.concatenate([zrow, x2d, zrow], axis=0)           # (HW+2*pad, C)
    # Column index of each padded row's source pixel (pad rows are zero anyway).
    col = (lax.broadcasted_iota(jnp.int32, (HW + 2 * pad, 1), 0) - pad) % W
    x_nl = xpad * (col > 0).astype(xpad.dtype)        # drop sources at col 0   (dw=+1)
    x_nr = xpad * (col < W - 1).astype(xpad.dtype)    # drop sources at col W-1 (dw=-1)
    wins = []
    for dh in (-1, 0, 1):
        for dw in (-1, 0, 1):
            src = x_nr if dw == -1 else (x_nl if dw == 1 else xpad)
            off = pad + dh * W + dw
            wins.append(src[off: off + HW, :])
    return jnp.concatenate(wins, axis=1)                        # (HW, 9*C)


# --------------------------------- kernels -----------------------------------
def _stage1_kernel(x_ref, w13_ref, b13_ref, z1_ref, s1_ref, q1_ref,
                   *, W, HW, B):
    """z1 = [conv1(x) | conv3(x)] (one fused bf16 matmul over B images) plus
    per-step BN1 partial sum / sum-of-squares."""
    x = x_ref[...]                                              # (B*HW, Cin) bf16
    cols = jnp.concatenate(
        [_build_cols(x[b * HW:(b + 1) * HW], W) for b in range(B)], axis=0)
    z = jnp.dot(cols, w13_ref[...],
                preferred_element_type=jnp.float32) + b13_ref[...]
    z1_ref[...] = z.astype(z1_ref.dtype)                        # bf16 store
    s1_ref[0] = jnp.sum(z, axis=0, keepdims=True)
    q1_ref[0] = jnp.sum(z * z, axis=0, keepdims=True)


def _stage2_kernel(z1_ref, sc1_ref, sh1_ref, w2_ref, b2_ref,
                   z2_ref, s2_ref, q2_ref, *, W, HW, B, Cmid):
    """h = ELU(BN1(conv1)); z2 = conv2(h) + skip (pre-BN2) + BN2 partials.

    h never touches HBM: BN1-apply, ELU, the in-VMEM column build (bf16),
    the conv2 matmul and the skip add are all fused here.
    """
    z1 = z1_ref[...].astype(jnp.float32)                        # (B*HW, Cmid+Cout)
    y1 = z1[:, :Cmid]
    skip = z1[:, Cmid:]
    h = _elu(y1 * sc1_ref[...] + sh1_ref[...]).astype(jnp.bfloat16)
    cols = jnp.concatenate(
        [_build_cols(h[b * HW:(b + 1) * HW], W) for b in range(B)], axis=0)
    y2 = (jnp.dot(cols, w2_ref[...], preferred_element_type=jnp.float32)
          + b2_ref[...] + skip)
    z2_ref[...] = y2.astype(z2_ref.dtype)                       # bf16 store
    s2_ref[0] = jnp.sum(y2, axis=0, keepdims=True)
    q2_ref[0] = jnp.sum(y2 * y2, axis=0, keepdims=True)


def _bn2_act_kernel(y_ref, sc_ref, sh_ref, o_ref):
    """out = ELU(scale2*y2 + shift2), lane-dense (rows, W*Cout) layout, f32 math."""
    y = y_ref[...].astype(jnp.float32)
    o_ref[...] = _elu(y * sc_ref[...] + sh_ref[...])


# ------------------------------- JAX-side glue --------------------------------
def res_block_forward(x_nchw, params, kernel_size=3, images_per_step=8):
    assert kernel_size == 3, "kernel below is specialized to 3x3 SAME convs"
    n, cin, hh, ww = x_nchw.shape
    cmid = params["w1"].shape[-1]
    cout = params["w2"].shape[-1]
    hw = hh * ww
    ctot = cmid + cout
    cnt = n * hw
    vmem_limit = _vmem_limit_bytes()

    # Images fused per grid step: largest divisor of n up to `images_per_step`.
    bimg = 1
    for cand in range(1, min(n, images_per_step) + 1):
        if n % cand == 0:
            bimg = cand
    if (bimg * hw) % 8 == 0:
        steps = n // bimg
    else:                       # keep the block second-to-last dim legal
        bimg, steps = n, 1
    rows = bimg * hw

    # ------ plain-JAX prep (free, contiguous reshapes) ------
    xf = (jnp.transpose(x_nchw, (0, 2, 3, 1))
          .reshape(n * hw, cin).astype(jnp.bfloat16))

    # conv1 / conv3 fused along the output dim -> one wide matmul; weights
    # flattened to (9*Cin, Cout) in (kh, kw, ci) row order, bf16 operands.
    w13 = jnp.concatenate([params["w1"], params["w3"]], axis=-1)
    w13 = w13.reshape(9 * cin, ctot).astype(jnp.bfloat16)
    b13 = (jnp.concatenate([params["b1"], params["b3"]])
           .reshape(1, ctot).astype(jnp.float32))
    w2 = params["w2"].reshape(9 * cmid, cout).astype(jnp.bfloat16)
    b2 = params["b2"].reshape(1, cout).astype(jnp.float32)

    def resident(shape):        # loaded once, stays VMEM-resident across the grid
        return pl.BlockSpec(shape, lambda i: (0,) * len(shape))

    # ------ stage 1: z1 = [conv1(x) | conv3(x)], per-step BN1 partials ------
    cost1 = pl.CostEstimate(
        flops=2 * cnt * (9 * cin) * ctot,
        transcendentals=0,
        bytes_accessed=(xf.size * 2 + w13.size * 2 + b13.size * 4
                        + cnt * ctot * 2 + 2 * steps * ctot * 4))
    z1, s1, q1 = pl.pallas_call(
        functools.partial(_stage1_kernel, W=ww, HW=hw, B=bimg),
        grid=(steps,),
        in_specs=[
            pl.BlockSpec((rows, cin), lambda i: (i, 0)),
            resident((9 * cin, ctot)),
            resident((1, ctot)),
        ],
        out_specs=(
            pl.BlockSpec((rows, ctot), lambda i: (i, 0)),
            pl.BlockSpec((1, 1, ctot), lambda i: (i, 0, 0)),
            pl.BlockSpec((1, 1, ctot), lambda i: (i, 0, 0)),
        ),
        out_shape=(
            jax.ShapeDtypeStruct((n * hw, ctot), jnp.bfloat16),
            jax.ShapeDtypeStruct((steps, 1, ctot), jnp.float32),
            jax.ShapeDtypeStruct((steps, 1, ctot), jnp.float32),
        ),
        compiler_params=pltpu.CompilerParams(
            dimension_semantics=("parallel",),      # per-step partials -> safe
            vmem_limit_bytes=vmem_limit),
        cost_estimate=cost1,
    )(xf, w13, b13)

    # BN1 scale/shift from partial batch statistics (tiny, plain JAX).
    s1t = jnp.sum(s1[:, 0, :], axis=0)
    q1t = jnp.sum(q1[:, 0, :], axis=0)
    mean1 = s1t[:cmid] / cnt
    var1 = jnp.maximum(q1t[:cmid] / cnt - mean1 * mean1, 0.0)
    sc1 = params["g1"] * lax.rsqrt(var1 + BN_EPS)
    sh1 = params["be1"] - mean1 * sc1
    scale1 = sc1.reshape(1, cmid).astype(jnp.float32)
    shift1 = sh1.reshape(1, cmid).astype(jnp.float32)

    # ------ stage 2: z2 = conv2(ELU(BN1(y1))) + skip, per-step BN2 partials ------
    cost2 = pl.CostEstimate(
        flops=2 * cnt * (9 * cmid) * cout,
        transcendentals=cnt * cmid,
        bytes_accessed=(cnt * ctot * 2 + w2.size * 2 + b2.size * 4
                        + cnt * cout * 2 + 2 * steps * cout * 4))
    z2, s2, q2 = pl.pallas_call(
        functools.partial(_stage2_kernel, W=ww, HW=hw, B=bimg, Cmid=cmid),
        grid=(steps,),
        in_specs=[
            pl.BlockSpec((rows, ctot), lambda i: (i, 0)),
            resident((1, cmid)),
            resident((1, cmid)),
            resident((9 * cmid, cout)),
            resident((1, cout)),
        ],
        out_specs=(
            pl.BlockSpec((rows, cout), lambda i: (i, 0)),
            pl.BlockSpec((1, 1, cout), lambda i: (i, 0, 0)),
            pl.BlockSpec((1, 1, cout), lambda i: (i, 0, 0)),
        ),
        out_shape=(
            jax.ShapeDtypeStruct((n * hw, cout), jnp.bfloat16),
            jax.ShapeDtypeStruct((steps, 1, cout), jnp.float32),
            jax.ShapeDtypeStruct((steps, 1, cout), jnp.float32),
        ),
        compiler_params=pltpu.CompilerParams(
            dimension_semantics=("parallel",),
            vmem_limit_bytes=vmem_limit),
        cost_estimate=cost2,
    )(z1, scale1, shift1, w2, b2)

    # BN2 scale/shift.
    s2t = jnp.sum(s2[:, 0, :], axis=0)
    q2t = jnp.sum(q2[:, 0, :], axis=0)
    mean2 = s2t / cnt
    var2 = jnp.maximum(q2t / cnt - mean2 * mean2, 0.0)
    sc2v = params["g2"] * lax.rsqrt(var2 + BN_EPS)
    sh2v = params["be2"] - mean2 * sc2v

    # ------ stage 3: out = ELU(BN2(z2)), lane-dense layout ------
    # (N*HW, Cout) -> (N*H, W*Cout) is a free row-major reshape; the last dim
    # is a multiple of 128 for the test config, giving unmasked stores.
    total_rows = n * hh
    row_cols = ww * cout
    y2d = z2.reshape(total_rows, row_cols)
    sc2 = jnp.tile(sc2v, (ww,)).reshape(1, row_cols).astype(jnp.float32)
    sh2 = jnp.tile(sh2v, (ww,)).reshape(1, row_cols).astype(jnp.float32)

    if total_rows % 8 == 0:
        rows_per_step = 8
        for cand in range(8, min(total_rows, 2048) + 1, 8):
            if total_rows % cand == 0:
                rows_per_step = cand            # largest divisor <= 2048
        steps3 = total_rows // rows_per_step
    else:
        # TODO(synk): pad the row axis to a multiple of 8 so stage 3 can tile.
        rows_per_step, steps3 = total_rows, 1

    out2d = pl.pallas_call(
        _bn2_act_kernel,
        grid=(steps3,),
        in_specs=[
            pl.BlockSpec((rows_per_step, row_cols), lambda i: (i, 0)),
            resident((1, row_cols)),
            resident((1, row_cols)),
        ],
        out_specs=pl.BlockSpec((rows_per_step, row_cols), lambda i: (i, 0)),
        out_shape=jax.ShapeDtypeStruct((total_rows, row_cols), jnp.float32),
        compiler_params=pltpu.CompilerParams(
            dimension_semantics=("parallel",),      # no cross-step state
            vmem_limit_bytes=vmem_limit),
    )(y2d, sc2, sh2)

    out = out2d.reshape(n, hh, ww, cout)
    return jnp.transpose(out, (0, 3, 1, 2))                     # NCHW


# ------------------------------ parameter init --------------------------------
def init_params(key, channel_in, channel_out, kernel_size=3):
    cmid = channel_out // 2
    k = kernel_size
    keys = jax.random.split(key, 6)
    s1 = 1.0 / float(channel_in * k * k) ** 0.5
    s2 = 1.0 / float(cmid * k * k) ** 0.5
    return dict(
        # conv weights stored HWIO: (K, K, Cin, Cout)
        w1=jax.random.uniform(keys[0], (k, k, channel_in, cmid), jnp.float32, -s1, s1),
        b1=jax.random.uniform(keys[1], (cmid,), jnp.float32, -s1, s1),
        w2=jax.random.uniform(keys[2], (k, k, cmid, channel_out), jnp.float32, -s2, s2),
        b2=jax.random.uniform(keys[3], (channel_out,), jnp.float32, -s2, s2),
        w3=jax.random.uniform(keys[4], (k, k, channel_in, channel_out), jnp.float32, -s1, s1),
        b3=jax.random.uniform(keys[5], (channel_out,), jnp.float32, -s1, s1),
        g1=jnp.ones((cmid,), jnp.float32), be1=jnp.zeros((cmid,), jnp.float32),
        g2=jnp.ones((channel_out,), jnp.float32), be2=jnp.zeros((channel_out,), jnp.float32),
    )


# ------------------------------ pure-JAX reference -----------------------------
def res_block_reference(x_nchw, params, mxu_dtype=None):
    """Pure-JAX reference. With mxu_dtype=jnp.bfloat16 the conv operands are
    rounded the same way the Pallas kernel feeds the MXU (math stays f32)."""
    x = jnp.transpose(x_nchw, (0, 2, 3, 1)).astype(jnp.float32)
    dn = ("NHWC", "HWIO", "NHWC")

    def conv(v, w, b):
        if mxu_dtype is not None:
            v = v.astype(mxu_dtype).astype(jnp.float32)
            w = w.astype(mxu_dtype).astype(jnp.float32)
        return lax.conv_general_dilated(
            v, w, (1, 1), "SAME", dimension_numbers=dn,
            precision=lax.Precision.HIGHEST) + b

    def bn(v, g, be):
        mean = jnp.mean(v, axis=(0, 1, 2), keepdims=True)
        var = jnp.mean((v - mean) ** 2, axis=(0, 1, 2), keepdims=True)
        return (v - mean) * lax.rsqrt(var + BN_EPS) * g + be

    skip = conv(x, params["w3"], params["b3"])
    h = _elu(bn(conv(x, params["w1"], params["b1"]), params["g1"], params["be1"]))
    y = conv(h, params["w2"], params["b2"])
    out = _elu(bn(y + skip, params["g2"], params["be2"]))
    return jnp.transpose(out, (0, 3, 1, 2))


# ------------------------------------ main -------------------------------------
if __name__ == "__main__":
    key = jax.random.PRNGKey(0)
    k_x, k_p = jax.random.split(key)

    N, C_IN, C_OUT, H, W = 2, 4, 8, 16, 16
    x = jax.random.normal(k_x, (N, C_IN, H, W), dtype=jnp.float32)   # NCHW
    params = init_params(k_p, C_IN, C_OUT, kernel_size=3)

    out = jax.block_until_ready(res_block_forward(x, params))
    assert out.shape == (N, C_OUT, H, W)
    assert bool(jnp.all(jnp.isfinite(out)))

    # Check vs a reference that mirrors the kernel's bf16 MXU operands
    # (the kernel additionally stores z1/z2 in bf16, hence the tolerance).
    ref_bf16 = jax.block_until_ready(
        res_block_reference(x, params, mxu_dtype=jnp.bfloat16))
    err_bf16 = float(jnp.max(jnp.abs(out - ref_bf16)))
    assert jnp.allclose(out, ref_bf16, atol=4e-2, rtol=4e-2), err_bf16

    # Loose sanity check vs the pure-fp32 reference (difference is only the
    # bf16 operand/intermediate rounding recommended by the perf review).
    ref_f32 = jax.block_until_ready(res_block_reference(x, params))
    err_f32 = float(jnp.max(jnp.abs(out - ref_f32)))
    assert jnp.allclose(out, ref_f32, atol=0.25, rtol=0.25), err_f32

    print("KERNEL_OK")
</pallas_src>

<mosaic_0001>
module attributes {stable_mosaic.version = 11 : i64} {
  func.func @_stage1_kernel(%arg0: i32, %arg1: memref<512x4xbf16, #tpu.memory_space<vmem>>, %arg2: memref<36x12xbf16, #tpu.memory_space<vmem>>, %arg3: memref<1x12xf32, #tpu.memory_space<vmem>>, %arg4: memref<512x12xbf16, #tpu.memory_space<vmem>>, %arg5: memref<1x1x12xf32, #tpu.memory_space<vmem>>, %arg6: memref<1x1x12xf32, #tpu.memory_space<vmem>>) attributes {dimension_semantics = [#tpu.dimension_semantics<parallel>], iteration_bounds = array<i64: 1>, scalar_prefetch = 0 : i64, scratch_operands = 0 : i64, tpu.core_type = #tpu.core_type<tc>, window_params = [{transform_indices = @transform_0, window_bounds = array<i64: 512, 4>}, {pipeline_mode = #tpu.pipeline_mode<synchronous>, transform_indices = @transform_1, window_bounds = array<i64: 36, 12>}, {pipeline_mode = #tpu.pipeline_mode<synchronous>, transform_indices = @transform_2, window_bounds = array<i64: 1, 12>}, {transform_indices = @transform_3, window_bounds = array<i64: 512, 12>}, {transform_indices = @transform_4, window_bounds = array<i64: 1, 1, 12>}, {transform_indices = @transform_5, window_bounds = array<i64: 1, 1, 12>}]} {
    %c0 = arith.constant 0 : index
    %c0_0 = arith.constant 0 : index
    %0 = vector.load %arg1[%c0, %c0_0] : memref<512x4xbf16, #tpu.memory_space<vmem>>, vector<512x4xbf16>
    %1 = vector.extract_strided_slice %0 {offsets = [0, 0], sizes = [256, 4], strides = [1, 1]} : vector<512x4xbf16> to vector<256x4xbf16>
    %cst = arith.constant 0.000000e+00 : bf16
    %2 = vector.broadcast %cst : bf16 to vector<17x4xbf16>
    %3 = tpu.concatenate %2, %1, %2 in 0 : vector<17x4xbf16>, vector<256x4xbf16>, vector<17x4xbf16> -> vector<290x4xbf16>
    %4 = tpu.iota {dimensions = array<i32: 0>} : vector<290x1xi32>
    %c17_i32 = arith.constant 17 : i32
    %5 = vector.broadcast %c17_i32 : i32 to vector<290x1xi32>
    %6 = arith.subi %4, %5 : vector<290x1xi32>
    %c16_i32 = arith.constant 16 : i32
    %c0_i32 = arith.constant 0 : i32
    %7 = arith.cmpi eq, %c16_i32, %c0_i32 : i32
    %c1_i32 = arith.constant 1 : i32
    %8 = arith.select %7, %c1_i32, %c16_i32 : i32
    %9 = vector.broadcast %8 : i32 to vector<290x1xi32>
    %10 = arith.remsi %6, %9 : vector<290x1xi32>
    %c0_i32_1 = arith.constant 0 : i32
    %11 = vector.broadcast %c0_i32_1 : i32 to vector<290x1xi32>
    %12 = arith.cmpi ne, %10, %11 : vector<290x1xi32>
    %c0_i32_2 = arith.constant 0 : i32
    %13 = vector.broadcast %c0_i32_2 : i32 to vector<290x1xi32>
    %14 = arith.cmpi slt, %10, %13 : vector<290x1xi32>
    %c0_i32_3 = arith.constant 0 : i32
    %15 = arith.cmpi slt, %8, %c0_i32_3 : i32
    %16 = vector.broadcast %15 : i1 to vector<290x1xi1>
    %17 = vector.broadcast %16 : vector<290x1xi1> to vector<290x1xi1>
    %18 = arith.xori %14, %17 : vector<290x1xi1>
    %19 = arith.andi %18, %12 : vector<290x1xi1>
    %20 = vector.broadcast %8 : i32 to vector<290x1xi32>
    %21 = arith.addi %10, %20 : vector<290x1xi32>
    %22 = arith.select %19, %21, %10 : vector<290x1xi1>, vector<290x1xi32>
    %c0_i32_4 = arith.constant 0 : i32
    %23 = vector.broadcast %c0_i32_4 : i32 to vector<290x1xi32>
    %24 = arith.cmpi sgt, %22, %23 : vector<290x1xi32>
    %25 = arith.extui %24 : vector<290x1xi1> to vector<290x1xi32>
    %26 = arith.sitofp %25 : vector<290x1xi32> to vector<290x1xf32>
    %27 = arith.truncf %26 : vector<290x1xf32> to vector<290x1xbf16>
    %28 = vector.broadcast %27 : vector<290x1xbf16> to vector<290x4xbf16>
    %29 = arith.mulf %3, %28 : vector<290x4xbf16>
    %c15_i32 = arith.constant 15 : i32
    %30 = vector.broadcast %c15_i32 : i32 to vector<290x1xi32>
    %31 = arith.cmpi slt, %22, %30 : vector<290x1xi32>
    %32 = arith.extui %31 : vector<290x1xi1> to vector<290x1xi32>
    %33 = arith.sitofp %32 : vector<290x1xi32> to vector<290x1xf32>
    %34 = arith.truncf %33 : vector<290x1xf32> to vector<290x1xbf16>
    %35 = vector.broadcast %34 : vector<290x1xbf16> to vector<290x4xbf16>
    %36 = arith.mulf %3, %35 : vector<290x4xbf16>
    %37 = vector.extract_strided_slice %36 {offsets = [0, 0], sizes = [256, 4], strides = [1, 1]} : vector<290x4xbf16> to vector<256x4xbf16>
    %38 = vector.extract_strided_slice %3 {offsets = [1, 0], sizes = [256, 4], strides = [1, 1]} : vector<290x4xbf16> to vector<256x4xbf16>
    %39 = vector.extract_strided_slice %29 {offsets = [2, 0], sizes = [256, 4], strides = [1, 1]} : vector<290x4xbf16> to vector<256x4xbf16>
    %40 = vector.extract_strided_slice %36 {offsets = [16, 0], sizes = [256, 4], strides = [1, 1]} : vector<290x4xbf16> to vector<256x4xbf16>
    %41 = vector.extract_strided_slice %3 {offsets = [17, 0], sizes = [256, 4], strides = [1, 1]} : vector<290x4xbf16> to vector<256x4xbf16>
    %42 = vector.extract_strided_slice %29 {offsets = [18, 0], sizes = [256, 4], strides = [1, 1]} : vector<290x4xbf16> to vector<256x4xbf16>
    %43 = vector.extract_strided_slice %36 {offsets = [32, 0], sizes = [256, 4], strides = [1, 1]} : vector<290x4xbf16> to vector<256x4xbf16>
    %44 = vector.extract_strided_slice %3 {offsets = [33, 0], sizes = [256, 4], strides = [1, 1]} : vector<290x4xbf16> to vector<256x4xbf16>
    %45 = vector.extract_strided_slice %29 {offsets = [34, 0], sizes = [256, 4], strides = [1, 1]} : vector<290x4xbf16> to vector<256x4xbf16>
    %46 = tpu.concatenate %37, %38, %39, %40, %41, %42, %43, %44, %45 in 1 : vector<256x4xbf16>, vector<256x4xbf16>, vector<256x4xbf16>, vector<256x4xbf16>, vector<256x4xbf16>, vector<256x4xbf16>, vector<256x4xbf16>, vector<256x4xbf16>, vector<256x4xbf16> -> vector<256x36xbf16>
    %47 = vector.extract_strided_slice %0 {offsets = [256, 0], sizes = [256, 4], strides = [1, 1]} : vector<512x4xbf16> to vector<256x4xbf16>
    %cst_5 = arith.constant 0.000000e+00 : bf16
    %48 = vector.broadcast %cst_5 : bf16 to vector<17x4xbf16>
    %49 = tpu.concatenate %48, %47, %48 in 0 : vector<17x4xbf16>, vector<256x4xbf16>, vector<17x4xbf16> -> vector<290x4xbf16>
    %50 = tpu.iota {dimensions = array<i32: 0>} : vector<290x1xi32>
    %c17_i32_6 = arith.constant 17 : i32
    %51 = vector.broadcast %c17_i32_6 : i32 to vector<290x1xi32>
    %52 = arith.subi %50, %51 : vector<290x1xi32>
    %c16_i32_7 = arith.constant 16 : i32
    %c0_i32_8 = arith.constant 0 : i32
    %53 = arith.cmpi eq, %c16_i32_7, %c0_i32_8 : i32
    %c1_i32_9 = arith.constant 1 : i32
    %54 = arith.select %53, %c1_i32_9, %c16_i32_7 : i32
    %55 = vector.broadcast %54 : i32 to vector<290x1xi32>
    %56 = arith.remsi %52, %55 : vector<290x1xi32>
    %c0_i32_10 = arith.constant 0 : i32
    %57 = vector.broadcast %c0_i32_10 : i32 to vector<290x1xi32>
    %58 = arith.cmpi ne, %56, %57 : vector<290x1xi32>
    %c0_i32_11 = arith.constant 0 : i32
    %59 = vector.broadcast %c0_i32_11 : i32 to vector<290x1xi32>
    %60 = arith.cmpi slt, %56, %59 : vector<290x1xi32>
    %c0_i32_12 = arith.constant 0 : i32
    %61 = arith.cmpi slt, %54, %c0_i32_12 : i32
    %62 = vector.broadcast %61 : i1 to vector<290x1xi1>
    %63 = vector.broadcast %62 : vector<290x1xi1> to vector<290x1xi1>
    %64 = arith.xori %60, %63 : vector<290x1xi1>
    %65 = arith.andi %64, %58 : vector<290x1xi1>
    %66 = vector.broadcast %54 : i32 to vector<290x1xi32>
    %67 = arith.addi %56, %66 : vector<290x1xi32>
    %68 = arith.select %65, %67, %56 : vector<290x1xi1>, vector<290x1xi32>
    %c0_i32_13 = arith.constant 0 : i32
    %69 = vector.broadcast %c0_i32_13 : i32 to vector<290x1xi32>
    %70 = arith.cmpi sgt, %68, %69 : vector<290x1xi32>
    %71 = arith.extui %70 : vector<290x1xi1> to vector<290x1xi32>
    %72 = arith.sitofp %71 : vector<290x1xi32> to vector<290x1xf32>
    %73 = arith.truncf %72 : vector<290x1xf32> to vector<290x1xbf16>
    %74 = vector.broadcast %73 : vector<290x1xbf16> to vector<290x4xbf16>
    %75 = arith.mulf %49, %74 : vector<290x4xbf16>
    %c15_i32_14 = arith.constant 15 : i32
    %76 = vector.broadcast %c15_i32_14 : i32 to vector<290x1xi32>
    %77 = arith.cmpi slt, %68, %76 : vector<290x1xi32>
    %78 = arith.extui %77 : vector<290x1xi1> to vector<290x1xi32>
    %79 = arith.sitofp %78 : vector<290x1xi32> to vector<290x1xf32>
    %80 = arith.truncf %79 : vector<290x1xf32> to vector<290x1xbf16>
    %81 = vector.broadcast %80 : vector<290x1xbf16> to vector<290x4xbf16>
    %82 = arith.mulf %49, %81 : vector<290x4xbf16>
    %83 = vector.extract_strided_slice %82 {offsets = [0, 0], sizes = [256, 4], strides = [1, 1]} : vector<290x4xbf16> to vector<256x4xbf16>
    %84 = vector.extract_strided_slice %49 {offsets = [1, 0], sizes = [256, 4], strides = [1, 1]} : vector<290x4xbf16> to vector<256x4xbf16>
    %85 = vector.extract_strided_slice %75 {offsets = [2, 0], sizes = [256, 4], strides = [1, 1]} : vector<290x4xbf16> to vector<256x4xbf16>
    %86 = vector.extract_strided_slice %82 {offsets = [16, 0], sizes = [256, 4], strides = [1, 1]} : vector<290x4xbf16> to vector<256x4xbf16>
    %87 = vector.extract_strided_slice %49 {offsets = [17, 0], sizes = [256, 4], strides = [1, 1]} : vector<290x4xbf16> to vector<256x4xbf16>
    %88 = vector.extract_strided_slice %75 {offsets = [18, 0], sizes = [256, 4], strides = [1, 1]} : vector<290x4xbf16> to vector<256x4xbf16>
    %89 = vector.extract_strided_slice %82 {offsets = [32, 0], sizes = [256, 4], strides = [1, 1]} : vector<290x4xbf16> to vector<256x4xbf16>
    %90 = vector.extract_strided_slice %49 {offsets = [33, 0], sizes = [256, 4], strides = [1, 1]} : vector<290x4xbf16> to vector<256x4xbf16>
    %91 = vector.extract_strided_slice %75 {offsets = [34, 0], sizes = [256, 4], strides = [1, 1]} : vector<290x4xbf16> to vector<256x4xbf16>
    %92 = tpu.concatenate %83, %84, %85, %86, %87, %88, %89, %90, %91 in 1 : vector<256x4xbf16>, vector<256x4xbf16>, vector<256x4xbf16>, vector<256x4xbf16>, vector<256x4xbf16>, vector<256x4xbf16>, vector<256x4xbf16>, vector<256x4xbf16>, vector<256x4xbf16> -> vector<256x36xbf16>
    %93 = tpu.concatenate %46, %92 in 0 : vector<256x36xbf16>, vector<256x36xbf16> -> vector<512x36xbf16>
    %c0_15 = arith.constant 0 : index
    %c0_16 = arith.constant 0 : index
    %94 = vector.load %arg2[%c0_15, %c0_16] : memref<36x12xbf16, #tpu.memory_space<vmem>>, vector<36x12xbf16>
    %cst_17 = arith.constant dense<0.000000e+00> : vector<512x12xf32>
    %95 = tpu.matmul %93, %94, %cst_17 {dimension_numbers = #tpu.dot_dimension_numbers<[1], [0], [0], [1], [0, 0, 1, 1], [], []>} : vector<512x36xbf16>, vector<36x12xbf16>, vector<512x12xf32> -> vector<512x12xf32>
    %c0_18 = arith.constant 0 : index
    %c0_19 = arith.constant 0 : index
    %96 = vector.load %arg3[%c0_18, %c0_19] : memref<1x12xf32, #tpu.memory_space<vmem>>, vector<1x12xf32>
    %97 = vector.broadcast %96 : vector<1x12xf32> to vector<512x12xf32>
    %98 = arith.addf %95, %97 : vector<512x12xf32>
    %99 = arith.truncf %98 : vector<512x12xf32> to vector<512x12xbf16>
    %c0_20 = arith.constant 0 : index
    %c0_21 = arith.constant 0 : index
    %100 = vector.load %arg4[%c0_20, %c0_21] : memref<512x12xbf16, #tpu.memory_space<vmem>>, vector<512x12xbf16>
    tpu.vector_store %arg4[%c0_20, %c0_21], %99 {strides = array<i32>} : memref<512x12xbf16, #tpu.memory_space<vmem>>, vector<512x12xbf16>,
    %cst_22 = arith.constant dense<0.000000e+00> : vector<12xf32>
    %101 = vector.multi_reduction <add>, %98, %cst_22 [0] : vector<512x12xf32> to vector<12xf32>
    %102 = vector.shape_cast %101 : vector<12xf32> to vector<1x12xf32>
    %c0_23 = arith.constant 0 : index
    %c0_24 = arith.constant 0 : index
    %c0_25 = arith.constant 0 : index
    %103 = vector.load %arg5[%c0_23, %c0_24, %c0_25] : memref<1x1x12xf32, #tpu.memory_space<vmem>>, vector<1x1x12xf32>
    %104 = vector.shape_cast %103 : vector<1x1x12xf32> to vector<1x12xf32>
    %105 = vector.shape_cast %102 : vector<1x12xf32> to vector<1x1x12xf32>
    tpu.vector_store %arg5[%c0_23, %c0_24, %c0_25], %105 {strides = array<i32>} : memref<1x1x12xf32, #tpu.memory_space<vmem>>, vector<1x1x12xf32>,
    %106 = arith.mulf %98, %98 : vector<512x12xf32>
    %cst_26 = arith.constant dense<0.000000e+00> : vector<12xf32>
    %107 = vector.multi_reduction <add>, %106, %cst_26 [0] : vector<512x12xf32> to vector<12xf32>
    %108 = vector.shape_cast %107 : vector<12xf32> to vector<1x12xf32>
    %c0_27 = arith.constant 0 : index
    %c0_28 = arith.constant 0 : index
    %c0_29 = arith.constant 0 : index
    %109 = vector.load %arg6[%c0_27, %c0_28, %c0_29] : memref<1x1x12xf32, #tpu.memory_space<vmem>>, vector<1x1x12xf32>
    %110 = vector.shape_cast %109 : vector<1x1x12xf32> to vector<1x12xf32>
    %111 = vector.shape_cast %108 : vector<1x12xf32> to vector<1x1x12xf32>
    tpu.vector_store %arg6[%c0_27, %c0_28, %c0_29], %111 {strides = array<i32>} : memref<1x1x12xf32, #tpu.memory_space<vmem>>, vector<1x1x12xf32>,
    return
  }
  func.func @transform_0(%arg0: i32) -> (i32, i32) {
    %c0_i32 = arith.constant 0 : i32
    %c0_i32_0 = arith.constant 0 : i32
    return %arg0, %c0_i32 : i32, i32
  }
  func.func @transform_1(%arg0: i32) -> (i32, i32) {
    %c0_i32 = arith.constant 0 : i32
    %c0_i32_0 = arith.constant 0 : i32
    %c0_i32_1 = arith.constant 0 : i32
    return %c0_i32, %c0_i32_0 : i32, i32
  }
  func.func @transform_2(%arg0: i32) -> (i32, i32) {
    %c0_i32 = arith.constant 0 : i32
    %c0_i32_0 = arith.constant 0 : i32
    %c0_i32_1 = arith.constant 0 : i32
    return %c0_i32, %c0_i32_0 : i32, i32
  }
  func.func @transform_3(%arg0: i32) -> (i32, i32) {
    %c0_i32 = arith.constant 0 : i32
    %c0_i32_0 = arith.constant 0 : i32
    return %arg0, %c0_i32 : i32, i32
  }
  func.func @transform_4(%arg0: i32) -> (i32, i32, i32) {
    %c0_i32 = arith.constant 0 : i32
    %c0_i32_0 = arith.constant 0 : i32
    %c0_i32_1 = arith.constant 0 : i32
    return %arg0, %c0_i32, %c0_i32_0 : i32, i32, i32
  }
  func.func @transform_5(%arg0: i32) -> (i32, i32, i32) {
    %c0_i32 = arith.constant 0 : i32
    %c0_i32_0 = arith.constant 0 : i32
    %c0_i32_1 = arith.constant 0 : i32
    return %arg0, %c0_i32, %c0_i32_0 : i32, i32, i32
  }
}

</mosaic_0001>

<llo_original>
// kernel: tpu_custom_call.1
$region0: #{tpu_custom_call.1}
  #allocation0 [shape = 'u32[]', space=smem, size = 0x4, offset = 0x4, fixed_abs, tag = 'smem constant byte address 0x4 - core index']
  #allocation1 [shape = 'u32[144,128]{1,0:T(1,128)}', space=vmem, size = 0x12000, scoped, tag = 'internal scratch']
  %s0 = inlined_call_operand.hbm [shape: bf16[512,4], index: 0, kind: input, shape index: {}]
  %s1 = inlined_call_operand.hbm [shape: bf16[36,12], index: 1, kind: input, shape index: {}]
  %s2 = inlined_call_operand.hbm [shape: f32[1,12], index: 2, kind: input, shape index: {}]
  %s3 = inlined_call_operand.hbm [shape: bf16[512,12], index: 3, kind: output, shape index: {0}]
  %s4 = inlined_call_operand.hbm [shape: f32[1,1,12], index: 4, kind: output, shape index: {1}]
  %s5 = inlined_call_operand.hbm [shape: f32[1,1,12], index: 5, kind: output, shape index: {2}]
  %6 = xla_tuple %s3, %s4, %s5
  %s7 = sld [smem:[#allocation0]]
  $region50: #{tpu_custom_call.1} parent=0
    _
  %s9 = ssub.s32 1, %s7
  %s10 = scalar_select 0, %s9, %s7
  $region1: #{tpu_custom_call.1} parent=0
    #allocation2 [shape = 'u8[131072]{0}', space=vmem, size = 0x20000, scoped, tag = 'input window, operand 0, single buffered']
    #allocation3 [shape = 's32[1]{0}', space=sflag, size = 0x4, scoped, tag = 'scoped memory for tpu_custom_call.1']
    #allocation4 [shape = 's32[1]{0}', space=sflag, size = 0x4, scoped, tag = 'scoped memory for tpu_custom_call.1']
    #allocation5 [shape = 'u8[10240]{0}', space=vmem, size = 0x2800, scoped, tag = 'input window, operand 1, single buffered']
    #allocation6 [shape = 's32[1]{0}', space=sflag, size = 0x4, scoped, tag = 'scoped memory for tpu_custom_call.1']
    #allocation7 [shape = 'u8[512]{0}', space=vmem, size = 0x400, scoped, tag = 'input window, operand 2, single buffered']
    #allocation8 [shape = 'u8[131072]{0}', space=vmem, size = 0x20000, scoped, tag = 'output window, operand 0, single buffered']
    #allocation9 [shape = 'u8[512]{0}', space=vmem, size = 0x400, scoped, tag = 'output window, operand 1, single buffered']
    #allocation10 [shape = 's32[1]{0}', space=sflag, size = 0x4, scoped, tag = 'scoped memory for tpu_custom_call.1']
    #allocation11 [shape = 'u8[512]{0}', space=vmem, size = 0x400, scoped, tag = 'output window, operand 2, single buffered']
    %11 = vsyncpa [#allocation3], 0
    %12 = vsyncpa [#allocation6], 0
    %13 = vsyncpa [#allocation4], 0
    %14 = vsyncpa [#allocation10], 0
    // Predicated region
    $region2: #{tpu_custom_call.1} parent=1 // pred_check
      _
    $region3: #{tpu_custom_call.1} parent=1 // pred_check_branch
      %16 = sbr.rel (0) target = $region5
    $region4: #{tpu_custom_call.1} parent=1 // pred_region
      %s18 = ssub.s32 4096, 4096
      %19 = vsyncadd [#allocation3], %s18
      %s20 = sshll.u32 [#allocation2], 4
      %s21 = int_to_ptr.vmem [resolvable:$true] %s20
      %26 = dma.hbm_to_vmem [thread:$0]  %s0, 4096, %s21, [#allocation3], 64, 64, 4
    $region5: #{tpu_custom_call.1} parent=1 // pred_fallthru
      _
    // Predicated region
    $region6: #{tpu_custom_call.1} parent=1 // pred_check
      _
    $region7: #{tpu_custom_call.1} parent=1 // pred_check_branch
      %28 = sbr.rel (0) target = $region9
    $region8: #{tpu_custom_call.1} parent=1 // pred_region
      %s30 = ssub.s32 320, 320
      %31 = vsyncadd [#allocation6], %s30
      %s32 = sshll.u32 [#allocation5], 4
      %s33 = int_to_ptr.vmem [resolvable:$true] %s32
      %38 = dma.hbm_to_vmem [thread:$0]  %s1, 320, %s33, [#allocation6], 64, 64, 4
    $region9: #{tpu_custom_call.1} parent=1 // pred_fallthru
      _
    // Predicated region
    $region10: #{tpu_custom_call.1} parent=1 // pred_check
      _
    $region11: #{tpu_custom_call.1} parent=1 // pred_check_branch
      %40 = sbr.rel (0) target = $region13
    $region12: #{tpu_custom_call.1} parent=1 // pred_region
      %s42 = ssub.s32 16, 16
      %43 = vsyncadd [#allocation6], %s42
      %s45 = sshll.u32 [#allocation7], 4
      %s46 = int_to_ptr.vmem [resolvable:$true] %s45
      %48 = dma.hbm_to_vmem [thread:$0]  %s2, 16, %s46, [#allocation6]
    $region13: #{tpu_custom_call.1} parent=1 // pred_fallthru
      _
    // Predicated region
    $region14: #{tpu_custom_call.1} parent=1 // pred_check
      _
    $region15: #{tpu_custom_call.1} parent=1 // pred_check_branch
      %50 = sbr.rel (0) target = $region17
    $region16: #{tpu_custom_call.1} parent=1 // pred_region
      %51 = dma.done [#allocation3], 4096
    $region17: #{tpu_custom_call.1} parent=1 // pred_fallthru
      _
    // Predicated region
    $region18: #{tpu_custom_call.1} parent=1 // pred_check
      _
    $region19: #{tpu_custom_call.1} parent=1 // pred_check_branch
      %53 = sbr.rel (0) target = $region21
    $region20: #{tpu_custom_call.1} parent=1 // pred_region
      %54 = dma.done [#allocation6], 320
    $region21: #{tpu_custom_call.1} parent=1 // pred_fallthru
      _
    // Predicated region
    $region22: #{tpu_custom_call.1} parent=1 // pred_check
      _
    $region23: #{tpu_custom_call.1} parent=1 // pred_check_branch
      %56 = sbr.rel (0) target = $region25
    $region24: #{tpu_custom_call.1} parent=1 // pred_region
      %57 = dma.done [#allocation6], 16
    $region25: #{tpu_custom_call.1} parent=1 // pred_fallthru
      _
    %v59 = vld [vmem:[#allocation2] sm:$0xf]
    %v60 = vld [vmem:[#allocation2 + $0x4] sm:$0xf]
    %v61 = vld [vmem:[#allocation2 + $0x8] sm:$0xf]
    %v62 = vld [vmem:[#allocation2 + $0xc] sm:$0xf]
    %v63 = vld [vmem:[#allocation2 + $0x10] sm:$0xf]
    %v64 = vld [vmem:[#allocation2 + $0x14] sm:$0xf]
    %v65 = vld [vmem:[#allocation2 + $0x18] sm:$0xf]
    %v66 = vld [vmem:[#allocation2 + $0x1c] sm:$0xf]
    %v67 = vld [vmem:[#allocation2 + $0x20] sm:$0xf]
    %v68 = vld [vmem:[#allocation2 + $0x24] sm:$0xf]
    %v69 = vld [vmem:[#allocation2 + $0x28] sm:$0xf]
    %v70 = vld [vmem:[#allocation2 + $0x2c] sm:$0xf]
    %v71 = vld [vmem:[#allocation2 + $0x30] sm:$0xf]
    %v72 = vld [vmem:[#allocation2 + $0x34] sm:$0xf]
    %v73 = vld [vmem:[#allocation2 + $0x38] sm:$0xf]
    %v74 = vld [vmem:[#allocation2 + $0x3c] sm:$0xf]
    %v75 = vld [vmem:[#allocation2 + $0x40] sm:$0xf]
    %v76 = vld [vmem:[#allocation2 + $0x44] sm:$0xf]
    %v77 = vld [vmem:[#allocation2 + $0x48] sm:$0xf]
    %v78 = vld [vmem:[#allocation2 + $0x4c] sm:$0xf]
    %v79 = vld [vmem:[#allocation2 + $0x50] sm:$0xf]
    %v80 = vld [vmem:[#allocation2 + $0x54] sm:$0xf]
    %v81 = vld [vmem:[#allocation2 + $0x58] sm:$0xf]
    %v82 = vld [vmem:[#allocation2 + $0x5c] sm:$0xf]
    %v83 = vld [vmem:[#allocation2 + $0x60] sm:$0xf]
    %v84 = vld [vmem:[#allocation2 + $0x64] sm:$0xf]
    %v85 = vld [vmem:[#allocation2 + $0x68] sm:$0xf]
    %v86 = vld [vmem:[#allocation2 + $0x6c] sm:$0xf]
    %v87 = vld [vmem:[#allocation2 + $0x70] sm:$0xf]
    %v88 = vld [vmem:[#allocation2 + $0x74] sm:$0xf]
    %v89 = vld [vmem:[#allocation2 + $0x78] sm:$0xf]
    %v90 = vld [vmem:[#allocation2 + $0x7c] sm:$0xf]
    %v91 = vld [vmem:[#allocation2 + $0x80] sm:$0xf]
    %v92 = vld [vmem:[#allocation2 + $0x84] sm:$0xf]
    %v93 = vld [vmem:[#allocation2 + $0x88] sm:$0xf]
    %v94 = vld [vmem:[#allocation2 + $0x8c] sm:$0xf]
    %v95 = vld [vmem:[#allocation2 + $0x90] sm:$0xf]
    %v96 = vld [vmem:[#allocation2 + $0x94] sm:$0xf]
    %v97 = vld [vmem:[#allocation2 + $0x98] sm:$0xf]
    %v98 = vld [vmem:[#allocation2 + $0x9c] sm:$0xf]
    %v99 = vld [vmem:[#allocation2 + $0xa0] sm:$0xf]
    %v100 = vld [vmem:[#allocation2 + $0xa4] sm:$0xf]
    %v101 = vld [vmem:[#allocation2 + $0xa8] sm:$0xf]
    %v102 = vld [vmem:[#allocation2 + $0xac] sm:$0xf]
    %v103 = vld [vmem:[#allocation2 + $0xb0] sm:$0xf]
    %v104 = vld [vmem:[#allocation2 + $0xb4] sm:$0xf]
    %v105 = vld [vmem:[#allocation2 + $0xb8] sm:$0xf]
    %v106 = vld [vmem:[#allocation2 + $0xbc] sm:$0xf]
    %v107 = vld [vmem:[#allocation2 + $0xc0] sm:$0xf]
    %v108 = vld [vmem:[#allocation2 + $0xc4] sm:$0xf]
    %v109 = vld [vmem:[#allocation2 + $0xc8] sm:$0xf]
    %v110 = vld [vmem:[#allocation2 + $0xcc] sm:$0xf]
    %v111 = vld [vmem:[#allocation2 + $0xd0] sm:$0xf]
    %v112 = vld [vmem:[#allocation2 + $0xd4] sm:$0xf]
    %v113 = vld [vmem:[#allocation2 + $0xd8] sm:$0xf]
    %v114 = vld [vmem:[#allocation2 + $0xdc] sm:$0xf]
    %v115 = vld [vmem:[#allocation2 + $0xe0] sm:$0xf]
    %v116 = vld [vmem:[#allocation2 + $0xe4] sm:$0xf]
    %v117 = vld [vmem:[#allocation2 + $0xe8] sm:$0xf]
    %v118 = vld [vmem:[#allocation2 + $0xec] sm:$0xf]
    %v119 = vld [vmem:[#allocation2 + $0xf0] sm:$0xf]
    %v120 = vld [vmem:[#allocation2 + $0xf4] sm:$0xf]
    %v121 = vld [vmem:[#allocation2 + $0xf8] sm:$0xf]
    %v122 = vld [vmem:[#allocation2 + $0xfc] sm:$0xf]
    %v155 = vunpack.c.l.b16 %v59
    %v156 = vunpack.c.l.b16 %v60
    %v157 = vunpack.c.l.b16 %v61
    %v158 = vunpack.c.l.b16 %v62
    %v159 = vunpack.c.l.b16 %v63
    %v160 = vunpack.c.l.b16 %v64
    %v161 = vunpack.c.l.b16 %v65
    %v162 = vunpack.c.l.b16 %v66
    %v163 = vunpack.c.l.b16 %v67
    %v164 = vunpack.c.l.b16 %v68
    %v165 = vunpack.c.l.b16 %v69
    %v166 = vunpack.c.l.b16 %v70
    %v167 = vunpack.c.l.b16 %v71
    %v168 = vunpack.c.l.b16 %v72
    %v169 = vunpack.c.l.b16 %v73
    %v170 = vunpack.c.l.b16 %v74
    %v171 = vunpack.c.l.b16 %v75
    %v172 = vunpack.c.l.b16 %v76
    %v173 = vunpack.c.l.b16 %v77
    %v174 = vunpack.c.l.b16 %v78
    %v175 = vunpack.c.l.b16 %v79
    %v176 = vunpack.c.l.b16 %v80
    %v177 = vunpack.c.l.b16 %v81
    %v178 = vunpack.c.l.b16 %v82
    %v179 = vunpack.c.l.b16 %v83
    %v180 = vunpack.c.l.b16 %v84
    %v181 = vunpack.c.l.b16 %v85
    %v182 = vunpack.c.l.b16 %v86
    %v183 = vunpack.c.l.b16 %v87
    %v184 = vunpack.c.l.b16 %v88
    %v185 = vunpack.c.l.b16 %v89
    %v186 = vunpack.c.l.b16 %v90
    %v187 = vpack.c.b16 %v156, %v155
    %v188 = vpack.c.b16 %v158, %v157
    %v189 = vpack.c.b16 %v160, %v159
    %v190 = vpack.c.b16 %v162, %v161
    %v191 = vpack.c.b16 %v164, %v163
    %v192 = vpack.c.b16 %v166, %v165
    %v193 = vpack.c.b16 %v168, %v167
    %v194 = vpack.c.b16 %v170, %v169
    %v195 = vpack.c.b16 %v172, %v171
    %v196 = vpack.c.b16 %v174, %v173
    %v197 = vpack.c.b16 %v176, %v175
    %v198 = vpack.c.b16 %v178, %v177
    %v199 = vpack.c.b16 %v180, %v179
    %v200 = vpack.c.b16 %v182, %v181
    %v201 = vpack.c.b16 %v184, %v183
    %v202 = vpack.c.b16 %v186, %v185
    %vm203 = vsmask.f32 256
    %v205 = vshrl.u32 %v187, 16
    %v207 = vrot.slane %v205, 7
    %v208 = vshll.u32 %v187, 16
    %v210 = vor.u32 %v207, %v208
    %v212 = vshrl.u32 %v188, 16
    %v214 = vrot.slane %v212, 7
    %v215 = vshll.u32 %v188, 16
    %v217 = vor.u32 %v214, %v215
    %v218 = vsel %vm203, %v207, %v217
    %v220 = vshrl.u32 %v189, 16
    %v222 = vrot.slane %v220, 7
    %v223 = vshll.u32 %v189, 16
    %v225 = vor.u32 %v222, %v223
    %v226 = vsel %vm203, %v214, %v225
    %v228 = vshrl.u32 %v190, 16
    %v230 = vrot.slane %v228, 7
    %v231 = vshll.u32 %v190, 16
    %v233 = vor.u32 %v230, %v231
    %v234 = vsel %vm203, %v222, %v233
    %v236 = vshrl.u32 %v191, 16
    %v238 = vrot.slane %v236, 7
    %v239 = vshll.u32 %v191, 16
    %v241 = vor.u32 %v238, %v239
    %v242 = vsel %vm203, %v230, %v241
    %v244 = vshrl.u32 %v192, 16
    %v246 = vrot.slane %v244, 7
    %v247 = vshll.u32 %v192, 16
    %v249 = vor.u32 %v246, %v247
    %v250 = vsel %vm203, %v238, %v249
    %v252 = vshrl.u32 %v193, 16
    %v254 = vrot.slane %v252, 7
    %v255 = vshll.u32 %v193, 16
    %v257 = vor.u32 %v254, %v255
    %v258 = vsel %vm203, %v246, %v257
    %v260 = vshrl.u32 %v194, 16
    %v262 = vrot.slane %v260, 7
    %v263 = vshll.u32 %v194, 16
    %v265 = vor.u32 %v262, %v263
    %v266 = vsel %vm203, %v254, %v265
    %v268 = vshrl.u32 %v195, 16
    %v270 = vrot.slane %v268, 7
    %v271 = vshll.u32 %v195, 16
    %v273 = vor.u32 %v270, %v271
    %v274 = vsel %vm203, %v262, %v273
    %v276 = vshrl.u32 %v196, 16
    %v278 = vrot.slane %v276, 7
    %v279 = vshll.u32 %v196, 16
    %v281 = vor.u32 %v278, %v279
    %v282 = vsel %vm203, %v270, %v281
    %v284 = vshrl.u32 %v197, 16
    %v286 = vrot.slane %v284, 7
    %v287 = vshll.u32 %v197, 16
    %v289 = vor.u32 %v286, %v287
    %v290 = vsel %vm203, %v278, %v289
    %v292 = vshrl.u32 %v198, 16
    %v294 = vrot.slane %v292, 7
    %v295 = vshll.u32 %v198, 16
    %v297 = vor.u32 %v294, %v295
    %v298 = vsel %vm203, %v286, %v297
    %v300 = vshrl.u32 %v199, 16
    %v302 = vrot.slane %v300, 7
    %v303 = vshll.u32 %v199, 16
    %v305 = vor.u32 %v302, %v303
    %v306 = vsel %vm203, %v294, %v305
    %v308 = vshrl.u32 %v200, 16
    %v310 = vrot.slane %v308, 7
    %v311 = vshll.u32 %v200, 16
    %v313 = vor.u32 %v310, %v311
    %v314 = vsel %vm203, %v302, %v313
    %v316 = vshrl.u32 %v201, 16
    %v318 = vrot.slane %v316, 7
    %v319 = vshll.u32 %v201, 16
    %v321 = vor.u32 %v318, %v319
    %v322 = vsel %vm203, %v310, %v321
    %v324 = vshrl.u32 %v202, 16
    %v326 = vrot.slane %v324, 7
    %v327 = vshll.u32 %v202, 16
    %v329 = vor.u32 %v326, %v327
    %v330 = vsel %vm203, %v318, %v329
    %vm348 = vcmask 1040384
    %vm349 = vmand %vm348, %vm203
    %v350 = vsel %vm349, 0, %v210
    %v351 = vsel %vm349, %v326, 0
    %v352 = vlaneseq
    %v353 = vshrl.u32 %v352, 7
    %v354 = vadd.s32 %v353, 8
    %v355 = vadd.s32 %v353, 16
    %v356 = vadd.s32 %v353, 24
    %v357 = vadd.s32 %v353, 32
    %v358 = vadd.s32 %v353, 40
    %v359 = vadd.s32 %v353, 48
    %v360 = vadd.s32 %v353, 56
    %v361 = vadd.s32 %v353, 64
    %v362 = vadd.s32 %v353, 72
    %v363 = vadd.s32 %v353, 80
    %v364 = vadd.s32 %v353, 88
    %v365 = vadd.s32 %v353, 96
    %v366 = vadd.s32 %v353, 104
    %v367 = vadd.s32 %v353, 112
    %v368 = vadd.s32 %v353, 120
    %v369 = vadd.s32 %v353, 128
    %v370 = vadd.s32 %v353, 136
    %v371 = vadd.s32 %v353, 144
    %v372 = vadd.s32 %v353, 152
    %v373 = vadd.s32 %v353, 160
    %v374 = vadd.s32 %v353, 168
    %v375 = vadd.s32 %v353, 176
    %v376 = vadd.s32 %v353, 184
    %v377 = vadd.s32 %v353, 192
    %v378 = vadd.s32 %v353, 200
    %v379 = vadd.s32 %v353, 208
    %v380 = vadd.s32 %v353, 216
    %v381 = vadd.s32 %v353, 224
    %v382 = vadd.s32 %v353, 232
    %v383 = vadd.s32 %v353, 240
    %v384 = vadd.s32 %v353, 248
    %v385 = vadd.s32 %v353, 256
    %v386 = vadd.s32 %v353, 264
    %v387 = vadd.s32 %v353, 272
    %v388 = vadd.s32 %v353, 280
    %v389 = vadd.s32 %v353, 288
    %v390 = vsub.s32 %v353, 17
    %v391 = vsub.s32 %v354, 17
    %v392 = vsub.s32 %v355, 17
    %v393 = vsub.s32 %v356, 17
    %v394 = vsub.s32 %v357, 17
    %v395 = vsub.s32 %v358, 17
    %v396 = vsub.s32 %v359, 17
    %v397 = vsub.s32 %v360, 17
    %v398 = vsub.s32 %v361, 17
    %v399 = vsub.s32 %v362, 17
    %v400 = vsub.s32 %v363, 17
    %v401 = vsub.s32 %v364, 17
    %v402 = vsub.s32 %v365, 17
    %v403 = vsub.s32 %v366, 17
    %v404 = vsub.s32 %v367, 17
    %v405 = vsub.s32 %v368, 17
    %v406 = vsub.s32 %v369, 17
    %v407 = vsub.s32 %v370, 17
    %v408 = vsub.s32 %v371, 17
    %v409 = vsub.s32 %v372, 17
    %v410 = vsub.s32 %v373, 17
    %v411 = vsub.s32 %v374, 17
    %v412 = vsub.s32 %v375, 17
    %v413 = vsub.s32 %v376, 17
    %v414 = vsub.s32 %v377, 17
    %v415 = vsub.s32 %v378, 17
    %v416 = vsub.s32 %v379, 17
    %v417 = vsub.s32 %v380, 17
    %v418 = vsub.s32 %v381, 17
    %v419 = vsub.s32 %v382, 17
    %v420 = vsub.s32 %v383, 17
    %v421 = vsub.s32 %v384, 17
    %v422 = vsub.s32 %v385, 17
    %v423 = vsub.s32 %v386, 17
    %v424 = vsub.s32 %v387, 17
    %v425 = vsub.s32 %v388, 17
    %v426 = vsub.s32 %v389, 17
    %vm427 = vcmp.lt.s32.totalorder %v390, 0
    %v428 = vsub.s32 0, %v390
    %v429 = vsel %vm427, %v428, %v390
    %v430 = vshrl.u32 %v429, 4
    %v431 = vand.u32 %v429, 15
    %v432 = vsub.s32 0, %v431
    %v433 = vsel %vm427, %v432, %v431
    %vm434 = vcmp.lt.s32.totalorder %v391, 0
    %v435 = vsub.s32 0, %v391
    %v436 = vsel %vm434, %v435, %v391
    %v437 = vshrl.u32 %v436, 4
    %v438 = vand.u32 %v436, 15
    %v439 = vsub.s32 0, %v438
    %v440 = vsel %vm434, %v439, %v438
    %vm441 = vcmp.lt.s32.totalorder %v392, 0
    %v442 = vsub.s32 0, %v392
    %v443 = vsel %vm441, %v442, %v392
    %v444 = vshrl.u32 %v443, 4
    %v445 = vand.u32 %v443, 15
    %v446 = vsub.s32 0, %v445
    %v447 = vsel %vm441, %v446, %v445
    %vm448 = vcmp.lt.s32.totalorder %v393, 0
    %v449 = vsub.s32 0, %v393
    %v450 = vsel %vm448, %v449, %v393
    %v451 = vshrl.u32 %v450, 4
    %v452 = vand.u32 %v450, 15
    %v453 = vsub.s32 0, %v452
    %v454 = vsel %vm448, %v453, %v452
    %vm455 = vcmp.lt.s32.totalorder %v394, 0
    %v456 = vsub.s32 0, %v394
    %v457 = vsel %vm455, %v456, %v394
    %v458 = vshrl.u32 %v457, 4
    %v459 = vand.u32 %v457, 15
    %v460 = vsub.s32 0, %v459
    %v461 = vsel %vm455, %v460, %v459
    %vm462 = vcmp.lt.s32.totalorder %v395, 0
    %v463 = vsub.s32 0, %v395
    %v464 = vsel %vm462, %v463, %v395
    %v465 = vshrl.u32 %v464, 4
    %v466 = vand.u32 %v464, 15
    %v467 = vsub.s32 0, %v466
    %v468 = vsel %vm462, %v467, %v466
    %vm469 = vcmp.lt.s32.totalorder %v396, 0
    %v470 = vsub.s32 0, %v396
    %v471 = vsel %vm469, %v470, %v396
    %v472 = vshrl.u32 %v471, 4
    %v473 = vand.u32 %v471, 15
    %v474 = vsub.s32 0, %v473
    %v475 = vsel %vm469, %v474, %v473
    %vm476 = vcmp.lt.s32.totalorder %v397, 0
    %v477 = vsub.s32 0, %v397
    %v478 = vsel %vm476, %v477, %v397
    %v479 = vshrl.u32 %v478, 4
    %v480 = vand.u32 %v478, 15
    %v481 = vsub.s32 0, %v480
    %v482 = vsel %vm476, %v481, %v480
    %vm483 = vcmp.lt.s32.totalorder %v398, 0
    %v484 = vsub.s32 0, %v398
    %v485 = vsel %vm483, %v484, %v398
    %v486 = vshrl.u32 %v485, 4
    %v487 = vand.u32 %v485, 15
    %v488 = vsub.s32 0, %v487
    %v489 = vsel %vm483, %v488, %v487
    %vm490 = vcmp.lt.s32.totalorder %v399, 0
    %v491 = vsub.s32 0, %v399
    %v492 = vsel %vm490, %v491, %v399
    %v493 = vshrl.u32 %v492, 4
    %v494 = vand.u32 %v492, 15
    %v495 = vsub.s32 0, %v494
    %v496 = vsel %vm490, %v495, %v494
    %vm497 = vcmp.lt.s32.totalorder %v400, 0
    %v498 = vsub.s32 0, %v400
    %v499 = vsel %vm497, %v498, %v400
    %v500 = vshrl.u32 %v499, 4
    %v501 = vand.u32 %v499, 15
    %v502 = vsub.s32 0, %v501
    %v503 = vsel %vm497, %v502, %v501
    %vm504 = vcmp.lt.s32.totalorder %v401, 0
    %v505 = vsub.s32 0, %v401
    %v506 = vsel %vm504, %v505, %v401
    %v507 = vshrl.u32 %v506, 4
    %v508 = vand.u32 %v506, 15
    %v509 = vsub.s32 0, %v508
    %v510 = vsel %vm504, %v509, %v508
    %vm511 = vcmp.lt.s32.totalorder %v402, 0
    %v512 = vsub.s32 0, %v402
    %v513 = vsel %vm511, %v512, %v402
    %v514 = vshrl.u32 %v513, 4
    %v515 = vand.u32 %v513, 15
    %v516 = vsub.s32 0, %v515
    %v517 = vsel %vm511, %v516, %v515
    %vm518 = vcmp.lt.s32.totalorder %v403, 0
    %v519 = vsub.s32 0, %v403
    %v520 = vsel %vm518, %v519, %v403
    %v521 = vshrl.u32 %v520, 4
    %v522 = vand.u32 %v520, 15
    %v523 = vsub.s32 0, %v522
    %v524 = vsel %vm518, %v523, %v522
    %vm525 = vcmp.lt.s32.totalorder %v404, 0
    %v526 = vsub.s32 0, %v404
    %v527 = vsel %vm525, %v526, %v404
    %v528 = vshrl.u32 %v527, 4
    %v529 = vand.u32 %v527, 15
    %v530 = vsub.s32 0, %v529
    %v531 = vsel %vm525, %v530, %v529
    %vm532 = vcmp.lt.s32.totalorder %v405, 0
    %v533 = vsub.s32 0, %v405
    %v534 = vsel %vm532, %v533, %v405
    %v535 = vshrl.u32 %v534, 4
    %v536 = vand.u32 %v534, 15
    %v537 = vsub.s32 0, %v536
    %v538 = vsel %vm532, %v537, %v536
    %vm539 = vcmp.lt.s32.totalorder %v406, 0
    %v540 = vsub.s32 0, %v406
    %v541 = vsel %vm539, %v540, %v406
    %v542 = vshrl.u32 %v541, 4
    %v543 = vand.u32 %v541, 15
    %v544 = vsub.s32 0, %v543
    %v545 = vsel %vm539, %v544, %v543
    %vm546 = vcmp.lt.s32.totalorder %v407, 0
    %v547 = vsub.s32 0, %v407
    %v548 = vsel %vm546, %v547, %v407
    %v549 = vshrl.u32 %v548, 4
    %v550 = vand.u32 %v548, 15
    %v551 = vsub.s32 0, %v550
    %v552 = vsel %vm546, %v551, %v550
    %vm553 = vcmp.lt.s32.totalorder %v408, 0
    %v554 = vsub.s32 0, %v408
    %v555 = vsel %vm553, %v554, %v408
    %v556 = vshrl.u32 %v555, 4
    %v557 = vand.u32 %v555, 15
    %v558 = vsub.s32 0, %v557
    %v559 = vsel %vm553, %v558, %v557
    %vm560 = vcmp.lt.s32.totalorder %v409, 0
    %v561 = vsub.s32 0, %v409
    %v562 = vsel %vm560, %v561, %v409
    %v563 = vshrl.u32 %v562, 4
    %v564 = vand.u32 %v562, 15
    %v565 = vsub.s32 0, %v564
    %v566 = vsel %vm560, %v565, %v564
    %vm567 = vcmp.lt.s32.totalorder %v410, 0
    %v568 = vsub.s32 0, %v410
    %v569 = vsel %vm567, %v568, %v410
    %v570 = vshrl.u32 %v569, 4
    %v571 = vand.u32 %v569, 15
    %v572 = vsub.s32 0, %v571
    %v573 = vsel %vm567, %v572, %v571
    %vm574 = vcmp.lt.s32.totalorder %v411, 0
    %v575 = vsub.s32 0, %v411
    %v576 = vsel %vm574, %v575, %v411
    %v577 = vshrl.u32 %v576, 4
    %v578 = vand.u32 %v576, 15
    %v579 = vsub.s32 0, %v578
    %v580 = vsel %vm574, %v579, %v578
    %vm581 = vcmp.lt.s32.totalorder %v412, 0
    %v582 = vsub.s32 0, %v412
    %v583 = vsel %vm581, %v582, %v412
    %v584 = vshrl.u32 %v583, 4
    %v585 = vand.u32 %v583, 15
    %v586 = vsub.s32 0, %v585
    %v587 = vsel %vm581, %v586, %v585
    %vm588 = vcmp.lt.s32.totalorder %v413, 0
    %v589 = vsub.s32 0, %v413
    %v590 = vsel %vm588, %v589, %v413
    %v591 = vshrl.u32 %v590, 4
    %v592 = vand.u32 %v590, 15
    %v593 = vsub.s32 0, %v592
    %v594 = vsel %vm588, %v593, %v592
    %vm595 = vcmp.lt.s32.totalorder %v414, 0
    %v596 = vsub.s32 0, %v414
    %v597 = vsel %vm595, %v596, %v414
    %v598 = vshrl.u32 %v597, 4
    %v599 = vand.u32 %v597, 15
    %v600 = vsub.s32 0, %v599
    %v601 = vsel %vm595, %v600, %v599
    %vm602 = vcmp.lt.s32.totalorder %v415, 0
    %v603 = vsub.s32 0, %v415
    %v604 = vsel %vm602, %v603, %v415
    %v605 = vshrl.u32 %v604, 4
    %v606 = vand.u32 %v604, 15
    %v607 = vsub.s32 0, %v606
    %v608 = vsel %vm602, %v607, %v606
    %vm609 = vcmp.lt.s32.totalorder %v416, 0
    %v610 = vsub.s32 0, %v416
    %v611 = vsel %vm609, %v610, %v416
    %v612 = vshrl.u32 %v611, 4
    %v613 = vand.u32 %v611, 15
    %v614 = vsub.s32 0, %v613
    %v615 = vsel %vm609, %v614, %v613
    %vm616 = vcmp.lt.s32.totalorder %v417, 0
    %v617 = vsub.s32 0, %v417
    %v618 = vsel %vm616, %v617, %v417
    %v619 = vshrl.u32 %v618, 4
    %v620 = vand.u32 %v618, 15
    %v621 = vsub.s32 0, %v620
    %v622 = vsel %vm616, %v621, %v620
    %vm623 = vcmp.lt.s32.totalorder %v418, 0
    %v624 = vsub.s32 0, %v418
    %v625 = vsel %vm623, %v624, %v418
    %v626 = vshrl.u32 %v625, 4
    %v627 = vand.u32 %v625, 15
    %v628 = vsub.s32 0, %v627
    %v629 = vsel %vm623, %v628, %v627
    %vm630 = vcmp.lt.s32.totalorder %v419, 0
    %v631 = vsub.s32 0, %v419
    %v632 = vsel %vm630, %v631, %v419
    %v633 = vshrl.u32 %v632, 4
    %v634 = vand.u32 %v632, 15
    %v635 = vsub.s32 0, %v634
    %v636 = vsel %vm630, %v635, %v634
    %vm637 = vcmp.lt.s32.totalorder %v420, 0
    %v638 = vsub.s32 0, %v420
    %v639 = vsel %vm637, %v638, %v420
    %v640 = vshrl.u32 %v639, 4
    %v641 = vand.u32 %v639, 15
    %v642 = vsub.s32 0, %v641
    %v643 = vsel %vm637, %v642, %v641
    %vm644 = vcmp.lt.s32.totalorder %v421, 0
    %v645 = vsub.s32 0, %v421
    %v646 = vsel %vm644, %v645, %v421
    %v647 = vshrl.u32 %v646, 4
    %v648 = vand.u32 %v646, 15
    %v649 = vsub.s32 0, %v648
    %v650 = vsel %vm644, %v649, %v648
    %vm651 = vcmp.lt.s32.totalorder %v422, 0
    %v652 = vsub.s32 0, %v422
    %v653 = vsel %vm651, %v652, %v422
    %v654 = vshrl.u32 %v653, 4
    %v655 = vand.u32 %v653, 15
    %v656 = vsub.s32 0, %v655
    %v657 = vsel %vm651, %v656, %v655
    %vm658 = vcmp.lt.s32.totalorder %v423, 0
    %v659 = vsub.s32 0, %v423
    %v660 = vsel %vm658, %v659, %v423
    %v661 = vshrl.u32 %v660, 4
    %v662 = vand.u32 %v660, 15
    %v663 = vsub.s32 0, %v662
    %v664 = vsel %vm658, %v663, %v662
    %vm665 = vcmp.lt.s32.totalorder %v424, 0
    %v666 = vsub.s32 0, %v424
    %v667 = vsel %vm665, %v666, %v424
    %v668 = vshrl.u32 %v667, 4
    %v669 = vand.u32 %v667, 15
    %v670 = vsub.s32 0, %v669
    %v671 = vsel %vm665, %v670, %v669
    %vm672 = vcmp.lt.s32.totalorder %v425, 0
    %v673 = vsub.s32 0, %v425
    %v674 = vsel %vm672, %v673, %v425
    %v675 = vshrl.u32 %v674, 4
    %v676 = vand.u32 %v674, 15
    %v677 = vsub.s32 0, %v676
    %v678 = vsel %vm672, %v677, %v676
    %vm679 = vcmp.lt.s32.totalorder %v426, 0
    %v680 = vsub.s32 0, %v426
    %v681 = vsel %vm679, %v680, %v426
    %v682 = vshrl.u32 %v681, 4
    %v683 = vand.u32 %v681, 15
    %v684 = vsub.s32 0, %v683
    %v685 = vsel %vm679, %v684, %v683
    %vm686 = vcmp.ne.s32.totalorder %v433, 0
    %vm687 = vcmp.ne.s32.totalorder %v440, 0
    %vm688 = vcmp.ne.s32.totalorder %v447, 0
    %vm689 = vcmp.ne.s32.totalorder %v454, 0
    %vm690 = vcmp.ne.s32.totalorder %v461, 0
    %vm691 = vcmp.ne.s32.totalorder %v468, 0
    %vm692 = vcmp.ne.s32.totalorder %v475, 0
    %vm693 = vcmp.ne.s32.totalorder %v482, 0
    %vm694 = vcmp.ne.s32.totalorder %v489, 0
    %vm695 = vcmp.ne.s32.totalorder %v496, 0
    %vm696 = vcmp.ne.s32.totalorder %v503, 0
    %vm697 = vcmp.ne.s32.totalorder %v510, 0
    %vm698 = vcmp.ne.s32.totalorder %v517, 0
    %vm699 = vcmp.ne.s32.totalorder %v524, 0
    %vm700 = vcmp.ne.s32.totalorder %v531, 0
    %vm701 = vcmp.ne.s32.totalorder %v538, 0
    %vm702 = vcmp.ne.s32.totalorder %v545, 0
    %vm703 = vcmp.ne.s32.totalorder %v552, 0
    %vm704 = vcmp.ne.s32.totalorder %v559, 0
    %vm705 = vcmp.ne.s32.totalorder %v566, 0
    %vm706 = vcmp.ne.s32.totalorder %v573, 0
    %vm707 = vcmp.ne.s32.totalorder %v580, 0
    %vm708 = vcmp.ne.s32.totalorder %v587, 0
    %vm709 = vcmp.ne.s32.totalorder %v594, 0
    %vm710 = vcmp.ne.s32.totalorder %v601, 0
    %vm711 = vcmp.ne.s32.totalorder %v608, 0
    %vm712 = vcmp.ne.s32.totalorder %v615, 0
    %vm713 = vcmp.ne.s32.totalorder %v622, 0
    %vm714 = vcmp.ne.s32.totalorder %v629, 0
    %vm715 = vcmp.ne.s32.totalorder %v636, 0
    %vm716 = vcmp.ne.s32.totalorder %v643, 0
    %vm717 = vcmp.ne.s32.totalorder %v650, 0
    %vm718 = vcmp.ne.s32.totalorder %v657, 0
    %vm719 = vcmp.ne.s32.totalorder %v664, 0
    %vm720 = vcmp.ne.s32.totalorder %v671, 0
    %vm721 = vcmp.ne.s32.totalorder %v678, 0
    %vm722 = vcmp.ne.s32.totalorder %v685, 0
    %vm723 = vcmp.lt.s32.totalorder %v433, 0
    %vm724 = vcmp.lt.s32.totalorder %v440, 0
    %vm725 = vcmp.lt.s32.totalorder %v447, 0
    %vm726 = vcmp.lt.s32.totalorder %v454, 0
    %vm727 = vcmp.lt.s32.totalorder %v461, 0
    %vm728 = vcmp.lt.s32.totalorder %v468, 0
    %vm729 = vcmp.lt.s32.totalorder %v475, 0
    %vm730 = vcmp.lt.s32.totalorder %v482, 0
    %vm731 = vcmp.lt.s32.totalorder %v489, 0
    %vm732 = vcmp.lt.s32.totalorder %v496, 0
    %vm733 = vcmp.lt.s32.totalorder %v503, 0
    %vm734 = vcmp.lt.s32.totalorder %v510, 0
    %vm735 = vcmp.lt.s32.totalorder %v517, 0
    %vm736 = vcmp.lt.s32.totalorder %v524, 0
    %vm737 = vcmp.lt.s32.totalorder %v531, 0
    %vm738 = vcmp.lt.s32.totalorder %v538, 0
    %vm739 = vcmp.lt.s32.totalorder %v545, 0
    %vm740 = vcmp.lt.s32.totalorder %v552, 0
    %vm741 = vcmp.lt.s32.totalorder %v559, 0
    %vm742 = vcmp.lt.s32.totalorder %v566, 0
    %vm743 = vcmp.lt.s32.totalorder %v573, 0
    %vm744 = vcmp.lt.s32.totalorder %v580, 0
    %vm745 = vcmp.lt.s32.totalorder %v587, 0
    %vm746 = vcmp.lt.s32.totalorder %v594, 0
    %vm747 = vcmp.lt.s32.totalorder %v601, 0
    %vm748 = vcmp.lt.s32.totalorder %v608, 0
    %vm749 = vcmp.lt.s32.totalorder %v615, 0
    %vm750 = vcmp.lt.s32.totalorder %v622, 0
    %vm751 = vcmp.lt.s32.totalorder %v629, 0
    %vm752 = vcmp.lt.s32.totalorder %v636, 0
    %vm753 = vcmp.lt.s32.totalorder %v643, 0
    %vm754 = vcmp.lt.s32.totalorder %v650, 0
    %vm755 = vcmp.lt.s32.totalorder %v657, 0
    %vm756 = vcmp.lt.s32.totalorder %v664, 0
    %vm757 = vcmp.lt.s32.totalorder %v671, 0
    %vm758 = vcmp.lt.s32.totalorder %v678, 0
    %vm759 = vcmp.lt.s32.totalorder %v685, 0
    %vm760 = vmand %vm723, %vm686
    %vm761 = vmand %vm724, %vm687
    %vm762 = vmand %vm725, %vm688
    %vm763 = vmand %vm726, %vm689
    %vm764 = vmand %vm727, %vm690
    %vm765 = vmand %vm728, %vm691
    %vm766 = vmand %vm729, %vm692
    %vm767 = vmand %vm730, %vm693
    %vm768 = vmand %vm731, %vm694
    %vm769 = vmand %vm732, %vm695
    %vm770 = vmand %vm733, %vm696
    %vm771 = vmand %vm734, %vm697
    %vm772 = vmand %vm735, %vm698
    %vm773 = vmand %vm736, %vm699
    %vm774 = vmand %vm737, %vm700
    %vm775 = vmand %vm738, %vm701
    %vm776 = vmand %vm739, %vm702
    %vm777 = vmand %vm740, %vm703
    %vm778 = vmand %vm741, %vm704
    %vm779 = vmand %vm742, %vm705
    %vm780 = vmand %vm743, %vm706
    %vm781 = vmand %vm744, %vm707
    %vm782 = vmand %vm745, %vm708
    %vm783 = vmand %vm746, %vm709
    %vm784 = vmand %vm747, %vm710
    %vm785 = vmand %vm748, %vm711
    %vm786 = vmand %vm749, %vm712
    %vm787 = vmand %vm750, %vm713
    %vm788 = vmand %vm751, %vm714
    %vm789 = vmand %vm752, %vm715
    %vm790 = vmand %vm753, %vm716
    %vm791 = vmand %vm754, %vm717
    %vm792 = vmand %vm755, %vm718
    %vm793 = vmand %vm756, %vm719
    %vm794 = vmand %vm757, %vm720
    %vm795 = vmand %vm758, %vm721
    %vm796 = vmand %vm759, %vm722
    %v797 = vadd.s32 %v433, 16
    %v798 = vadd.s32 %v440, 16
    %v799 = vadd.s32 %v447, 16
    %v800 = vadd.s32 %v454, 16
    %v801 = vadd.s32 %v461, 16
    %v802 = vadd.s32 %v468, 16
    %v803 = vadd.s32 %v475, 16
    %v804 = vadd.s32 %v482, 16
    %v805 = vadd.s32 %v489, 16
    %v806 = vadd.s32 %v496, 16
    %v807 = vadd.s32 %v503, 16
    %v808 = vadd.s32 %v510, 16
    %v809 = vadd.s32 %v517, 16
    %v810 = vadd.s32 %v524, 16
    %v811 = vadd.s32 %v531, 16
    %v812 = vadd.s32 %v538, 16
    %v813 = vadd.s32 %v545, 16
    %v814 = vadd.s32 %v552, 16
    %v815 = vadd.s32 %v559, 16
    %v816 = vadd.s32 %v566, 16
    %v817 = vadd.s32 %v573, 16
    %v818 = vadd.s32 %v580, 16
    %v819 = vadd.s32 %v587, 16
    %v820 = vadd.s32 %v594, 16
    %v821 = vadd.s32 %v601, 16
    %v822 = vadd.s32 %v608, 16
    %v823 = vadd.s32 %v615, 16
    %v824 = vadd.s32 %v622, 16
    %v825 = vadd.s32 %v629, 16
    %v826 = vadd.s32 %v636, 16
    %v827 = vadd.s32 %v643, 16
    %v828 = vadd.s32 %v650, 16
    %v829 = vadd.s32 %v657, 16
    %v830 = vadd.s32 %v664, 16
    %v831 = vadd.s32 %v671, 16
    %v832 = vadd.s32 %v678, 16
    %v833 = vadd.s32 %v685, 16
    %v834 = vsel %vm760, %v797, %v433
    %v835 = vsel %vm761, %v798, %v440
    %v836 = vsel %vm762, %v799, %v447
    %v837 = vsel %vm763, %v800, %v454
    %v838 = vsel %vm764, %v801, %v461
    %v839 = vsel %vm765, %v802, %v468
    %v840 = vsel %vm766, %v803, %v475
    %v841 = vsel %vm767, %v804, %v482
    %v842 = vsel %vm768, %v805, %v489
    %v843 = vsel %vm769, %v806, %v496
    %v844 = vsel %vm770, %v807, %v503
    %v845 = vsel %vm771, %v808, %v510
    %v846 = vsel %vm772, %v809, %v517
    %v847 = vsel %vm773, %v810, %v524
    %v848 = vsel %vm774, %v811, %v531
    %v849 = vsel %vm775, %v812, %v538
    %v850 = vsel %vm776, %v813, %v545
    %v851 = vsel %vm777, %v814, %v552
    %v852 = vsel %vm778, %v815, %v559
    %v853 = vsel %vm779, %v816, %v566
    %v854 = vsel %vm780, %v817, %v573
    %v855 = vsel %vm781, %v818, %v580
    %v856 = vsel %vm782, %v819, %v587
    %v857 = vsel %vm783, %v820, %v594
    %v858 = vsel %vm784, %v821, %v601
    %v859 = vsel %vm785, %v822, %v608
    %v860 = vsel %vm786, %v823, %v615
    %v861 = vsel %vm787, %v824, %v622
    %v862 = vsel %vm788, %v825, %v629
    %v863 = vsel %vm789, %v826, %v636
    %v864 = vsel %vm790, %v827, %v643
    %v865 = vsel %vm791, %v828, %v650
    %v866 = vsel %vm792, %v829, %v657
    %v867 = vsel %vm793, %v830, %v664
    %v868 = vsel %vm794, %v831, %v671
    %v869 = vsel %vm795, %v832, %v678
    %v870 = vsel %vm796, %v833, %v685
    %vm871 = vcmp.gt.s32.totalorder %v834, 0
    %vm872 = vcmp.gt.s32.totalorder %v835, 0
    %vm873 = vcmp.gt.s32.totalorder %v836, 0
    %vm874 = vcmp.gt.s32.totalorder %v837, 0
    %vm875 = vcmp.gt.s32.totalorder %v838, 0
    %vm876 = vcmp.gt.s32.totalorder %v839, 0
    %vm877 = vcmp.gt.s32.totalorder %v840, 0
    %vm878 = vcmp.gt.s32.totalorder %v841, 0
    %vm879 = vcmp.gt.s32.totalorder %v842, 0
    %vm880 = vcmp.gt.s32.totalorder %v843, 0
    %vm881 = vcmp.gt.s32.totalorder %v844, 0
    %vm882 = vcmp.gt.s32.totalorder %v845, 0
    %vm883 = vcmp.gt.s32.totalorder %v846, 0
    %vm884 = vcmp.gt.s32.totalorder %v847, 0
    %vm885 = vcmp.gt.s32.totalorder %v848, 0
    %vm886 = vcmp.gt.s32.totalorder %v849, 0
    %vm887 = vcmp.gt.s32.totalorder %v850, 0
    %vm888 = vcmp.gt.s32.totalorder %v851, 0
    %vm889 = vcmp.gt.s32.totalorder %v852, 0
    %vm890 = vcmp.gt.s32.totalorder %v853, 0
    %vm891 = vcmp.gt.s32.totalorder %v854, 0
    %vm892 = vcmp.gt.s32.totalorder %v855, 0
    %vm893 = vcmp.gt.s32.totalorder %v856, 0
    %vm894 = vcmp.gt.s32.totalorder %v857, 0
    %vm895 = vcmp.gt.s32.totalorder %v858, 0
    %vm896 = vcmp.gt.s32.totalorder %v859, 0
    %vm897 = vcmp.gt.s32.totalorder %v860, 0
    %vm898 = vcmp.gt.s32.totalorder %v861, 0
    %vm899 = vcmp.gt.s32.totalorder %v862, 0
    %vm900 = vcmp.gt.s32.totalorder %v863, 0
    %vm901 = vcmp.gt.s32.totalorder %v864, 0
    %vm902 = vcmp.gt.s32.totalorder %v865, 0
    %vm903 = vcmp.gt.s32.totalorder %v866, 0
    %vm904 = vcmp.gt.s32.totalorder %v867, 0
    %vm905 = vcmp.gt.s32.totalorder %v868, 0
    %vm906 = vcmp.gt.s32.totalorder %v869, 0
    %vm907 = vcmp.gt.s32.totalorder %v870, 0
    %v908 = vsel %vm871, 1, 0
    %v909 = vsel %vm872, 1, 0
    %v910 = vsel %vm873, 1, 0
    %v911 = vsel %vm874, 1, 0
    %v912 = vsel %vm875, 1, 0
    %v913 = vsel %vm876, 1, 0
    %v914 = vsel %vm877, 1, 0
    %v915 = vsel %vm878, 1, 0
    %v916 = vsel %vm879, 1, 0
    %v917 = vsel %vm880, 1, 0
    %v918 = vsel %vm881, 1, 0
    %v919 = vsel %vm882, 1, 0
    %v920 = vsel %vm883, 1, 0
    %v921 = vsel %vm884, 1, 0
    %v922 = vsel %vm885, 1, 0
    %v923 = vsel %vm886, 1, 0
    %v924 = vsel %vm887, 1, 0
    %v925 = vsel %vm888, 1, 0
    %v926 = vsel %vm889, 1, 0
    %v927 = vsel %vm890, 1, 0
    %v928 = vsel %vm891, 1, 0
    %v929 = vsel %vm892, 1, 0
    %v930 = vsel %vm893, 1, 0
    %v931 = vsel %vm894, 1, 0
    %v932 = vsel %vm895, 1, 0
    %v933 = vsel %vm896, 1, 0
    %v934 = vsel %vm897, 1, 0
    %v935 = vsel %vm898, 1, 0
    %v936 = vsel %vm899, 1, 0
    %v937 = vsel %vm900, 1, 0
    %v938 = vsel %vm901, 1, 0
    %v939 = vsel %vm902, 1, 0
    %v940 = vsel %vm903, 1, 0
    %v941 = vsel %vm904, 1, 0
    %v942 = vsel %vm905, 1, 0
    %v943 = vsel %vm906, 1, 0
    %v944 = vsel %vm907, 1, 0
    %v945 = vcvt.s32.f32 %v908
    %v946 = vcvt.s32.f32 %v909
    %v947 = vcvt.s32.f32 %v910
    %v948 = vcvt.s32.f32 %v911
    %v949 = vcvt.s32.f32 %v912
    %v950 = vcvt.s32.f32 %v913
    %v951 = vcvt.s32.f32 %v914
    %v952 = vcvt.s32.f32 %v915
    %v953 = vcvt.s32.f32 %v916
    %v954 = vcvt.s32.f32 %v917
    %v955 = vcvt.s32.f32 %v918
    %v956 = vcvt.s32.f32 %v919
    %v957 = vcvt.s32.f32 %v920
    %v958 = vcvt.s32.f32 %v921
    %v959 = vcvt.s32.f32 %v922
    %v960 = vcvt.s32.f32 %v923
    %v961 = vcvt.s32.f32 %v924
    %v962 = vcvt.s32.f32 %v925
    %v963 = vcvt.s32.f32 %v926
    %v964 = vcvt.s32.f32 %v927
    %v965 = vcvt.s32.f32 %v928
    %v966 = vcvt.s32.f32 %v929
    %v967 = vcvt.s32.f32 %v930
    %v968 = vcvt.s32.f32 %v931
    %v969 = vcvt.s32.f32 %v932
    %v970 = vcvt.s32.f32 %v933
    %v971 = vcvt.s32.f32 %v934
    %v972 = vcvt.s32.f32 %v935
    %v973 = vcvt.s32.f32 %v936
    %v974 = vcvt.s32.f32 %v937
    %v975 = vcvt.s32.f32 %v938
    %v976 = vcvt.s32.f32 %v939
    %v977 = vcvt.s32.f32 %v940
    %v978 = vcvt.s32.f32 %v941
    %v979 = vcvt.s32.f32 %v942
    %v980 = vcvt.s32.f32 %v943
    %v981 = vcvt.s32.f32 %v944
    %v982 = vpack.c.bf16 %v946, %v945
    %v983 = vpack.c.bf16 %v948, %v947
    %v984 = vpack.c.bf16 %v950, %v949
    %v985 = vpack.c.bf16 %v952, %v951
    %v986 = vpack.c.bf16 %v954, %v953
    %v987 = vpack.c.bf16 %v956, %v955
    %v988 = vpack.c.bf16 %v958, %v957
    %v989 = vpack.c.bf16 %v960, %v959
    %v990 = vpack.c.bf16 %v962, %v961
    %v991 = vpack.c.bf16 %v964, %v963
    %v992 = vpack.c.bf16 %v966, %v965
    %v993 = vpack.c.bf16 %v968, %v967
    %v994 = vpack.c.bf16 %v970, %v969
    %v995 = vpack.c.bf16 %v972, %v971
    %v996 = vpack.c.bf16 %v974, %v973
    %v997 = vpack.c.bf16 %v976, %v975
    %v998 = vpack.c.bf16 %v978, %v977
    %v999 = vpack.c.bf16 %v980, %v979
    %v1000 = vpack.c.bf16 %v981, %v981
    %v1001 = vmul.bf16 %v982, 0
    %v1002 = vmul.bf16 %v350, %v983
    %v1003 = vmul.bf16 %v218, %v984
    %v1004 = vmul.bf16 %v226, %v985
    %v1005 = vmul.bf16 %v234, %v986
    %v1006 = vmul.bf16 %v242, %v987
    %v1007 = vmul.bf16 %v250, %v988
    %v1008 = vmul.bf16 %v258, %v989
    %v1009 = vmul.bf16 %v266, %v990
    %v1010 = vmul.bf16 %v274, %v991
    %v1011 = vmul.bf16 %v282, %v992
    %v1012 = vmul.bf16 %v290, %v993
    %v1013 = vmul.bf16 %v298, %v994
    %v1014 = vmul.bf16 %v306, %v995
    %v1015 = vmul.bf16 %v314, %v996
    %v1016 = vmul.bf16 %v322, %v997
    %v1017 = vmul.bf16 %v330, %v998
    %v1018 = vmul.bf16 %v351, %v999
    %v1019 = vmul.bf16 %v1000, 0
    %vm1020 = vcmp.lt.s32.totalorder %v834, 15
    %vm1021 = vcmp.lt.s32.totalorder %v835, 15
    %vm1022 = vcmp.lt.s32.totalorder %v836, 15
    %vm1023 = vcmp.lt.s32.totalorder %v837, 15
    %vm1024 = vcmp.lt.s32.totalorder %v838, 15
    %vm1025 = vcmp.lt.s32.totalorder %v839, 15
    %vm1026 = vcmp.lt.s32.totalorder %v840, 15
    %vm1027 = vcmp.lt.s32.totalorder %v841, 15
    %vm1028 = vcmp.lt.s32.totalorder %v842, 15
    %vm1029 = vcmp.lt.s32.totalorder %v843, 15
    %vm1030 = vcmp.lt.s32.totalorder %v844, 15
    %vm1031 = vcmp.lt.s32.totalorder %v845, 15
    %vm1032 = vcmp.lt.s32.totalorder %v846, 15
    %vm1033 = vcmp.lt.s32.totalorder %v847, 15
    %vm1034 = vcmp.lt.s32.totalorder %v848, 15
    %vm1035 = vcmp.lt.s32.totalorder %v849, 15
    %vm1036 = vcmp.lt.s32.totalorder %v850, 15
    %vm1037 = vcmp.lt.s32.totalorder %v851, 15
    %vm1038 = vcmp.lt.s32.totalorder %v852, 15
    %vm1039 = vcmp.lt.s32.totalorder %v853, 15
    %vm1040 = vcmp.lt.s32.totalorder %v854, 15
    %vm1041 = vcmp.lt.s32.totalorder %v855, 15
    %vm1042 = vcmp.lt.s32.totalorder %v856, 15
    %vm1043 = vcmp.lt.s32.totalorder %v857, 15
    %vm1044 = vcmp.lt.s32.totalorder %v858, 15
    %vm1045 = vcmp.lt.s32.totalorder %v859, 15
    %vm1046 = vcmp.lt.s32.totalorder %v860, 15
    %vm1047 = vcmp.lt.s32.totalorder %v861, 15
    %vm1048 = vcmp.lt.s32.totalorder %v862, 15
    %vm1049 = vcmp.lt.s32.totalorder %v863, 15
    %vm1050 = vcmp.lt.s32.totalorder %v864, 15
    %vm1051 = vcmp.lt.s32.totalorder %v865, 15
    %vm1052 = vcmp.lt.s32.totalorder %v866, 15
    %vm1053 = vcmp.lt.s32.totalorder %v867, 15
    %vm1054 = vcmp.lt.s32.totalorder %v868, 15
    %vm1055 = vcmp.lt.s32.totalorder %v869, 15
    %v1056 = vsel %vm1020, 1, 0
    %v1057 = vsel %vm1021, 1, 0
    %v1058 = vsel %vm1022, 1, 0
    %v1059 = vsel %vm1023, 1, 0
    %v1060 = vsel %vm1024, 1, 0
    %v1061 = vsel %vm1025, 1, 0
    %v1062 = vsel %vm1026, 1, 0
    %v1063 = vsel %vm1027, 1, 0
    %v1064 = vsel %vm1028, 1, 0
    %v1065 = vsel %vm1029, 1, 0
    %v1066 = vsel %vm1030, 1, 0
    %v1067 = vsel %vm1031, 1, 0
    %v1068 = vsel %vm1032, 1, 0
    %v1069 = vsel %vm1033, 1, 0
    %v1070 = vsel %vm1034, 1, 0
    %v1071 = vsel %vm1035, 1, 0
    %v1072 = vsel %vm1036, 1, 0
    %v1073 = vsel %vm1037, 1, 0
    %v1074 = vsel %vm1038, 1, 0
    %v1075 = vsel %vm1039, 1, 0
    %v1076 = vsel %vm1040, 1, 0
    %v1077 = vsel %vm1041, 1, 0
    %v1078 = vsel %vm1042, 1, 0
    %v1079 = vsel %vm1043, 1, 0
    %v1080 = vsel %vm1044, 1, 0
    %v1081 = vsel %vm1045, 1, 0
    %v1082 = vsel %vm1046, 1, 0
    %v1083 = vsel %vm1047, 1, 0
    %v1084 = vsel %vm1048, 1, 0
    %v1085 = vsel %vm1049, 1, 0
    %v1086 = vsel %vm1050, 1, 0
    %v1087 = vsel %vm1051, 1, 0
    %v1088 = vsel %vm1052, 1, 0
    %v1089 = vsel %vm1053, 1, 0
    %v1090 = vsel %vm1054, 1, 0
    %v1091 = vsel %vm1055, 1, 0
    %v1092 = vcvt.s32.f32 %v1056
    %v1093 = vcvt.s32.f32 %v1057
    %v1094 = vcvt.s32.f32 %v1058
    %v1095 = vcvt.s32.f32 %v1059
    %v1096 = vcvt.s32.f32 %v1060
    %v1097 = vcvt.s32.f32 %v1061
    %v1098 = vcvt.s32.f32 %v1062
    %v1099 = vcvt.s32.f32 %v1063
    %v1100 = vcvt.s32.f32 %v1064
    %v1101 = vcvt.s32.f32 %v1065
    %v1102 = vcvt.s32.f32 %v1066
    %v1103 = vcvt.s32.f32 %v1067
    %v1104 = vcvt.s32.f32 %v1068
    %v1105 = vcvt.s32.f32 %v1069
    %v1106 = vcvt.s32.f32 %v1070
    %v1107 = vcvt.s32.f32 %v1071
    %v1108 = vcvt.s32.f32 %v1072
    %v1109 = vcvt.s32.f32 %v1073
    %v1110 = vcvt.s32.f32 %v1074
    %v1111 = vcvt.s32.f32 %v1075
    %v1112 = vcvt.s32.f32 %v1076
    %v1113 = vcvt.s32.f32 %v1077
    %v1114 = vcvt.s32.f32 %v1078
    %v1115 = vcvt.s32.f32 %v1079
    %v1116 = vcvt.s32.f32 %v1080
    %v1117 = vcvt.s32.f32 %v1081
    %v1118 = vcvt.s32.f32 %v1082
    %v1119 = vcvt.s32.f32 %v1083
    %v1120 = vcvt.s32.f32 %v1084
    %v1121 = vcvt.s32.f32 %v1085
    %v1122 = vcvt.s32.f32 %v1086
    %v1123 = vcvt.s32.f32 %v1087
    %v1124 = vcvt.s32.f32 %v1088
    %v1125 = vcvt.s32.f32 %v1089
    %v1126 = vcvt.s32.f32 %v1090
    %v1127 = vcvt.s32.f32 %v1091
    %v1128 = vpack.c.bf16 %v1093, %v1092
    %v1129 = vpack.c.bf16 %v1095, %v1094
    %v1130 = vpack.c.bf16 %v1097, %v1096
    %v1131 = vpack.c.bf16 %v1099, %v1098
    %v1132 = vpack.c.bf16 %v1101, %v1100
    %v1133 = vpack.c.bf16 %v1103, %v1102
    %v1134 = vpack.c.bf16 %v1105, %v1104
    %v1135 = vpack.c.bf16 %v1107, %v1106
    %v1136 = vpack.c.bf16 %v1109, %v1108
    %v1137 = vpack.c.bf16 %v1111, %v1110
    %v1138 = vpack.c.bf16 %v1113, %v1112
    %v1139 = vpack.c.bf16 %v1115, %v1114
    %v1140 = vpack.c.bf16 %v1117, %v1116
    %v1141 = vpack.c.bf16 %v1119, %v1118
    %v1142 = vpack.c.bf16 %v1121, %v1120
    %v1143 = vpack.c.bf16 %v1123, %v1122
    %v1144 = vpack.c.bf16 %v1125, %v1124
    %v1145 = vpack.c.bf16 %v1127, %v1126
    %v1146 = vmul.bf16 %v1128, 0
    %v1147 = vmul.bf16 %v350, %v1129
    %v1148 = vmul.bf16 %v218, %v1130
    %v1149 = vmul.bf16 %v226, %v1131
    %v1150 = vmul.bf16 %v234, %v1132
    %v1151 = vmul.bf16 %v242, %v1133
    %v1152 = vmul.bf16 %v250, %v1134
    %v1153 = vmul.bf16 %v258, %v1135
    %v1154 = vmul.bf16 %v266, %v1136
    %v1155 = vmul.bf16 %v274, %v1137
    %v1156 = vmul.bf16 %v282, %v1138
    %v1157 = vmul.bf16 %v290, %v1139
    %v1158 = vmul.bf16 %v298, %v1140
    %v1159 = vmul.bf16 %v306, %v1141
    %v1160 = vmul.bf16 %v314, %v1142
    %v1161 = vmul.bf16 %v322, %v1143
    %v1162 = vmul.bf16 %v330, %v1144
    %v1163 = vmul.bf16 %v351, %v1145
    %vm1164 = vsmask.f32 7424
    %v1166 = vshrl.u32 0, 16
    %v1168 = vshll.u32 0, 16
    %v1170 = vrot.slane %v1168, 1
    %v1171 = vor.u32 %v1166, %v1170
    %v1173 = vshll.u32 %v350, 16
    %v1175 = vrot.slane %v1173, 1
    %v1176 = vsel %vm1164, %v1171, %v1175
    %v1177 = vshrl.u32 %v350, 16
    %v1179 = vor.u32 %v1177, %v1175
    %v1181 = vshll.u32 %v218, 16
    %v1183 = vrot.slane %v1181, 1
    %v1184 = vsel %vm1164, %v1179, %v1183
    %v1185 = vshrl.u32 %v218, 16
    %v1187 = vor.u32 %v1185, %v1183
    %v1189 = vshll.u32 %v226, 16
    %v1191 = vrot.slane %v1189, 1
    %v1192 = vsel %vm1164, %v1187, %v1191
    %v1193 = vshrl.u32 %v226, 16
    %v1195 = vor.u32 %v1193, %v1191
    %v1197 = vshll.u32 %v234, 16
    %v1199 = vrot.slane %v1197, 1
    %v1200 = vsel %vm1164, %v1195, %v1199
    %v1201 = vshrl.u32 %v234, 16
    %v1203 = vor.u32 %v1201, %v1199
    %v1205 = vshll.u32 %v242, 16
    %v1207 = vrot.slane %v1205, 1
    %v1208 = vsel %vm1164, %v1203, %v1207
    %v1209 = vshrl.u32 %v242, 16
    %v1211 = vor.u32 %v1209, %v1207
    %v1213 = vshll.u32 %v250, 16
    %v1215 = vrot.slane %v1213, 1
    %v1216 = vsel %vm1164, %v1211, %v1215
    %v1217 = vshrl.u32 %v250, 16
    %v1219 = vor.u32 %v1217, %v1215
    %v1221 = vshll.u32 %v258, 16
    %v1223 = vrot.slane %v1221, 1
    %v1224 = vsel %vm1164, %v1219, %v1223
    %v1225 = vshrl.u32 %v258, 16
    %v1227 = vor.u32 %v1225, %v1223
    %v1229 = vshll.u32 %v266, 16
    %v1231 = vrot.slane %v1229, 1
    %v1232 = vsel %vm1164, %v1227, %v1231
    %v1233 = vshrl.u32 %v266, 16
    %v1235 = vor.u32 %v1233, %v1231
    %v1237 = vshll.u32 %v274, 16
    %v1239 = vrot.slane %v1237, 1
    %v1240 = vsel %vm1164, %v1235, %v1239
    %v1241 = vshrl.u32 %v274, 16
    %v1243 = vor.u32 %v1241, %v1239
    %v1245 = vshll.u32 %v282, 16
    %v1247 = vrot.slane %v1245, 1
    %v1248 = vsel %vm1164, %v1243, %v1247
    %v1249 = vshrl.u32 %v282, 16
    %v1251 = vor.u32 %v1249, %v1247
    %v1253 = vshll.u32 %v290, 16
    %v1255 = vrot.slane %v1253, 1
    %v1256 = vsel %vm1164, %v1251, %v1255
    %v1257 = vshrl.u32 %v290, 16
    %v1259 = vor.u32 %v1257, %v1255
    %v1261 = vshll.u32 %v298, 16
    %v1263 = vrot.slane %v1261, 1
    %v1264 = vsel %vm1164, %v1259, %v1263
    %v1265 = vshrl.u32 %v298, 16
    %v1267 = vor.u32 %v1265, %v1263
    %v1269 = vshll.u32 %v306, 16
    %v1271 = vrot.slane %v1269, 1
    %v1272 = vsel %vm1164, %v1267, %v1271
    %v1273 = vshrl.u32 %v306, 16
    %v1275 = vor.u32 %v1273, %v1271
    %v1277 = vshll.u32 %v314, 16
    %v1279 = vrot.slane %v1277, 1
    %v1280 = vsel %vm1164, %v1275, %v1279
    %v1281 = vshrl.u32 %v314, 16
    %v1283 = vor.u32 %v1281, %v1279
    %v1285 = vshll.u32 %v322, 16
    %v1287 = vrot.slane %v1285, 1
    %v1288 = vsel %vm1164, %v1283, %v1287
    %v1289 = vshrl.u32 %v322, 16
    %v1291 = vor.u32 %v1289, %v1287
    %v1293 = vshll.u32 %v330, 16
    %v1295 = vrot.slane %v1293, 1
    %v1296 = vsel %vm1164, %v1291, %v1295
    %1297 = vrot.lane.b32.xlu0 %v1176, 4
    %v1298 = vpop.permute.xlu0 %1297
    %1299 = vrot.lane.b32.xlu0 %v1184, 4
    %v1300 = vpop.permute.xlu0 %1299
    %1301 = vrot.lane.b32.xlu0 %v1192, 4
    %v1302 = vpop.permute.xlu0 %1301
    %1303 = vrot.lane.b32.xlu0 %v1200, 4
    %v1304 = vpop.permute.xlu0 %1303
    %1305 = vrot.lane.b32.xlu0 %v1208, 4
    %v1306 = vpop.permute.xlu0 %1305
    %1307 = vrot.lane.b32.xlu0 %v1216, 4
    %v1308 = vpop.permute.xlu0 %1307
    %1309 = vrot.lane.b32.xlu0 %v1224, 4
    %v1310 = vpop.permute.xlu0 %1309
    %1311 = vrot.lane.b32.xlu0 %v1232, 4
    %v1312 = vpop.permute.xlu0 %1311
    %1313 = vrot.lane.b32.xlu0 %v1240, 4
    %v1314 = vpop.permute.xlu0 %1313
    %1315 = vrot.lane.b32.xlu0 %v1248, 4
    %v1316 = vpop.permute.xlu0 %1315
    %1317 = vrot.lane.b32.xlu0 %v1256, 4
    %v1318 = vpop.permute.xlu0 %1317
    %1319 = vrot.lane.b32.xlu0 %v1264, 4
    %v1320 = vpop.permute.xlu0 %1319
    %1321 = vrot.lane.b32.xlu0 %v1272, 4
    %v1322 = vpop.permute.xlu0 %1321
    %1323 = vrot.lane.b32.xlu0 %v1280, 4
    %v1324 = vpop.permute.xlu0 %1323
    %1325 = vrot.lane.b32.xlu0 %v1288, 4
    %v1326 = vpop.permute.xlu0 %1325
    %1327 = vrot.lane.b32.xlu0 %v1296, 4
    %v1328 = vpop.permute.xlu0 %1327
    %vm1346 = vcmask 1046528
    %v1347 = vrot.slane %v1001, 1
    %v1348 = vrot.slane %v1002, 1
    %v1349 = vsel %vm1346, %v1347, %v1348
    %v1350 = vrot.slane %v1003, 1
    %v1351 = vsel %vm1346, %v1348, %v1350
    %v1352 = vrot.slane %v1004, 1
    %v1353 = vsel %vm1346, %v1350, %v1352
    %v1354 = vrot.slane %v1005, 1
    %v1355 = vsel %vm1346, %v1352, %v1354
    %v1356 = vrot.slane %v1006, 1
    %v1357 = vsel %vm1346, %v1354, %v1356
    %v1358 = vrot.slane %v1007, 1
    %v1359 = vsel %vm1346, %v1356, %v1358
    %v1360 = vrot.slane %v1008, 1
    %v1361 = vsel %vm1346, %v1358, %v1360
    %v1362 = vrot.slane %v1009, 1
    %v1363 = vsel %vm1346, %v1360, %v1362
    %v1364 = vrot.slane %v1010, 1
    %v1365 = vsel %vm1346, %v1362, %v1364
    %v1366 = vrot.slane %v1011, 1
    %v1367 = vsel %vm1346, %v1364, %v1366
    %v1368 = vrot.slane %v1012, 1
    %v1369 = vsel %vm1346, %v1366, %v1368
    %v1370 = vrot.slane %v1013, 1
    %v1371 = vsel %vm1346, %v1368, %v1370
    %v1372 = vrot.slane %v1014, 1
    %v1373 = vsel %vm1346, %v1370, %v1372
    %v1374 = vrot.slane %v1015, 1
    %v1375 = vsel %vm1346, %v1372, %v1374
    %v1376 = vrot.slane %v1016, 1
    %v1377 = vsel %vm1346, %v1374, %v1376
    %v1378 = vrot.slane %v1017, 1
    %v1379 = vsel %vm1346, %v1376, %v1378
    %1380 = vrot.lane.b32.xlu0 %v1349, 8
    %v1381 = vpop.permute.xlu0 %1380
    %1382 = vrot.lane.b32.xlu0 %v1351, 8
    %v1383 = vpop.permute.xlu0 %1382
    %1384 = vrot.lane.b32.xlu0 %v1353, 8
    %v1385 = vpop.permute.xlu0 %1384
    %1386 = vrot.lane.b32.xlu0 %v1355, 8
    %v1387 = vpop.permute.xlu0 %1386
    %1388 = vrot.lane.b32.xlu0 %v1357, 8
    %v1389 = vpop.permute.xlu0 %1388
    %1390 = vrot.lane.b32.xlu0 %v1359, 8
    %v1391 = vpop.permute.xlu0 %1390
    %1392 = vrot.lane.b32.xlu0 %v1361, 8
    %v1393 = vpop.permute.xlu0 %1392
    %1394 = vrot.lane.b32.xlu0 %v1363, 8
    %v1395 = vpop.permute.xlu0 %1394
    %1396 = vrot.lane.b32.xlu0 %v1365, 8
    %v1397 = vpop.permute.xlu0 %1396
    %1398 = vrot.lane.b32.xlu0 %v1367, 8
    %v1399 = vpop.permute.xlu0 %1398
    %1400 = vrot.lane.b32.xlu0 %v1369, 8
    %v1401 = vpop.permute.xlu0 %1400
    %1402 = vrot.lane.b32.xlu0 %v1371, 8
    %v1403 = vpop.permute.xlu0 %1402
    %1404 = vrot.lane.b32.xlu0 %v1373, 8
    %v1405 = vpop.permute.xlu0 %1404
    %1406 = vrot.lane.b32.xlu0 %v1375, 8
    %v1407 = vpop.permute.xlu0 %1406
    %1408 = vrot.lane.b32.xlu0 %v1377, 8
    %v1409 = vpop.permute.xlu0 %1408
    %1410 = vrot.lane.b32.xlu0 %v1379, 8
    %v1411 = vpop.permute.xlu0 %1410
    %1428 = vrot.lane.b32.xlu0 %v1147, 12
    %v1429 = vpop.permute.xlu0 %1428
    %1430 = vrot.lane.b32.xlu0 %v1148, 12
    %v1431 = vpop.permute.xlu0 %1430
    %1432 = vrot.lane.b32.xlu0 %v1149, 12
    %v1433 = vpop.permute.xlu0 %1432
    %1434 = vrot.lane.b32.xlu0 %v1150, 12
    %v1435 = vpop.permute.xlu0 %1434
    %1436 = vrot.lane.b32.xlu0 %v1151, 12
    %v1437 = vpop.permute.xlu0 %1436
    %1438 = vrot.lane.b32.xlu0 %v1152, 12
    %v1439 = vpop.permute.xlu0 %1438
    %1440 = vrot.lane.b32.xlu0 %v1153, 12
    %v1441 = vpop.permute.xlu0 %1440
    %1442 = vrot.lane.b32.xlu0 %v1154, 12
    %v1443 = vpop.permute.xlu0 %1442
    %1444 = vrot.lane.b32.xlu0 %v1155, 12
    %v1445 = vpop.permute.xlu0 %1444
    %1446 = vrot.lane.b32.xlu0 %v1156, 12
    %v1447 = vpop.permute.xlu0 %1446
    %1448 = vrot.lane.b32.xlu0 %v1157, 12
    %v1449 = vpop.permute.xlu0 %1448
    %1450 = vrot.lane.b32.xlu0 %v1158, 12
    %v1451 = vpop.permute.xlu0 %1450
    %1452 = vrot.lane.b32.xlu0 %v1159, 12
    %v1453 = vpop.permute.xlu0 %1452
    %1454 = vrot.lane.b32.xlu0 %v1160, 12
    %v1455 = vpop.permute.xlu0 %1454
    %1456 = vrot.lane.b32.xlu0 %v1161, 12
    %v1457 = vpop.permute.xlu0 %1456
    %1458 = vrot.lane.b32.xlu0 %v1162, 12
    %v1459 = vpop.permute.xlu0 %1458
    %v1460 = vshrl.u32 %v330, 16
    %v1462 = vor.u32 %v1460, %v1295
    %v1464 = vshll.u32 %v351, 16
    %v1466 = vrot.slane %v1464, 1
    %v1467 = vsel %vm1164, %v1462, %v1466
    %1468 = vrot.lane.b32.xlu0 %v1184, 16
    %v1469 = vpop.permute.xlu0 %1468
    %1470 = vrot.lane.b32.xlu0 %v1192, 16
    %v1471 = vpop.permute.xlu0 %1470
    %1472 = vrot.lane.b32.xlu0 %v1200, 16
    %v1473 = vpop.permute.xlu0 %1472
    %1474 = vrot.lane.b32.xlu0 %v1208, 16
    %v1475 = vpop.permute.xlu0 %1474
    %1476 = vrot.lane.b32.xlu0 %v1216, 16
    %v1477 = vpop.permute.xlu0 %1476
    %1478 = vrot.lane.b32.xlu0 %v1224, 16
    %v1479 = vpop.permute.xlu0 %1478
    %1480 = vrot.lane.b32.xlu0 %v1232, 16
    %v1481 = vpop.permute.xlu0 %1480
    %1482 = vrot.lane.b32.xlu0 %v1240, 16
    %v1483 = vpop.permute.xlu0 %1482
    %1484 = vrot.lane.b32.xlu0 %v1248, 16
    %v1485 = vpop.permute.xlu0 %1484
    %1486 = vrot.lane.b32.xlu0 %v1256, 16
    %v1487 = vpop.permute.xlu0 %1486
    %1488 = vrot.lane.b32.xlu0 %v1264, 16
    %v1489 = vpop.permute.xlu0 %1488
    %1490 = vrot.lane.b32.xlu0 %v1272, 16
    %v1491 = vpop.permute.xlu0 %1490
    %1492 = vrot.lane.b32.xlu0 %v1280, 16
    %v1493 = vpop.permute.xlu0 %1492
    %1494 = vrot.lane.b32.xlu0 %v1288, 16
    %v1495 = vpop.permute.xlu0 %1494
    %1496 = vrot.lane.b32.xlu0 %v1296, 16
    %v1497 = vpop.permute.xlu0 %1496
    %1498 = vrot.lane.b32.xlu0 %v1467, 16
    %v1499 = vpop.permute.xlu0 %1498
    %v1501 = vrot.slane %v1018, 1
    %v1502 = vsel %vm1346, %v1378, %v1501
    %1503 = vrot.lane.b32.xlu0 %v1351, 20
    %v1504 = vpop.permute.xlu0 %1503
    %1505 = vrot.lane.b32.xlu0 %v1353, 20
    %v1506 = vpop.permute.xlu0 %1505
    %1507 = vrot.lane.b32.xlu0 %v1355, 20
    %v1508 = vpop.permute.xlu0 %1507
    %1509 = vrot.lane.b32.xlu0 %v1357, 20
    %v1510 = vpop.permute.xlu0 %1509
    %1511 = vrot.lane.b32.xlu0 %v1359, 20
    %v1512 = vpop.permute.xlu0 %1511
    %1513 = vrot.lane.b32.xlu0 %v1361, 20
    %v1514 = vpop.permute.xlu0 %1513
    %1515 = vrot.lane.b32.xlu0 %v1363, 20
    %v1516 = vpop.permute.xlu0 %1515
    %1517 = vrot.lane.b32.xlu0 %v1365, 20
    %v1518 = vpop.permute.xlu0 %1517
    %1519 = vrot.lane.b32.xlu0 %v1367, 20
    %v1520 = vpop.permute.xlu0 %1519
    %1521 = vrot.lane.b32.xlu0 %v1369, 20
    %v1522 = vpop.permute.xlu0 %1521
    %1523 = vrot.lane.b32.xlu0 %v1371, 20
    %v1524 = vpop.permute.xlu0 %1523
    %1525 = vrot.lane.b32.xlu0 %v1373, 20
    %v1526 = vpop.permute.xlu0 %1525
    %1527 = vrot.lane.b32.xlu0 %v1375, 20
    %v1528 = vpop.permute.xlu0 %1527
    %1529 = vrot.lane.b32.xlu0 %v1377, 20
    %v1530 = vpop.permute.xlu0 %1529
    %1531 = vrot.lane.b32.xlu0 %v1379, 20
    %v1532 = vpop.permute.xlu0 %1531
    %1533 = vrot.lane.b32.xlu0 %v1502, 20
    %v1534 = vpop.permute.xlu0 %1533
    %1536 = vrot.lane.b32.xlu0 %v1148, 24
    %v1537 = vpop.permute.xlu0 %1536
    %1538 = vrot.lane.b32.xlu0 %v1149, 24
    %v1539 = vpop.permute.xlu0 %1538
    %1540 = vrot.lane.b32.xlu0 %v1150, 24
    %v1541 = vpop.permute.xlu0 %1540
    %1542 = vrot.lane.b32.xlu0 %v1151, 24
    %v1543 = vpop.permute.xlu0 %1542
    %1544 = vrot.lane.b32.xlu0 %v1152, 24
    %v1545 = vpop.permute.xlu0 %1544
    %1546 = vrot.lane.b32.xlu0 %v1153, 24
    %v1547 = vpop.permute.xlu0 %1546
    %1548 = vrot.lane.b32.xlu0 %v1154, 24
    %v1549 = vpop.permute.xlu0 %1548
    %1550 = vrot.lane.b32.xlu0 %v1155, 24
    %v1551 = vpop.permute.xlu0 %1550
    %1552 = vrot.lane.b32.xlu0 %v1156, 24
    %v1553 = vpop.permute.xlu0 %1552
    %1554 = vrot.lane.b32.xlu0 %v1157, 24
    %v1555 = vpop.permute.xlu0 %1554
    %1556 = vrot.lane.b32.xlu0 %v1158, 24
    %v1557 = vpop.permute.xlu0 %1556
    %1558 = vrot.lane.b32.xlu0 %v1159, 24
    %v1559 = vpop.permute.xlu0 %1558
    %1560 = vrot.lane.b32.xlu0 %v1160, 24
    %v1561 = vpop.permute.xlu0 %1560
    %1562 = vrot.lane.b32.xlu0 %v1161, 24
    %v1563 = vpop.permute.xlu0 %1562
    %1564 = vrot.lane.b32.xlu0 %v1162, 24
    %v1565 = vpop.permute.xlu0 %1564
    %1566 = vrot.lane.b32.xlu0 %v1163, 24
    %v1567 = vpop.permute.xlu0 %1566
    %v1568 = vshrl.u32 %v351, 16
    %v1570 = vor.u32 %v1568, %v1466
    %v1571 = vsel %vm1164, %v1570, %v1170
    %1572 = vrot.lane.b32.xlu0 %v1192, 28
    %v1573 = vpop.permute.xlu0 %1572
    %1574 = vrot.lane.b32.xlu0 %v1200, 28
    %v1575 = vpop.permute.xlu0 %1574
    %1576 = vrot.lane.b32.xlu0 %v1208, 28
    %v1577 = vpop.permute.xlu0 %1576
    %1578 = vrot.lane.b32.xlu0 %v1216, 28
    %v1579 = vpop.permute.xlu0 %1578
    %1580 = vrot.lane.b32.xlu0 %v1224, 28
    %v1581 = vpop.permute.xlu0 %1580
    %1582 = vrot.lane.b32.xlu0 %v1232, 28
    %v1583 = vpop.permute.xlu0 %1582
    %1584 = vrot.lane.b32.xlu0 %v1240, 28
    %v1585 = vpop.permute.xlu0 %1584
    %1586 = vrot.lane.b32.xlu0 %v1248, 28
    %v1587 = vpop.permute.xlu0 %1586
    %1588 = vrot.lane.b32.xlu0 %v1256, 28
    %v1589 = vpop.permute.xlu0 %1588
    %1590 = vrot.lane.b32.xlu0 %v1264, 28
    %v1591 = vpop.permute.xlu0 %1590
    %1592 = vrot.lane.b32.xlu0 %v1272, 28
    %v1593 = vpop.permute.xlu0 %1592
    %1594 = vrot.lane.b32.xlu0 %v1280, 28
    %v1595 = vpop.permute.xlu0 %1594
    %1596 = vrot.lane.b32.xlu0 %v1288, 28
    %v1597 = vpop.permute.xlu0 %1596
    %1598 = vrot.lane.b32.xlu0 %v1296, 28
    %v1599 = vpop.permute.xlu0 %1598
    %1600 = vrot.lane.b32.xlu0 %v1467, 28
    %v1601 = vpop.permute.xlu0 %1600
    %1602 = vrot.lane.b32.xlu0 %v1571, 28
    %v1603 = vpop.permute.xlu0 %1602
    %v1605 = vrot.slane %v1019, 1
    %v1606 = vsel %vm1346, %v1501, %v1605
    %1607 = vrot.lane.b32.xlu0 %v1353, 32
    %v1608 = vpop.permute.xlu0 %1607
    %1609 = vrot.lane.b32.xlu0 %v1355, 32
    %v1610 = vpop.permute.xlu0 %1609
    %1611 = vrot.lane.b32.xlu0 %v1357, 32
    %v1612 = vpop.permute.xlu0 %1611
    %1613 = vrot.lane.b32.xlu0 %v1359, 32
    %v1614 = vpop.permute.xlu0 %1613
    %1615 = vrot.lane.b32.xlu0 %v1361, 32
    %v1616 = vpop.permute.xlu0 %1615
    %1617 = vrot.lane.b32.xlu0 %v1363, 32
    %v1618 = vpop.permute.xlu0 %1617
    %1619 = vrot.lane.b32.xlu0 %v1365, 32
    %v1620 = vpop.permute.xlu0 %1619
    %1621 = vrot.lane.b32.xlu0 %v1367, 32
    %v1622 = vpop.permute.xlu0 %1621
    %1623 = vrot.lane.b32.xlu0 %v1369, 32
    %v1624 = vpop.permute.xlu0 %1623
    %1625 = vrot.lane.b32.xlu0 %v1371, 32
    %v1626 = vpop.permute.xlu0 %1625
    %1627 = vrot.lane.b32.xlu0 %v1373, 32
    %v1628 = vpop.permute.xlu0 %1627
    %1629 = vrot.lane.b32.xlu0 %v1375, 32
    %v1630 = vpop.permute.xlu0 %1629
    %1631 = vrot.lane.b32.xlu0 %v1377, 32
    %v1632 = vpop.permute.xlu0 %1631
    %1633 = vrot.lane.b32.xlu0 %v1379, 32
    %v1634 = vpop.permute.xlu0 %1633
    %1635 = vrot.lane.b32.xlu0 %v1502, 32
    %v1636 = vpop.permute.xlu0 %1635
    %1637 = vrot.lane.b32.xlu0 %v1606, 32
    %v1638 = vpop.permute.xlu0 %1637
    %vm1639 = vcmask 31744
    %v1642 = vsel %vm1639, %v1146, %v1298
    %v1645 = vsel %vm1639, %v1147, %v1300
    %v1648 = vsel %vm1639, %v1148, %v1302
    %v1651 = vsel %vm1639, %v1149, %v1304
    %v1654 = vsel %vm1639, %v1150, %v1306
    %v1657 = vsel %vm1639, %v1151, %v1308
    %v1660 = vsel %vm1639, %v1152, %v1310
    %v1663 = vsel %vm1639, %v1153, %v1312
    %v1666 = vsel %vm1639, %v1154, %v1314
    %v1669 = vsel %vm1639, %v1155, %v1316
    %v1672 = vsel %vm1639, %v1156, %v1318
    %v1675 = vsel %vm1639, %v1157, %v1320
    %v1678 = vsel %vm1639, %v1158, %v1322
    %v1681 = vsel %vm1639, %v1159, %v1324
    %v1684 = vsel %vm1639, %v1160, %v1326
    %v1687 = vsel %vm1639, %v1161, %v1328
    %vm1688 = vcmask 64512
    %v1690 = vsel %vm1688, %v1642, %v1381
    %v1692 = vsel %vm1688, %v1645, %v1383
    %v1694 = vsel %vm1688, %v1648, %v1385
    %v1696 = vsel %vm1688, %v1651, %v1387
    %v1698 = vsel %vm1688, %v1654, %v1389
    %v1700 = vsel %vm1688, %v1657, %v1391
    %v1702 = vsel %vm1688, %v1660, %v1393
    %v1704 = vsel %vm1688, %v1663, %v1395
    %v1706 = vsel %vm1688, %v1666, %v1397
    %v1708 = vsel %vm1688, %v1669, %v1399
    %v1710 = vsel %vm1688, %v1672, %v1401
    %v1712 = vsel %vm1688, %v1675, %v1403
    %v1714 = vsel %vm1688, %v1678, %v1405
    %v1716 = vsel %vm1688, %v1681, %v1407
    %v1718 = vsel %vm1688, %v1684, %v1409
    %v1720 = vsel %vm1688, %v1687, %v1411
    %vm1721 = vcmask 97280
    %v1723 = vsel %vm1721, %v1690, %v1429
    %v1725 = vsel %vm1721, %v1692, %v1431
    %v1727 = vsel %vm1721, %v1694, %v1433
    %v1729 = vsel %vm1721, %v1696, %v1435
    %v1731 = vsel %vm1721, %v1698, %v1437
    %v1733 = vsel %vm1721, %v1700, %v1439
    %v1735 = vsel %vm1721, %v1702, %v1441
    %v1737 = vsel %vm1721, %v1704, %v1443
    %v1739 = vsel %vm1721, %v1706, %v1445
    %v1741 = vsel %vm1721, %v1708, %v1447
    %v1743 = vsel %vm1721, %v1710, %v1449
    %v1745 = vsel %vm1721, %v1712, %v1451
    %v1747 = vsel %vm1721, %v1714, %v1453
    %v1749 = vsel %vm1721, %v1716, %v1455
    %v1751 = vsel %vm1721, %v1718, %v1457
    %v1753 = vsel %vm1721, %v1720, %v1459
    %vm1754 = vcmask 130048
    %v1756 = vsel %vm1754, %v1723, %v1469
    %v1758 = vsel %vm1754, %v1725, %v1471
    %v1760 = vsel %vm1754, %v1727, %v1473
    %v1762 = vsel %vm1754, %v1729, %v1475
    %v1764 = vsel %vm1754, %v1731, %v1477
    %v1766 = vsel %vm1754, %v1733, %v1479
    %v1768 = vsel %vm1754, %v1735, %v1481
    %v1770 = vsel %vm1754, %v1737, %v1483
    %v1772 = vsel %vm1754, %v1739, %v1485
    %v1774 = vsel %vm1754, %v1741, %v1487
    %v1776 = vsel %vm1754, %v1743, %v1489
    %v1778 = vsel %vm1754, %v1745, %v1491
    %v1780 = vsel %vm1754, %v1747, %v1493
    %v1782 = vsel %vm1754, %v1749, %v1495
    %v1784 = vsel %vm1754, %v1751, %v1497
    %v1786 = vsel %vm1754, %v1753, %v1499
    %vm1787 = vcmask 162816
    %v1789 = vsel %vm1787, %v1756, %v1504
    %v1791 = vsel %vm1787, %v1758, %v1506
    %v1793 = vsel %vm1787, %v1760, %v1508
    %v1795 = vsel %vm1787, %v1762, %v1510
    %v1797 = vsel %vm1787, %v1764, %v1512
    %v1799 = vsel %vm1787, %v1766, %v1514
    %v1801 = vsel %vm1787, %v1768, %v1516
    %v1803 = vsel %vm1787, %v1770, %v1518
    %v1805 = vsel %vm1787, %v1772, %v1520
    %v1807 = vsel %vm1787, %v1774, %v1522
    %v1809 = vsel %vm1787, %v1776, %v1524
    %v1811 = vsel %vm1787, %v1778, %v1526
    %v1813 = vsel %vm1787, %v1780, %v1528
    %v1815 = vsel %vm1787, %v1782, %v1530
    %v1817 = vsel %vm1787, %v1784, %v1532
    %v1819 = vsel %vm1787, %v1786, %v1534
    %vm1820 = vcmask 195584
    %v1822 = vsel %vm1820, %v1789, %v1537
    %v1824 = vsel %vm1820, %v1791, %v1539
    %v1826 = vsel %vm1820, %v1793, %v1541
    %v1828 = vsel %vm1820, %v1795, %v1543
    %v1830 = vsel %vm1820, %v1797, %v1545
    %v1832 = vsel %vm1820, %v1799, %v1547
    %v1834 = vsel %vm1820, %v1801, %v1549
    %v1836 = vsel %vm1820, %v1803, %v1551
    %v1838 = vsel %vm1820, %v1805, %v1553
    %v1840 = vsel %vm1820, %v1807, %v1555
    %v1842 = vsel %vm1820, %v1809, %v1557
    %v1844 = vsel %vm1820, %v1811, %v1559
    %v1846 = vsel %vm1820, %v1813, %v1561
    %v1848 = vsel %vm1820, %v1815, %v1563
    %v1850 = vsel %vm1820, %v1817, %v1565
    %v1852 = vsel %vm1820, %v1819, %v1567
    %vm1853 = vcmask 228352
    %v1855 = vsel %vm1853, %v1822, %v1573
    %v1857 = vsel %vm1853, %v1824, %v1575
    %v1859 = vsel %vm1853, %v1826, %v1577
    %v1861 = vsel %vm1853, %v1828, %v1579
    %v1863 = vsel %vm1853, %v1830, %v1581
    %v1865 = vsel %vm1853, %v1832, %v1583
    %v1867 = vsel %vm1853, %v1834, %v1585
    %v1869 = vsel %vm1853, %v1836, %v1587
    %v1871 = vsel %vm1853, %v1838, %v1589
    %v1873 = vsel %vm1853, %v1840, %v1591
    %v1875 = vsel %vm1853, %v1842, %v1593
    %v1877 = vsel %vm1853, %v1844, %v1595
    %v1879 = vsel %vm1853, %v1846, %v1597
    %v1881 = vsel %vm1853, %v1848, %v1599
    %v1883 = vsel %vm1853, %v1850, %v1601
    %v1885 = vsel %vm1853, %v1852, %v1603
    %vm1886 = vcmask 261120
    %v1888 = vsel %vm1886, %v1855, %v1608
    %v1890 = vsel %vm1886, %v1857, %v1610
    %v1892 = vsel %vm1886, %v1859, %v1612
    %v1894 = vsel %vm1886, %v1861, %v1614
    %v1896 = vsel %vm1886, %v1863, %v1616
    %v1898 = vsel %vm1886, %v1865, %v1618
    %v1900 = vsel %vm1886, %v1867, %v1620
    %v1902 = vsel %vm1886, %v1869, %v1622
    %v1904 = vsel %vm1886, %v1871, %v1624
    %v1906 = vsel %vm1886, %v1873, %v1626
    %v1908 = vsel %vm1886, %v1875, %v1628
    %v1910 = vsel %vm1886, %v1877, %v1630
    %v1912 = vsel %vm1886, %v1879, %v1632
    %v1914 = vsel %vm1886, %v1881, %v1634
    %v1916 = vsel %vm1886, %v1883, %v1636
    %v1918 = vsel %vm1886, %v1885, %v1638
    %v1951 = vunpack.c.l.b16 %v91
    %v1952 = vunpack.c.l.b16 %v92
    %v1953 = vunpack.c.l.b16 %v93
    %v1954 = vunpack.c.l.b16 %v94
    %v1955 = vunpack.c.l.b16 %v95
    %v1956 = vunpack.c.l.b16 %v96
    %v1957 = vunpack.c.l.b16 %v97
    %v1958 = vunpack.c.l.b16 %v98
    %v1959 = vunpack.c.l.b16 %v99
    %v1960 = vunpack.c.l.b16 %v100
    %v1961 = vunpack.c.l.b16 %v101
    %v1962 = vunpack.c.l.b16 %v102
    %v1963 = vunpack.c.l.b16 %v103
    %v1964 = vunpack.c.l.b16 %v104
    %v1965 = vunpack.c.l.b16 %v105
    %v1966 = vunpack.c.l.b16 %v106
    %v1967 = vunpack.c.l.b16 %v107
    %v1968 = vunpack.c.l.b16 %v108
    %v1969 = vunpack.c.l.b16 %v109
    %v1970 = vunpack.c.l.b16 %v110
    %v1971 = vunpack.c.l.b16 %v111
    %v1972 = vunpack.c.l.b16 %v112
    %v1973 = vunpack.c.l.b16 %v113
    %v1974 = vunpack.c.l.b16 %v114
    %v1975 = vunpack.c.l.b16 %v115
    %v1976 = vunpack.c.l.b16 %v116
    %v1977 = vunpack.c.l.b16 %v117
    %v1978 = vunpack.c.l.b16 %v118
    %v1979 = vunpack.c.l.b16 %v119
    %v1980 = vunpack.c.l.b16 %v120
    %v1981 = vunpack.c.l.b16 %v121
    %v1982 = vunpack.c.l.b16 %v122
    %v1983 = vpack.c.b16 %v1952, %v1951
    %v1984 = vpack.c.b16 %v1954, %v1953
    %v1985 = vpack.c.b16 %v1956, %v1955
    %v1986 = vpack.c.b16 %v1958, %v1957
    %v1987 = vpack.c.b16 %v1960, %v1959
    %v1988 = vpack.c.b16 %v1962, %v1961
    %v1989 = vpack.c.b16 %v1964, %v1963
    %v1990 = vpack.c.b16 %v1966, %v1965
    %v1991 = vpack.c.b16 %v1968, %v1967
    %v1992 = vpack.c.b16 %v1970, %v1969
    %v1993 = vpack.c.b16 %v1972, %v1971
    %v1994 = vpack.c.b16 %v1974, %v1973
    %v1995 = vpack.c.b16 %v1976, %v1975
    %v1996 = vpack.c.b16 %v1978, %v1977
    %v1997 = vpack.c.b16 %v1980, %v1979
    %v1998 = vpack.c.b16 %v1982, %v1981
    %v2000 = vshrl.u32 %v1983, 16
    %v2002 = vrot.slane %v2000, 7
    %v2003 = vshll.u32 %v1983, 16
    %v2005 = vor.u32 %v2002, %v2003
    %v2007 = vshrl.u32 %v1984, 16
    %v2009 = vrot.slane %v2007, 7
    %v2010 = vshll.u32 %v1984, 16
    %v2012 = vor.u32 %v2009, %v2010
    %v2013 = vsel %vm203, %v2002, %v2012
    %v2015 = vshrl.u32 %v1985, 16
    %v2017 = vrot.slane %v2015, 7
    %v2018 = vshll.u32 %v1985, 16
    %v2020 = vor.u32 %v2017, %v2018
    %v2021 = vsel %vm203, %v2009, %v2020
    %v2023 = vshrl.u32 %v1986, 16
    %v2025 = vrot.slane %v2023, 7
    %v2026 = vshll.u32 %v1986, 16
    %v2028 = vor.u32 %v2025, %v2026
    %v2029 = vsel %vm203, %v2017, %v2028
    %v2031 = vshrl.u32 %v1987, 16
    %v2033 = vrot.slane %v2031, 7
    %v2034 = vshll.u32 %v1987, 16
    %v2036 = vor.u32 %v2033, %v2034
    %v2037 = vsel %vm203, %v2025, %v2036
    %v2039 = vshrl.u32 %v1988, 16
    %v2041 = vrot.slane %v2039, 7
    %v2042 = vshll.u32 %v1988, 16
    %v2044 = vor.u32 %v2041, %v2042
    %v2045 = vsel %vm203, %v2033, %v2044
    %v2047 = vshrl.u32 %v1989, 16
    %v2049 = vrot.slane %v2047, 7
    %v2050 = vshll.u32 %v1989, 16
    %v2052 = vor.u32 %v2049, %v2050
    %v2053 = vsel %vm203, %v2041, %v2052
    %v2055 = vshrl.u32 %v1990, 16
    %v2057 = vrot.slane %v2055, 7
    %v2058 = vshll.u32 %v1990, 16
    %v2060 = vor.u32 %v2057, %v2058
    %v2061 = vsel %vm203, %v2049, %v2060
    %v2063 = vshrl.u32 %v1991, 16
    %v2065 = vrot.slane %v2063, 7
    %v2066 = vshll.u32 %v1991, 16
    %v2068 = vor.u32 %v2065, %v2066
    %v2069 = vsel %vm203, %v2057, %v2068
    %v2071 = vshrl.u32 %v1992, 16
    %v2073 = vrot.slane %v2071, 7
    %v2074 = vshll.u32 %v1992, 16
    %v2076 = vor.u32 %v2073, %v2074
    %v2077 = vsel %vm203, %v2065, %v2076
    %v2079 = vshrl.u32 %v1993, 16
    %v2081 = vrot.slane %v2079, 7
    %v2082 = vshll.u32 %v1993, 16
    %v2084 = vor.u32 %v2081, %v2082
    %v2085 = vsel %vm203, %v2073, %v2084
    %v2087 = vshrl.u32 %v1994, 16
    %v2089 = vrot.slane %v2087, 7
    %v2090 = vshll.u32 %v1994, 16
    %v2092 = vor.u32 %v2089, %v2090
    %v2093 = vsel %vm203, %v2081, %v2092
    %v2095 = vshrl.u32 %v1995, 16
    %v2097 = vrot.slane %v2095, 7
    %v2098 = vshll.u32 %v1995, 16
    %v2100 = vor.u32 %v2097, %v2098
    %v2101 = vsel %vm203, %v2089, %v2100
    %v2103 = vshrl.u32 %v1996, 16
    %v2105 = vrot.slane %v2103, 7
    %v2106 = vshll.u32 %v1996, 16
    %v2108 = vor.u32 %v2105, %v2106
    %v2109 = vsel %vm203, %v2097, %v2108
    %v2111 = vshrl.u32 %v1997, 16
    %v2113 = vrot.slane %v2111, 7
    %v2114 = vshll.u32 %v1997, 16
    %v2116 = vor.u32 %v2113, %v2114
    %v2117 = vsel %vm203, %v2105, %v2116
    %v2119 = vshrl.u32 %v1998, 16
    %v2121 = vrot.slane %v2119, 7
    %v2122 = vshll.u32 %v1998, 16
    %v2124 = vor.u32 %v2121, %v2122
    %v2125 = vsel %vm203, %v2113, %v2124
    %v2143 = vsel %vm349, 0, %v2005
    %v2144 = vsel %vm349, %v2121, 0
    %v2145 = vmul.bf16 %v2143, %v983
    %v2146 = vmul.bf16 %v2013, %v984
    %v2147 = vmul.bf16 %v2021, %v985
    %v2148 = vmul.bf16 %v2029, %v986
    %v2149 = vmul.bf16 %v2037, %v987
    %v2150 = vmul.bf16 %v2045, %v988
    %v2151 = vmul.bf16 %v2053, %v989
    %v2152 = vmul.bf16 %v2061, %v990
    %v2153 = vmul.bf16 %v2069, %v991
    %v2154 = vmul.bf16 %v2077, %v992
    %v2155 = vmul.bf16 %v2085, %v993
    %v2156 = vmul.bf16 %v2093, %v994
    %v2157 = vmul.bf16 %v2101, %v995
    %v2158 = vmul.bf16 %v2109, %v996
    %v2159 = vmul.bf16 %v2117, %v997
    %v2160 = vmul.bf16 %v2125, %v998
    %v2161 = vmul.bf16 %v2144, %v999
    %v2162 = vmul.bf16 %v2143, %v1129
    %v2163 = vmul.bf16 %v2013, %v1130
    %v2164 = vmul.bf16 %v2021, %v1131
    %v2165 = vmul.bf16 %v2029, %v1132
    %v2166 = vmul.bf16 %v2037, %v1133
    %v2167 = vmul.bf16 %v2045, %v1134
    %v2168 = vmul.bf16 %v2053, %v1135
    %v2169 = vmul.bf16 %v2061, %v1136
    %v2170 = vmul.bf16 %v2069, %v1137
    %v2171 = vmul.bf16 %v2077, %v1138
    %v2172 = vmul.bf16 %v2085, %v1139
    %v2173 = vmul.bf16 %v2093, %v1140
    %v2174 = vmul.bf16 %v2101, %v1141
    %v2175 = vmul.bf16 %v2109, %v1142
    %v2176 = vmul.bf16 %v2117, %v1143
    %v2177 = vmul.bf16 %v2125, %v1144
    %v2178 = vmul.bf16 %v2144, %v1145
    %v2180 = vshll.u32 %v2143, 16
    %v2182 = vrot.slane %v2180, 1
    %v2183 = vsel %vm1164, %v1171, %v2182
    %v2184 = vshrl.u32 %v2143, 16
    %v2186 = vor.u32 %v2184, %v2182
    %v2188 = vshll.u32 %v2013, 16
    %v2190 = vrot.slane %v2188, 1
    %v2191 = vsel %vm1164, %v2186, %v2190
    %v2192 = vshrl.u32 %v2013, 16
    %v2194 = vor.u32 %v2192, %v2190
    %v2196 = vshll.u32 %v2021, 16
    %v2198 = vrot.slane %v2196, 1
    %v2199 = vsel %vm1164, %v2194, %v2198
    %v2200 = vshrl.u32 %v2021, 16
    %v2202 = vor.u32 %v2200, %v2198
    %v2204 = vshll.u32 %v2029, 16
    %v2206 = vrot.slane %v2204, 1
    %v2207 = vsel %vm1164, %v2202, %v2206
    %v2208 = vshrl.u32 %v2029, 16
    %v2210 = vor.u32 %v2208, %v2206
    %v2212 = vshll.u32 %v2037, 16
    %v2214 = vrot.slane %v2212, 1
    %v2215 = vsel %vm1164, %v2210, %v2214
    %v2216 = vshrl.u32 %v2037, 16
    %v2218 = vor.u32 %v2216, %v2214
    %v2220 = vshll.u32 %v2045, 16
    %v2222 = vrot.slane %v2220, 1
    %v2223 = vsel %vm1164, %v2218, %v2222
    %v2224 = vshrl.u32 %v2045, 16
    %v2226 = vor.u32 %v2224, %v2222
    %v2228 = vshll.u32 %v2053, 16
    %v2230 = vrot.slane %v2228, 1
    %v2231 = vsel %vm1164, %v2226, %v2230
    %v2232 = vshrl.u32 %v2053, 16
    %v2234 = vor.u32 %v2232, %v2230
    %v2236 = vshll.u32 %v2061, 16
    %v2238 = vrot.slane %v2236, 1
    %v2239 = vsel %vm1164, %v2234, %v2238
    %v2240 = vshrl.u32 %v2061, 16
    %v2242 = vor.u32 %v2240, %v2238
    %v2244 = vshll.u32 %v2069, 16
    %v2246 = vrot.slane %v2244, 1
    %v2247 = vsel %vm1164, %v2242, %v2246
    %v2248 = vshrl.u32 %v2069, 16
    %v2250 = vor.u32 %v2248, %v2246
    %v2252 = vshll.u32 %v2077, 16
    %v2254 = vrot.slane %v2252, 1
    %v2255 = vsel %vm1164, %v2250, %v2254
    %v2256 = vshrl.u32 %v2077, 16
    %v2258 = vor.u32 %v2256, %v2254
    %v2260 = vshll.u32 %v2085, 16
    %v2262 = vrot.slane %v2260, 1
    %v2263 = vsel %vm1164, %v2258, %v2262
    %v2264 = vshrl.u32 %v2085, 16
    %v2266 = vor.u32 %v2264, %v2262
    %v2268 = vshll.u32 %v2093, 16
    %v2270 = vrot.slane %v2268, 1
    %v2271 = vsel %vm1164, %v2266, %v2270
    %v2272 = vshrl.u32 %v2093, 16
    %v2274 = vor.u32 %v2272, %v2270
    %v2276 = vshll.u32 %v2101, 16
    %v2278 = vrot.slane %v2276, 1
    %v2279 = vsel %vm1164, %v2274, %v2278
    %v2280 = vshrl.u32 %v2101, 16
    %v2282 = vor.u32 %v2280, %v2278
    %v2284 = vshll.u32 %v2109, 16
    %v2286 = vrot.slane %v2284, 1
    %v2287 = vsel %vm1164, %v2282, %v2286
    %v2288 = vshrl.u32 %v2109, 16
    %v2290 = vor.u32 %v2288, %v2286
    %v2292 = vshll.u32 %v2117, 16
    %v2294 = vrot.slane %v2292, 1
    %v2295 = vsel %vm1164, %v2290, %v2294
    %v2296 = vshrl.u32 %v2117, 16
    %v2298 = vor.u32 %v2296, %v2294
    %v2300 = vshll.u32 %v2125, 16
    %v2302 = vrot.slane %v2300, 1
    %v2303 = vsel %vm1164, %v2298, %v2302
    %2304 = vrot.lane.b32.xlu0 %v2183, 4
    %v2305 = vpop.permute.xlu0 %2304
    %2306 = vrot.lane.b32.xlu0 %v2191, 4
    %v2307 = vpop.permute.xlu0 %2306
    %2308 = vrot.lane.b32.xlu0 %v2199, 4
    %v2309 = vpop.permute.xlu0 %2308
    %2310 = vrot.lane.b32.xlu0 %v2207, 4
    %v2311 = vpop.permute.xlu0 %2310
    %2312 = vrot.lane.b32.xlu0 %v2215, 4
    %v2313 = vpop.permute.xlu0 %2312
    %2314 = vrot.lane.b32.xlu0 %v2223, 4
    %v2315 = vpop.permute.xlu0 %2314
    %2316 = vrot.lane.b32.xlu0 %v2231, 4
    %v2317 = vpop.permute.xlu0 %2316
    %2318 = vrot.lane.b32.xlu0 %v2239, 4
    %v2319 = vpop.permute.xlu0 %2318
    %2320 = vrot.lane.b32.xlu0 %v2247, 4
    %v2321 = vpop.permute.xlu0 %2320
    %2322 = vrot.lane.b32.xlu0 %v2255, 4
    %v2323 = vpop.permute.xlu0 %2322
    %2324 = vrot.lane.b32.xlu0 %v2263, 4
    %v2325 = vpop.permute.xlu0 %2324
    %2326 = vrot.lane.b32.xlu0 %v2271, 4
    %v2327 = vpop.permute.xlu0 %2326
    %2328 = vrot.lane.b32.xlu0 %v2279, 4
    %v2329 = vpop.permute.xlu0 %2328
    %2330 = vrot.lane.b32.xlu0 %v2287, 4
    %v2331 = vpop.permute.xlu0 %2330
    %2332 = vrot.lane.b32.xlu0 %v2295, 4
    %v2333 = vpop.permute.xlu0 %2332
    %2334 = vrot.lane.b32.xlu0 %v2303, 4
    %v2335 = vpop.permute.xlu0 %2334
    %v2352 = vrot.slane %v2145, 1
    %v2353 = vsel %vm1346, %v1347, %v2352
    %v2354 = vrot.slane %v2146, 1
    %v2355 = vsel %vm1346, %v2352, %v2354
    %v2356 = vrot.slane %v2147, 1
    %v2357 = vsel %vm1346, %v2354, %v2356
    %v2358 = vrot.slane %v2148, 1
    %v2359 = vsel %vm1346, %v2356, %v2358
    %v2360 = vrot.slane %v2149, 1
    %v2361 = vsel %vm1346, %v2358, %v2360
    %v2362 = vrot.slane %v2150, 1
    %v2363 = vsel %vm1346, %v2360, %v2362
    %v2364 = vrot.slane %v2151, 1
    %v2365 = vsel %vm1346, %v2362, %v2364
    %v2366 = vrot.slane %v2152, 1
    %v2367 = vsel %vm1346, %v2364, %v2366
    %v2368 = vrot.slane %v2153, 1
    %v2369 = vsel %vm1346, %v2366, %v2368
    %v2370 = vrot.slane %v2154, 1
    %v2371 = vsel %vm1346, %v2368, %v2370
    %v2372 = vrot.slane %v2155, 1
    %v2373 = vsel %vm1346, %v2370, %v2372
    %v2374 = vrot.slane %v2156, 1
    %v2375 = vsel %vm1346, %v2372, %v2374
    %v2376 = vrot.slane %v2157, 1
    %v2377 = vsel %vm1346, %v2374, %v2376
    %v2378 = vrot.slane %v2158, 1
    %v2379 = vsel %vm1346, %v2376, %v2378
    %v2380 = vrot.slane %v2159, 1
    %v2381 = vsel %vm1346, %v2378, %v2380
    %v2382 = vrot.slane %v2160, 1
    %v2383 = vsel %vm1346, %v2380, %v2382
    %2384 = vrot.lane.b32.xlu0 %v2353, 8
    %v2385 = vpop.permute.xlu0 %2384
    %2386 = vrot.lane.b32.xlu0 %v2355, 8
    %v2387 = vpop.permute.xlu0 %2386
    %2388 = vrot.lane.b32.xlu0 %v2357, 8
    %v2389 = vpop.permute.xlu0 %2388
    %2390 = vrot.lane.b32.xlu0 %v2359, 8
    %v2391 = vpop.permute.xlu0 %2390
    %2392 = vrot.lane.b32.xlu0 %v2361, 8
    %v2393 = vpop.permute.xlu0 %2392
    %2394 = vrot.lane.b32.xlu0 %v2363, 8
    %v2395 = vpop.permute.xlu0 %2394
    %2396 = vrot.lane.b32.xlu0 %v2365, 8
    %v2397 = vpop.permute.xlu0 %2396
    %2398 = vrot.lane.b32.xlu0 %v2367, 8
    %v2399 = vpop.permute.xlu0 %2398
    %2400 = vrot.lane.b32.xlu0 %v2369, 8
    %v2401 = vpop.permute.xlu0 %2400
    %2402 = vrot.lane.b32.xlu0 %v2371, 8
    %v2403 = vpop.permute.xlu0 %2402
    %2404 = vrot.lane.b32.xlu0 %v2373, 8
    %v2405 = vpop.permute.xlu0 %2404
    %2406 = vrot.lane.b32.xlu0 %v2375, 8
    %v2407 = vpop.permute.xlu0 %2406
    %2408 = vrot.lane.b32.xlu0 %v2377, 8
    %v2409 = vpop.permute.xlu0 %2408
    %2410 = vrot.lane.b32.xlu0 %v2379, 8
    %v2411 = vpop.permute.xlu0 %2410
    %2412 = vrot.lane.b32.xlu0 %v2381, 8
    %v2413 = vpop.permute.xlu0 %2412
    %2414 = vrot.lane.b32.xlu0 %v2383, 8
    %v2415 = vpop.permute.xlu0 %2414
    %2432 = vrot.lane.b32.xlu0 %v2162, 12
    %v2433 = vpop.permute.xlu0 %2432
    %2434 = vrot.lane.b32.xlu0 %v2163, 12
    %v2435 = vpop.permute.xlu0 %2434
    %2436 = vrot.lane.b32.xlu0 %v2164, 12
    %v2437 = vpop.permute.xlu0 %2436
    %2438 = vrot.lane.b32.xlu0 %v2165, 12
    %v2439 = vpop.permute.xlu0 %2438
    %2440 = vrot.lane.b32.xlu0 %v2166, 12
    %v2441 = vpop.permute.xlu0 %2440
    %2442 = vrot.lane.b32.xlu0 %v2167, 12
    %v2443 = vpop.permute.xlu0 %2442
    %2444 = vrot.lane.b32.xlu0 %v2168, 12
    %v2445 = vpop.permute.xlu0 %2444
    %2446 = vrot.lane.b32.xlu0 %v2169, 12
    %v2447 = vpop.permute.xlu0 %2446
    %2448 = vrot.lane.b32.xlu0 %v2170, 12
    %v2449 = vpop.permute.xlu0 %2448
    %2450 = vrot.lane.b32.xlu0 %v2171, 12
    %v2451 = vpop.permute.xlu0 %2450
    %2452 = vrot.lane.b32.xlu0 %v2172, 12
    %v2453 = vpop.permute.xlu0 %2452
    %2454 = vrot.lane.b32.xlu0 %v2173, 12
    %v2455 = vpop.permute.xlu0 %2454
    %2456 = vrot.lane.b32.xlu0 %v2174, 12
    %v2457 = vpop.permute.xlu0 %2456
    %2458 = vrot.lane.b32.xlu0 %v2175, 12
    %v2459 = vpop.permute.xlu0 %2458
    %2460 = vrot.lane.b32.xlu0 %v2176, 12
    %v2461 = vpop.permute.xlu0 %2460
    %2462 = vrot.lane.b32.xlu0 %v2177, 12
    %v2463 = vpop.permute.xlu0 %2462
    %v2464 = vshrl.u32 %v2125, 16
    %v2466 = vor.u32 %v2464, %v2302
    %v2468 = vshll.u32 %v2144, 16
    %v2470 = vrot.slane %v2468, 1
    %v2471 = vsel %vm1164, %v2466, %v2470
    %2472 = vrot.lane.b32.xlu0 %v2191, 16
    %v2473 = vpop.permute.xlu0 %2472
    %2474 = vrot.lane.b32.xlu0 %v2199, 16
    %v2475 = vpop.permute.xlu0 %2474
    %2476 = vrot.lane.b32.xlu0 %v2207, 16
    %v2477 = vpop.permute.xlu0 %2476
    %2478 = vrot.lane.b32.xlu0 %v2215, 16
    %v2479 = vpop.permute.xlu0 %2478
    %2480 = vrot.lane.b32.xlu0 %v2223, 16
    %v2481 = vpop.permute.xlu0 %2480
    %2482 = vrot.lane.b32.xlu0 %v2231, 16
    %v2483 = vpop.permute.xlu0 %2482
    %2484 = vrot.lane.b32.xlu0 %v2239, 16
    %v2485 = vpop.permute.xlu0 %2484
    %2486 = vrot.lane.b32.xlu0 %v2247, 16
    %v2487 = vpop.permute.xlu0 %2486
    %2488 = vrot.lane.b32.xlu0 %v2255, 16
    %v2489 = vpop.permute.xlu0 %2488
    %2490 = vrot.lane.b32.xlu0 %v2263, 16
    %v2491 = vpop.permute.xlu0 %2490
    %2492 = vrot.lane.b32.xlu0 %v2271, 16
    %v2493 = vpop.permute.xlu0 %2492
    %2494 = vrot.lane.b32.xlu0 %v2279, 16
    %v2495 = vpop.permute.xlu0 %2494
    %2496 = vrot.lane.b32.xlu0 %v2287, 16
    %v2497 = vpop.permute.xlu0 %2496
    %2498 = vrot.lane.b32.xlu0 %v2295, 16
    %v2499 = vpop.permute.xlu0 %2498
    %2500 = vrot.lane.b32.xlu0 %v2303, 16
    %v2501 = vpop.permute.xlu0 %2500
    %2502 = vrot.lane.b32.xlu0 %v2471, 16
    %v2503 = vpop.permute.xlu0 %2502
    %v2505 = vrot.slane %v2161, 1
    %v2506 = vsel %vm1346, %v2382, %v2505
    %2507 = vrot.lane.b32.xlu0 %v2355, 20
    %v2508 = vpop.permute.xlu0 %2507
    %2509 = vrot.lane.b32.xlu0 %v2357, 20
    %v2510 = vpop.permute.xlu0 %2509
    %2511 = vrot.lane.b32.xlu0 %v2359, 20
    %v2512 = vpop.permute.xlu0 %2511
    %2513 = vrot.lane.b32.xlu0 %v2361, 20
    %v2514 = vpop.permute.xlu0 %2513
    %2515 = vrot.lane.b32.xlu0 %v2363, 20
    %v2516 = vpop.permute.xlu0 %2515
    %2517 = vrot.lane.b32.xlu0 %v2365, 20
    %v2518 = vpop.permute.xlu0 %2517
    %2519 = vrot.lane.b32.xlu0 %v2367, 20
    %v2520 = vpop.permute.xlu0 %2519
    %2521 = vrot.lane.b32.xlu0 %v2369, 20
    %v2522 = vpop.permute.xlu0 %2521
    %2523 = vrot.lane.b32.xlu0 %v2371, 20
    %v2524 = vpop.permute.xlu0 %2523
    %2525 = vrot.lane.b32.xlu0 %v2373, 20
    %v2526 = vpop.permute.xlu0 %2525
    %2527 = vrot.lane.b32.xlu0 %v2375, 20
    %v2528 = vpop.permute.xlu0 %2527
    %2529 = vrot.lane.b32.xlu0 %v2377, 20
    %v2530 = vpop.permute.xlu0 %2529
    %2531 = vrot.lane.b32.xlu0 %v2379, 20
    %v2532 = vpop.permute.xlu0 %2531
    %2533 = vrot.lane.b32.xlu0 %v2381, 20
    %v2534 = vpop.permute.xlu0 %2533
    %2535 = vrot.lane.b32.xlu0 %v2383, 20
    %v2536 = vpop.permute.xlu0 %2535
    %2537 = vrot.lane.b32.xlu0 %v2506, 20
    %v2538 = vpop.permute.xlu0 %2537
    %2540 = vrot.lane.b32.xlu0 %v2163, 24
    %v2541 = vpop.permute.xlu0 %2540
    %2542 = vrot.lane.b32.xlu0 %v2164, 24
    %v2543 = vpop.permute.xlu0 %2542
    %2544 = vrot.lane.b32.xlu0 %v2165, 24
    %v2545 = vpop.permute.xlu0 %2544
    %2546 = vrot.lane.b32.xlu0 %v2166, 24
    %v2547 = vpop.permute.xlu0 %2546
    %2548 = vrot.lane.b32.xlu0 %v2167, 24
    %v2549 = vpop.permute.xlu0 %2548
    %2550 = vrot.lane.b32.xlu0 %v2168, 24
    %v2551 = vpop.permute.xlu0 %2550
    %2552 = vrot.lane.b32.xlu0 %v2169, 24
    %v2553 = vpop.permute.xlu0 %2552
    %2554 = vrot.lane.b32.xlu0 %v2170, 24
    %v2555 = vpop.permute.xlu0 %2554
    %2556 = vrot.lane.b32.xlu0 %v2171, 24
    %v2557 = vpop.permute.xlu0 %2556
    %2558 = vrot.lane.b32.xlu0 %v2172, 24
    %v2559 = vpop.permute.xlu0 %2558
    %2560 = vrot.lane.b32.xlu0 %v2173, 24
    %v2561 = vpop.permute.xlu0 %2560
    %2562 = vrot.lane.b32.xlu0 %v2174, 24
    %v2563 = vpop.permute.xlu0 %2562
    %2564 = vrot.lane.b32.xlu0 %v2175, 24
    %v2565 = vpop.permute.xlu0 %2564
    %2566 = vrot.lane.b32.xlu0 %v2176, 24
    %v2567 = vpop.permute.xlu0 %2566
    %2568 = vrot.lane.b32.xlu0 %v2177, 24
    %v2569 = vpop.permute.xlu0 %2568
    %2570 = vrot.lane.b32.xlu0 %v2178, 24
    %v2571 = vpop.permute.xlu0 %2570
    %v2572 = vshrl.u32 %v2144, 16
    %v2574 = vor.u32 %v2572, %v2470
    %v2575 = vsel %vm1164, %v2574, %v1170
    %2576 = vrot.lane.b32.xlu0 %v2199, 28
    %v2577 = vpop.permute.xlu0 %2576
    %2578 = vrot.lane.b32.xlu0 %v2207, 28
    %v2579 = vpop.permute.xlu0 %2578
    %2580 = vrot.lane.b32.xlu0 %v2215, 28
    %v2581 = vpop.permute.xlu0 %2580
    %2582 = vrot.lane.b32.xlu0 %v2223, 28
    %v2583 = vpop.permute.xlu0 %2582
    %2584 = vrot.lane.b32.xlu0 %v2231, 28
    %v2585 = vpop.permute.xlu0 %2584
    %2586 = vrot.lane.b32.xlu0 %v2239, 28
    %v2587 = vpop.permute.xlu0 %2586
    %2588 = vrot.lane.b32.xlu0 %v2247, 28
    %v2589 = vpop.permute.xlu0 %2588
    %2590 = vrot.lane.b32.xlu0 %v2255, 28
    %v2591 = vpop.permute.xlu0 %2590
    %2592 = vrot.lane.b32.xlu0 %v2263, 28
    %v2593 = vpop.permute.xlu0 %2592
    %2594 = vrot.lane.b32.xlu0 %v2271, 28
    %v2595 = vpop.permute.xlu0 %2594
    %2596 = vrot.lane.b32.xlu0 %v2279, 28
    %v2597 = vpop.permute.xlu0 %2596
    %2598 = vrot.lane.b32.xlu0 %v2287, 28
    %v2599 = vpop.permute.xlu0 %2598
    %2600 = vrot.lane.b32.xlu0 %v2295, 28
    %v2601 = vpop.permute.xlu0 %2600
    %2602 = vrot.lane.b32.xlu0 %v2303, 28
    %v2603 = vpop.permute.xlu0 %2602
    %2604 = vrot.lane.b32.xlu0 %v2471, 28
    %v2605 = vpop.permute.xlu0 %2604
    %2606 = vrot.lane.b32.xlu0 %v2575, 28
    %v2607 = vpop.permute.xlu0 %2606
    %v2608 = vsel %vm1346, %v2505, %v1605
    %2609 = vrot.lane.b32.xlu0 %v2357, 32
    %v2610 = vpop.permute.xlu0 %2609
    %2611 = vrot.lane.b32.xlu0 %v2359, 32
    %v2612 = vpop.permute.xlu0 %2611
    %2613 = vrot.lane.b32.xlu0 %v2361, 32
    %v2614 = vpop.permute.xlu0 %2613
    %2615 = vrot.lane.b32.xlu0 %v2363, 32
    %v2616 = vpop.permute.xlu0 %2615
    %2617 = vrot.lane.b32.xlu0 %v2365, 32
    %v2618 = vpop.permute.xlu0 %2617
    %2619 = vrot.lane.b32.xlu0 %v2367, 32
    %v2620 = vpop.permute.xlu0 %2619
    %2621 = vrot.lane.b32.xlu0 %v2369, 32
    %v2622 = vpop.permute.xlu0 %2621
    %2623 = vrot.lane.b32.xlu0 %v2371, 32
    %v2624 = vpop.permute.xlu0 %2623
    %2625 = vrot.lane.b32.xlu0 %v2373, 32
    %v2626 = vpop.permute.xlu0 %2625
    %2627 = vrot.lane.b32.xlu0 %v2375, 32
    %v2628 = vpop.permute.xlu0 %2627
    %2629 = vrot.lane.b32.xlu0 %v2377, 32
    %v2630 = vpop.permute.xlu0 %2629
    %2631 = vrot.lane.b32.xlu0 %v2379, 32
    %v2632 = vpop.permute.xlu0 %2631
    %2633 = vrot.lane.b32.xlu0 %v2381, 32
    %v2634 = vpop.permute.xlu0 %2633
    %2635 = vrot.lane.b32.xlu0 %v2383, 32
    %v2636 = vpop.permute.xlu0 %2635
    %2637 = vrot.lane.b32.xlu0 %v2506, 32
    %v2638 = vpop.permute.xlu0 %2637
    %2639 = vrot.lane.b32.xlu0 %v2608, 32
    %v2640 = vpop.permute.xlu0 %2639
    %v2642 = vsel %vm1639, %v1146, %v2305
    %v2645 = vsel %vm1639, %v2162, %v2307
    %v2648 = vsel %vm1639, %v2163, %v2309
    %v2651 = vsel %vm1639, %v2164, %v2311
    %v2654 = vsel %vm1639, %v2165, %v2313
    %v2657 = vsel %vm1639, %v2166, %v2315
    %v2660 = vsel %vm1639, %v2167, %v2317
    %v2663 = vsel %vm1639, %v2168, %v2319
    %v2666 = vsel %vm1639, %v2169, %v2321
    %v2669 = vsel %vm1639, %v2170, %v2323
    %v2672 = vsel %vm1639, %v2171, %v2325
    %v2675 = vsel %vm1639, %v2172, %v2327
    %v2678 = vsel %vm1639, %v2173, %v2329
    %v2681 = vsel %vm1639, %v2174, %v2331
    %v2684 = vsel %vm1639, %v2175, %v2333
    %v2687 = vsel %vm1639, %v2176, %v2335
    %v2689 = vsel %vm1688, %v2642, %v2385
    %v2691 = vsel %vm1688, %v2645, %v2387
    %v2693 = vsel %vm1688, %v2648, %v2389
    %v2695 = vsel %vm1688, %v2651, %v2391
    %v2697 = vsel %vm1688, %v2654, %v2393
    %v2699 = vsel %vm1688, %v2657, %v2395
    %v2701 = vsel %vm1688, %v2660, %v2397
    %v2703 = vsel %vm1688, %v2663, %v2399
    %v2705 = vsel %vm1688, %v2666, %v2401
    %v2707 = vsel %vm1688, %v2669, %v2403
    %v2709 = vsel %vm1688, %v2672, %v2405
    %v2711 = vsel %vm1688, %v2675, %v2407
    %v2713 = vsel %vm1688, %v2678, %v2409
    %v2715 = vsel %vm1688, %v2681, %v2411
    %v2717 = vsel %vm1688, %v2684, %v2413
    %v2719 = vsel %vm1688, %v2687, %v2415
    %v2721 = vsel %vm1721, %v2689, %v2433
    %v2723 = vsel %vm1721, %v2691, %v2435
    %v2725 = vsel %vm1721, %v2693, %v2437
    %v2727 = vsel %vm1721, %v2695, %v2439
    %v2729 = vsel %vm1721, %v2697, %v2441
    %v2731 = vsel %vm1721, %v2699, %v2443
    %v2733 = vsel %vm1721, %v2701, %v2445
    %v2735 = vsel %vm1721, %v2703, %v2447
    %v2737 = vsel %vm1721, %v2705, %v2449
    %v2739 = vsel %vm1721, %v2707, %v2451
    %v2741 = vsel %vm1721, %v2709, %v2453
    %v2743 = vsel %vm1721, %v2711, %v2455
    %v2745 = vsel %vm1721, %v2713, %v2457
    %v2747 = vsel %vm1721, %v2715, %v2459
    %v2749 = vsel %vm1721, %v2717, %v2461
    %v2751 = vsel %vm1721, %v2719, %v2463
    %v2753 = vsel %vm1754, %v2721, %v2473
    %v2755 = vsel %vm1754, %v2723, %v2475
    %v2757 = vsel %vm1754, %v2725, %v2477
    %v2759 = vsel %vm1754, %v2727, %v2479
    %v2761 = vsel %vm1754, %v2729, %v2481
    %v2763 = vsel %vm1754, %v2731, %v2483
    %v2765 = vsel %vm1754, %v2733, %v2485
    %v2767 = vsel %vm1754, %v2735, %v2487
    %v2769 = vsel %vm1754, %v2737, %v2489
    %v2771 = vsel %vm1754, %v2739, %v2491
    %v2773 = vsel %vm1754, %v2741, %v2493
    %v2775 = vsel %vm1754, %v2743, %v2495
    %v2777 = vsel %vm1754, %v2745, %v2497
    %v2779 = vsel %vm1754, %v2747, %v2499
    %v2781 = vsel %vm1754, %v2749, %v2501
    %v2783 = vsel %vm1754, %v2751, %v2503
    %v2785 = vsel %vm1787, %v2753, %v2508
    %v2787 = vsel %vm1787, %v2755, %v2510
    %v2789 = vsel %vm1787, %v2757, %v2512
    %v2791 = vsel %vm1787, %v2759, %v2514
    %v2793 = vsel %vm1787, %v2761, %v2516
    %v2795 = vsel %vm1787, %v2763, %v2518
    %v2797 = vsel %vm1787, %v2765, %v2520
    %v2799 = vsel %vm1787, %v2767, %v2522
    %v2801 = vsel %vm1787, %v2769, %v2524
    %v2803 = vsel %vm1787, %v2771, %v2526
    %v2805 = vsel %vm1787, %v2773, %v2528
    %v2807 = vsel %vm1787, %v2775, %v2530
    %v2809 = vsel %vm1787, %v2777, %v2532
    %v2811 = vsel %vm1787, %v2779, %v2534
    %v2813 = vsel %vm1787, %v2781, %v2536
    %v2815 = vsel %vm1787, %v2783, %v2538
    %v2817 = vsel %vm1820, %v2785, %v2541
    %v2819 = vsel %vm1820, %v2787, %v2543
    %v2821 = vsel %vm1820, %v2789, %v2545
    %v2823 = vsel %vm1820, %v2791, %v2547
    %v2825 = vsel %vm1820, %v2793, %v2549
    %v2827 = vsel %vm1820, %v2795, %v2551
    %v2829 = vsel %vm1820, %v2797, %v2553
    %v2831 = vsel %vm1820, %v2799, %v2555
    %v2833 = vsel %vm1820, %v2801, %v2557
    %v2835 = vsel %vm1820, %v2803, %v2559
    %v2837 = vsel %vm1820, %v2805, %v2561
    %v2839 = vsel %vm1820, %v2807, %v2563
    %v2841 = vsel %vm1820, %v2809, %v2565
    %v2843 = vsel %vm1820, %v2811, %v2567
    %v2845 = vsel %vm1820, %v2813, %v2569
    %v2847 = vsel %vm1820, %v2815, %v2571
    %v2849 = vsel %vm1853, %v2817, %v2577
    %v2851 = vsel %vm1853, %v2819, %v2579
    %v2853 = vsel %vm1853, %v2821, %v2581
    %v2855 = vsel %vm1853, %v2823, %v2583
    %v2857 = vsel %vm1853, %v2825, %v2585
    %v2859 = vsel %vm1853, %v2827, %v2587
    %v2861 = vsel %vm1853, %v2829, %v2589
    %v2863 = vsel %vm1853, %v2831, %v2591
    %v2865 = vsel %vm1853, %v2833, %v2593
    %v2867 = vsel %vm1853, %v2835, %v2595
    %v2869 = vsel %vm1853, %v2837, %v2597
    %v2871 = vsel %vm1853, %v2839, %v2599
    %v2873 = vsel %vm1853, %v2841, %v2601
    %v2875 = vsel %vm1853, %v2843, %v2603
    %v2877 = vsel %vm1853, %v2845, %v2605
    %v2879 = vsel %vm1853, %v2847, %v2607
    %v2881 = vsel %vm1886, %v2849, %v2610
    %v2883 = vsel %vm1886, %v2851, %v2612
    %v2885 = vsel %vm1886, %v2853, %v2614
    %v2887 = vsel %vm1886, %v2855, %v2616
    %v2889 = vsel %vm1886, %v2857, %v2618
    %v2891 = vsel %vm1886, %v2859, %v2620
    %v2893 = vsel %vm1886, %v2861, %v2622
    %v2895 = vsel %vm1886, %v2863, %v2624
    %v2897 = vsel %vm1886, %v2865, %v2626
    %v2899 = vsel %vm1886, %v2867, %v2628
    %v2901 = vsel %vm1886, %v2869, %v2630
    %v2903 = vsel %vm1886, %v2871, %v2632
    %v2905 = vsel %vm1886, %v2873, %v2634
    %v2907 = vsel %vm1886, %v2875, %v2636
    %v2909 = vsel %vm1886, %v2877, %v2638
    %v2911 = vsel %vm1886, %v2879, %v2640
    %v2912 = vld [vmem:[#allocation5] sm:$0xf]
    %v2913 = vld [vmem:[#allocation5 + $0x4] sm:$0xf]
    %v2914 = vld [vmem:[#allocation5 + $0x8] sm:$0xf]
    %v2915 = vld [vmem:[#allocation5 + $0xc] sm:$0xf]
    %v2916 = vld [vmem:[#allocation5 + $0x10] sm:$0x3]
    %v2917 = vld [vmem:[#allocation7] sm:$0x1]
    %v2919 = vlaneseq
    %v2920 = vshrl.u32 %v2919, 7
    %v2921 = vsub.s32 0, %v2920
    %v2922 = vrot.slane %v2917, %v2921
    %v2929 = vunpack.c.l.b16 %v2912
    %v2930 = vunpack.c.l.b16 %v2913
    %v2931 = vunpack.c.l.b16 %v2914
    %v2932 = vunpack.c.l.b16 %v2915
    %v2933 = vunpack.c.l.b16 %v2916
    %v2934 = vpack.c.b16 %v2930, %v2929
    %v2935 = vpack.c.b16 %v2932, %v2931
    %v2936 = vpack.c.b16 %v2933, %v2933
    %vm2939 = vcmask 293888
    %v2940 = vsel %vm2939, %v1888, 0
    %v2942 = vsel %vm2939, %v1890, 0
    %v2944 = vsel %vm2939, %v1892, 0
    %v2946 = vsel %vm2939, %v1894, 0
    %v2948 = vsel %vm2939, %v1896, 0
    %v2950 = vsel %vm2939, %v1898, 0
    %v2952 = vsel %vm2939, %v1900, 0
    %v2954 = vsel %vm2939, %v1902, 0
    %v2956 = vsel %vm2939, %v1904, 0
    %v2958 = vsel %vm2939, %v1906, 0
    %v2960 = vsel %vm2939, %v1908, 0
    %v2962 = vsel %vm2939, %v1910, 0
    %v2964 = vsel %vm2939, %v1912, 0
    %v2966 = vsel %vm2939, %v1914, 0
    %v2968 = vsel %vm2939, %v1916, 0
    %v2970 = vsel %vm2939, %v1918, 0
    %v2972 = vsel %vm2939, %v2881, 0
    %v2974 = vsel %vm2939, %v2883, 0
    %v2976 = vsel %vm2939, %v2885, 0
    %v2978 = vsel %vm2939, %v2887, 0
    %v2980 = vsel %vm2939, %v2889, 0
    %v2982 = vsel %vm2939, %v2891, 0
    %v2984 = vsel %vm2939, %v2893, 0
    %v2986 = vsel %vm2939, %v2895, 0
    %v2988 = vsel %vm2939, %v2897, 0
    %v2990 = vsel %vm2939, %v2899, 0
    %v2992 = vsel %vm2939, %v2901, 0
    %v2994 = vsel %vm2939, %v2903, 0
    %v2996 = vsel %vm2939, %v2905, 0
    %v2998 = vsel %vm2939, %v2907, 0
    %v3000 = vsel %vm2939, %v2909, 0
    %v3002 = vsel %vm2939, %v2911, 0
    %vm3004 = vcmask 1041408
    %v3006 = vsel %vm3004, %v2936, 0
    %3008 = vmatprep.subr.bf16.mxu0 0
    %3009 = vmatpush1.bf16.msra.mxu0 %v2934
    %3010 = vmatprep.subr.bf16.mxu0 0
    %3011 = vmatpush1.bf16.msra.mxu0 %v2935
    %3012 = vmatprep.subr.bf16.mxu0 0
    %3013 = vmatpush1.bf16.msra.mxu0 %v3006
    %3014 = vmatprep.subr.bf16.mxu0 0
    %3015 = vmatpush1.bf16.msra.mxu0 0
    %3016 = vmatprep.subr.bf16.mxu0 0
    %3017 = vmatpush1.bf16.msra.mxu0 0
    %3018 = vmatprep.subr.bf16.mxu0 0
    %3019 = vmatpush1.bf16.msra.mxu0 0
    %3020 = vmatprep.subr.bf16.mxu0 0
    %3021 = vmatpush1.bf16.msra.mxu0 0
    %3022 = vmatprep.subr.bf16.mxu0 0
    %3023 = vmatpush1.bf16.msra.mxu0 0
    %3024 = vmatprep.subr.bf16.mxu0 0
    %3025 = vmatpush1.bf16.msra.mxu0 0
    %3026 = vmatprep.subr.bf16.mxu0 0
    %3027 = vmatpush1.bf16.msra.mxu0 0
    %3028 = vmatprep.subr.bf16.mxu0 0
    %3029 = vmatpush1.bf16.msra.mxu0 0
    %3030 = vmatprep.subr.bf16.mxu0 0
    %3031 = vmatpush1.bf16.msra.mxu0 0
    %3032 = vmatprep.subr.bf16.mxu0 0
    %3033 = vmatpush1.bf16.msra.mxu0 0
    %3034 = vmatprep.subr.bf16.mxu0 0
    %3035 = vmatpush1.bf16.msra.mxu0 0
    %3036 = vmatprep.subr.bf16.mxu0 0
    %3037 = vmatpush1.bf16.msra.mxu0 0
    %3038 = vmatprep.subr.bf16.mxu0 0
    %3039 = vmatpush1.bf16.msra.mxu0 0
    %3040 = vmatprep.mubr.bf16.mxu0 0
    %3041 = vmatmul.mubr.bf16.gmra.mrb[0].mxu0 %v2940
    %v3042 = vpop.f32.mrb[0].mxu0
    %v3043 = vadd.f32 %v2922, %v3042
    %v3044 = vpop.f32.mrb[0].mxu0
    %v3045 = vpop.f32.mrb[0].mxu0
    %v3046 = vadd.f32 %v2922, %v3045
    %v3047 = vpop.f32.mrb[0].mxu0
    %3048 = vmatprep.mubr.bf16.mxu0 0
    %3049 = vmatmul.mubr.bf16.gmra.mrb[0].mxu0 %v2942
    %v3050 = vpop.f32.mrb[0].mxu0
    %v3051 = vadd.f32 %v2922, %v3050
    %v3052 = vpop.f32.mrb[0].mxu0
    %v3053 = vpop.f32.mrb[0].mxu0
    %v3054 = vadd.f32 %v2922, %v3053
    %v3055 = vpop.f32.mrb[0].mxu0
    %3056 = vmatprep.mubr.bf16.mxu0 0
    %3057 = vmatmul.mubr.bf16.gmra.mrb[0].mxu0 %v2944
    %v3058 = vpop.f32.mrb[0].mxu0
    %v3059 = vadd.f32 %v2922, %v3058
    %v3060 = vpop.f32.mrb[0].mxu0
    %v3061 = vpop.f32.mrb[0].mxu0
    %v3062 = vadd.f32 %v2922, %v3061
    %v3063 = vpop.f32.mrb[0].mxu0
    %3064 = vmatprep.mubr.bf16.mxu0 0
    %3065 = vmatmul.mubr.bf16.gmra.mrb[0].mxu0 %v2946
    %v3066 = vpop.f32.mrb[0].mxu0
    %v3067 = vadd.f32 %v2922, %v3066
    %v3068 = vpop.f32.mrb[0].mxu0
    %v3069 = vpop.f32.mrb[0].mxu0
    %v3070 = vadd.f32 %v2922, %v3069
    %v3071 = vpop.f32.mrb[0].mxu0
    %3072 = vmatprep.mubr.bf16.mxu0 0
    %3073 = vmatmul.mubr.bf16.gmra.mrb[0].mxu0 %v2948
    %v3074 = vpop.f32.mrb[0].mxu0
    %v3075 = vadd.f32 %v2922, %v3074
    %v3076 = vpop.f32.mrb[0].mxu0
    %v3077 = vpop.f32.mrb[0].mxu0
    %v3078 = vadd.f32 %v2922, %v3077
    %v3079 = vpop.f32.mrb[0].mxu0
    %3080 = vmatprep.mubr.bf16.mxu0 0
    %3081 = vmatmul.mubr.bf16.gmra.mrb[0].mxu0 %v2950
    %v3082 = vpop.f32.mrb[0].mxu0
    %v3083 = vadd.f32 %v2922, %v3082
    %v3084 = vpop.f32.mrb[0].mxu0
    %v3085 = vpop.f32.mrb[0].mxu0
    %v3086 = vadd.f32 %v2922, %v3085
    %v3087 = vpop.f32.mrb[0].mxu0
    %3088 = vmatprep.mubr.bf16.mxu0 0
    %3089 = vmatmul.mubr.bf16.gmra.mrb[0].mxu0 %v2952
    %v3090 = vpop.f32.mrb[0].mxu0
    %v3091 = vadd.f32 %v2922, %v3090
    %v3092 = vpop.f32.mrb[0].mxu0
    %v3093 = vpop.f32.mrb[0].mxu0
    %v3094 = vadd.f32 %v2922, %v3093
    %v3095 = vpop.f32.mrb[0].mxu0
    %3096 = vmatprep.mubr.bf16.mxu0 0
    %3097 = vmatmul.mubr.bf16.gmra.mrb[0].mxu0 %v2954
    %v3098 = vpop.f32.mrb[0].mxu0
    %v3099 = vadd.f32 %v2922, %v3098
    %v3100 = vpop.f32.mrb[0].mxu0
    %v3101 = vpop.f32.mrb[0].mxu0
    %v3102 = vadd.f32 %v2922, %v3101
    %v3103 = vpop.f32.mrb[0].mxu0
    %3104 = vmatprep.mubr.bf16.mxu0 0
    %3105 = vmatmul.mubr.bf16.gmra.mrb[0].mxu0 %v2956
    %v3106 = vpop.f32.mrb[0].mxu0
    %v3107 = vadd.f32 %v2922, %v3106
    %v3108 = vpop.f32.mrb[0].mxu0
    %v3109 = vpop.f32.mrb[0].mxu0
    %v3110 = vadd.f32 %v2922, %v3109
    %v3111 = vpop.f32.mrb[0].mxu0
    %3112 = vmatprep.mubr.bf16.mxu0 0
    %3113 = vmatmul.mubr.bf16.gmra.mrb[0].mxu0 %v2958
    %v3114 = vpop.f32.mrb[0].mxu0
    %v3115 = vadd.f32 %v2922, %v3114
    %v3116 = vpop.f32.mrb[0].mxu0
    %v3117 = vpop.f32.mrb[0].mxu0
    %v3118 = vadd.f32 %v2922, %v3117
    %v3119 = vpop.f32.mrb[0].mxu0
    %3120 = vmatprep.mubr.bf16.mxu0 0
    %3121 = vmatmul.mubr.bf16.gmra.mrb[0].mxu0 %v2960
    %v3122 = vpop.f32.mrb[0].mxu0
    %v3123 = vadd.f32 %v2922, %v3122
    %v3124 = vpop.f32.mrb[0].mxu0
    %v3125 = vpop.f32.mrb[0].mxu0
    %v3126 = vadd.f32 %v2922, %v3125
    %v3127 = vpop.f32.mrb[0].mxu0
    %3128 = vmatprep.mubr.bf16.mxu0 0
    %3129 = vmatmul.mubr.bf16.gmra.mrb[0].mxu0 %v2962
    %v3130 = vpop.f32.mrb[0].mxu0
    %v3131 = vadd.f32 %v2922, %v3130
    %v3132 = vpop.f32.mrb[0].mxu0
    %v3133 = vpop.f32.mrb[0].mxu0
    %v3134 = vadd.f32 %v2922, %v3133
    %v3135 = vpop.f32.mrb[0].mxu0
    %3136 = vmatprep.mubr.bf16.mxu0 0
    %3137 = vmatmul.mubr.bf16.gmra.mrb[0].mxu0 %v2964
    %v3138 = vpop.f32.mrb[0].mxu0
    %v3139 = vadd.f32 %v2922, %v3138
    %v3140 = vpop.f32.mrb[0].mxu0
    %v3141 = vpop.f32.mrb[0].mxu0
    %v3142 = vadd.f32 %v2922, %v3141
    %v3143 = vpop.f32.mrb[0].mxu0
    %3144 = vmatprep.mubr.bf16.mxu0 0
    %3145 = vmatmul.mubr.bf16.gmra.mrb[0].mxu0 %v2966
    %v3146 = vpop.f32.mrb[0].mxu0
    %v3147 = vadd.f32 %v2922, %v3146
    %v3148 = vpop.f32.mrb[0].mxu0
    %v3149 = vpop.f32.mrb[0].mxu0
    %v3150 = vadd.f32 %v2922, %v3149
    %v3151 = vpop.f32.mrb[0].mxu0
    %3152 = vmatprep.mubr.bf16.mxu0 0
    %3153 = vmatmul.mubr.bf16.gmra.mrb[0].mxu0 %v2968
    %v3154 = vpop.f32.mrb[0].mxu0
    %v3155 = vadd.f32 %v2922, %v3154
    %v3156 = vpop.f32.mrb[0].mxu0
    %v3157 = vpop.f32.mrb[0].mxu0
    %v3158 = vadd.f32 %v2922, %v3157
    %v3159 = vpop.f32.mrb[0].mxu0
    %3160 = vmatprep.mubr.bf16.mxu0 0
    %3161 = vmatmul.mubr.bf16.gmra.mrb[0].mxu0 %v2970
    %v3162 = vpop.f32.mrb[0].mxu0
    %v3163 = vadd.f32 %v2922, %v3162
    %v3164 = vpop.f32.mrb[0].mxu0
    %v3165 = vpop.f32.mrb[0].mxu0
    %v3166 = vadd.f32 %v2922, %v3165
    %v3167 = vpop.f32.mrb[0].mxu0
    %3168 = vmatprep.mubr.bf16.mxu0 0
    %3169 = vmatmul.mubr.bf16.gmra.mrb[0].mxu0 %v2972
    %v3170 = vpop.f32.mrb[0].mxu0
    %v3171 = vadd.f32 %v2922, %v3170
    %v3172 = vpop.f32.mrb[0].mxu0
    %v3173 = vpop.f32.mrb[0].mxu0
    %v3174 = vadd.f32 %v2922, %v3173
    %v3175 = vpop.f32.mrb[0].mxu0
    %3176 = vmatprep.mubr.bf16.mxu0 0
    %3177 = vmatmul.mubr.bf16.gmra.mrb[0].mxu0 %v2974
    %v3178 = vpop.f32.mrb[0].mxu0
    %v3179 = vadd.f32 %v2922, %v3178
    %v3180 = vpop.f32.mrb[0].mxu0
    %v3181 = vpop.f32.mrb[0].mxu0
    %v3182 = vadd.f32 %v2922, %v3181
    %v3183 = vpop.f32.mrb[0].mxu0
    %3184 = vmatprep.mubr.bf16.mxu0 0
    %3185 = vmatmul.mubr.bf16.gmra.mrb[0].mxu0 %v2976
    %v3186 = vpop.f32.mrb[0].mxu0
    %v3187 = vadd.f32 %v2922, %v3186
    %v3188 = vpop.f32.mrb[0].mxu0
    %v3189 = vpop.f32.mrb[0].mxu0
    %v3190 = vadd.f32 %v2922, %v3189
    %v3191 = vpop.f32.mrb[0].mxu0
    %3192 = vmatprep.mubr.bf16.mxu0 0
    %3193 = vmatmul.mubr.bf16.gmra.mrb[0].mxu0 %v2978
    %v3194 = vpop.f32.mrb[0].mxu0
    %v3195 = vadd.f32 %v2922, %v3194
    %v3196 = vpop.f32.mrb[0].mxu0
    %v3197 = vpop.f32.mrb[0].mxu0
    %v3198 = vadd.f32 %v2922, %v3197
    %v3199 = vpop.f32.mrb[0].mxu0
    %3200 = vmatprep.mubr.bf16.mxu0 0
    %3201 = vmatmul.mubr.bf16.gmra.mrb[0].mxu0 %v2980
    %v3202 = vpop.f32.mrb[0].mxu0
    %v3203 = vadd.f32 %v2922, %v3202
    %v3204 = vpop.f32.mrb[0].mxu0
    %v3205 = vpop.f32.mrb[0].mxu0
    %v3206 = vadd.f32 %v2922, %v3205
    %v3207 = vpop.f32.mrb[0].mxu0
    %3208 = vmatprep.mubr.bf16.mxu0 0
    %3209 = vmatmul.mubr.bf16.gmra.mrb[0].mxu0 %v2982
    %v3210 = vpop.f32.mrb[0].mxu0
    %v3211 = vadd.f32 %v2922, %v3210
    %v3212 = vpop.f32.mrb[0].mxu0
    %v3213 = vpop.f32.mrb[0].mxu0
    %v3214 = vadd.f32 %v2922, %v3213
    %v3215 = vpop.f32.mrb[0].mxu0
    %3216 = vmatprep.mubr.bf16.mxu0 0
    %3217 = vmatmul.mubr.bf16.gmra.mrb[0].mxu0 %v2984
    %v3218 = vpop.f32.mrb[0].mxu0
    %v3219 = vadd.f32 %v2922, %v3218
    %v3220 = vpop.f32.mrb[0].mxu0
    %v3221 = vpop.f32.mrb[0].mxu0
    %v3222 = vadd.f32 %v2922, %v3221
    %v3223 = vpop.f32.mrb[0].mxu0
    %3224 = vmatprep.mubr.bf16.mxu0 0
    %3225 = vmatmul.mubr.bf16.gmra.mrb[0].mxu0 %v2986
    %v3226 = vpop.f32.mrb[0].mxu0
    %v3227 = vadd.f32 %v2922, %v3226
    %v3228 = vpop.f32.mrb[0].mxu0
    %v3229 = vpop.f32.mrb[0].mxu0
    %v3230 = vadd.f32 %v2922, %v3229
    %v3231 = vpop.f32.mrb[0].mxu0
    %3232 = vmatprep.mubr.bf16.mxu0 0
    %3233 = vmatmul.mubr.bf16.gmra.mrb[0].mxu0 %v2988
    %v3234 = vpop.f32.mrb[0].mxu0
    %v3235 = vadd.f32 %v2922, %v3234
    %v3236 = vpop.f32.mrb[0].mxu0
    %v3237 = vpop.f32.mrb[0].mxu0
    %v3238 = vadd.f32 %v2922, %v3237
    %v3239 = vpop.f32.mrb[0].mxu0
    %3240 = vmatprep.mubr.bf16.mxu0 0
    %3241 = vmatmul.mubr.bf16.gmra.mrb[0].mxu0 %v2990
    %v3242 = vpop.f32.mrb[0].mxu0
    %v3243 = vadd.f32 %v2922, %v3242
    %v3244 = vpop.f32.mrb[0].mxu0
    %v3245 = vpop.f32.mrb[0].mxu0
    %v3246 = vadd.f32 %v2922, %v3245
    %v3247 = vpop.f32.mrb[0].mxu0
    %3248 = vmatprep.mubr.bf16.mxu0 0
    %3249 = vmatmul.mubr.bf16.gmra.mrb[0].mxu0 %v2992
    %v3250 = vpop.f32.mrb[0].mxu0
    %v3251 = vadd.f32 %v2922, %v3250
    %v3252 = vpop.f32.mrb[0].mxu0
    %v3253 = vpop.f32.mrb[0].mxu0
    %v3254 = vadd.f32 %v2922, %v3253
    %v3255 = vpop.f32.mrb[0].mxu0
    %3256 = vmatprep.mubr.bf16.mxu0 0
    %3257 = vmatmul.mubr.bf16.gmra.mrb[0].mxu0 %v2994
    %v3258 = vpop.f32.mrb[0].mxu0
    %v3259 = vadd.f32 %v2922, %v3258
    %v3260 = vpop.f32.mrb[0].mxu0
    %v3261 = vpop.f32.mrb[0].mxu0
    %v3262 = vadd.f32 %v2922, %v3261
    %v3263 = vpop.f32.mrb[0].mxu0
    %3264 = vmatprep.mubr.bf16.mxu0 0
    %3265 = vmatmul.mubr.bf16.gmra.mrb[0].mxu0 %v2996
    %v3266 = vpop.f32.mrb[0].mxu0
    %v3267 = vadd.f32 %v2922, %v3266
    %v3268 = vpop.f32.mrb[0].mxu0
    %v3269 = vpop.f32.mrb[0].mxu0
    %v3270 = vadd.f32 %v2922, %v3269
    %v3271 = vpop.f32.mrb[0].mxu0
    %3272 = vmatprep.mubr.bf16.mxu0 0
    %3273 = vmatmul.mubr.bf16.gmra.mrb[0].mxu0 %v2998
    %v3274 = vpop.f32.mrb[0].mxu0
    %v3275 = vadd.f32 %v2922, %v3274
    %v3276 = vpop.f32.mrb[0].mxu0
    %v3277 = vpop.f32.mrb[0].mxu0
    %v3278 = vadd.f32 %v2922, %v3277
    %v3279 = vpop.f32.mrb[0].mxu0
    %3280 = vmatprep.mubr.bf16.mxu0 0
    %3281 = vmatmul.mubr.bf16.gmra.mrb[0].mxu0 %v3000
    %v3282 = vpop.f32.mrb[0].mxu0
    %v3283 = vadd.f32 %v2922, %v3282
    %v3284 = vpop.f32.mrb[0].mxu0
    %v3285 = vpop.f32.mrb[0].mxu0
    %v3286 = vadd.f32 %v2922, %v3285
    %v3287 = vpop.f32.mrb[0].mxu0
    %3288 = vmatprep.mubr.bf16.mxu0 0
    %3289 = vmatmul.mubr.bf16.gmra.mrb[0].mxu0 %v3002
    %v3290 = vpop.f32.mrb[0].mxu0
    %v3291 = vadd.f32 %v2922, %v3290
    %v3292 = vpop.f32.mrb[0].mxu0
    %v3293 = vpop.f32.mrb[0].mxu0
    %v3294 = vadd.f32 %v2922, %v3293
    %v3295 = vpop.f32.mrb[0].mxu0
    %3296 = vdwg.mxu0
    %v3297 = vpack.c.bf16 %v3046, %v3043
    %v3298 = vpack.c.bf16 %v3054, %v3051
    %v3299 = vpack.c.bf16 %v3062, %v3059
    %v3300 = vpack.c.bf16 %v3070, %v3067
    %v3301 = vpack.c.bf16 %v3078, %v3075
    %v3302 = vpack.c.bf16 %v3086, %v3083
    %v3303 = vpack.c.bf16 %v3094, %v3091
    %v3304 = vpack.c.bf16 %v3102, %v3099
    %v3305 = vpack.c.bf16 %v3110, %v3107
    %v3306 = vpack.c.bf16 %v3118, %v3115
    %v3307 = vpack.c.bf16 %v3126, %v3123
    %v3308 = vpack.c.bf16 %v3134, %v3131
    %v3309 = vpack.c.bf16 %v3142, %v3139
    %v3310 = vpack.c.bf16 %v3150, %v3147
    %v3311 = vpack.c.bf16 %v3158, %v3155
    %v3312 = vpack.c.bf16 %v3166, %v3163
    %v3313 = vpack.c.bf16 %v3174, %v3171
    %v3314 = vpack.c.bf16 %v3182, %v3179
    %v3315 = vpack.c.bf16 %v3190, %v3187
    %v3316 = vpack.c.bf16 %v3198, %v3195
    %v3317 = vpack.c.bf16 %v3206, %v3203
    %v3318 = vpack.c.bf16 %v3214, %v3211
    %v3319 = vpack.c.bf16 %v3222, %v3219
    %v3320 = vpack.c.bf16 %v3230, %v3227
    %v3321 = vpack.c.bf16 %v3238, %v3235
    %v3322 = vpack.c.bf16 %v3246, %v3243
    %v3323 = vpack.c.bf16 %v3254, %v3251
    %v3324 = vpack.c.bf16 %v3262, %v3259
    %v3325 = vpack.c.bf16 %v3270, %v3267
    %v3326 = vpack.c.bf16 %v3278, %v3275
    %v3327 = vpack.c.bf16 %v3286, %v3283
    %v3328 = vpack.c.bf16 %v3294, %v3291
    %v3361 = vunpack.c.l.b16 %v3297
    %v3362 = vunpack.c.h.b16 %v3297
    %v3363 = vunpack.c.l.b16 %v3298
    %v3364 = vunpack.c.h.b16 %v3298
    %v3365 = vunpack.c.l.b16 %v3299
    %v3366 = vunpack.c.h.b16 %v3299
    %v3367 = vunpack.c.l.b16 %v3300
    %v3368 = vunpack.c.h.b16 %v3300
    %v3369 = vunpack.c.l.b16 %v3301
    %v3370 = vunpack.c.h.b16 %v3301
    %v3371 = vunpack.c.l.b16 %v3302
    %v3372 = vunpack.c.h.b16 %v3302
    %v3373 = vunpack.c.l.b16 %v3303
    %v3374 = vunpack.c.h.b16 %v3303
    %v3375 = vunpack.c.l.b16 %v3304
    %v3376 = vunpack.c.h.b16 %v3304
    %v3377 = vunpack.c.l.b16 %v3305
    %v3378 = vunpack.c.h.b16 %v3305
    %v3379 = vunpack.c.l.b16 %v3306
    %v3380 = vunpack.c.h.b16 %v3306
    %v3381 = vunpack.c.l.b16 %v3307
    %v3382 = vunpack.c.h.b16 %v3307
    %v3383 = vunpack.c.l.b16 %v3308
    %v3384 = vunpack.c.h.b16 %v3308
    %v3385 = vunpack.c.l.b16 %v3309
    %v3386 = vunpack.c.h.b16 %v3309
    %v3387 = vunpack.c.l.b16 %v3310
    %v3388 = vunpack.c.h.b16 %v3310
    %v3389 = vunpack.c.l.b16 %v3311
    %v3390 = vunpack.c.h.b16 %v3311
    %v3391 = vunpack.c.l.b16 %v3312
    %v3392 = vunpack.c.h.b16 %v3312
    %v3393 = vunpack.c.l.b16 %v3313
    %v3394 = vunpack.c.h.b16 %v3313
    %v3395 = vunpack.c.l.b16 %v3314
    %v3396 = vunpack.c.h.b16 %v3314
    %v3397 = vunpack.c.l.b16 %v3315
    %v3398 = vunpack.c.h.b16 %v3315
    %v3399 = vunpack.c.l.b16 %v3316
    %v3400 = vunpack.c.h.b16 %v3316
    %v3401 = vunpack.c.l.b16 %v3317
    %v3402 = vunpack.c.h.b16 %v3317
    %v3403 = vunpack.c.l.b16 %v3318
    %v3404 = vunpack.c.h.b16 %v3318
    %v3405 = vunpack.c.l.b16 %v3319
    %v3406 = vunpack.c.h.b16 %v3319
    %v3407 = vunpack.c.l.b16 %v3320
    %v3408 = vunpack.c.h.b16 %v3320
    %v3409 = vunpack.c.l.b16 %v3321
    %v3410 = vunpack.c.h.b16 %v3321
    %v3411 = vunpack.c.l.b16 %v3322
    %v3412 = vunpack.c.h.b16 %v3322
    %v3413 = vunpack.c.l.b16 %v3323
    %v3414 = vunpack.c.h.b16 %v3323
    %v3415 = vunpack.c.l.b16 %v3324
    %v3416 = vunpack.c.h.b16 %v3324
    %v3417 = vunpack.c.l.b16 %v3325
    %v3418 = vunpack.c.h.b16 %v3325
    %v3419 = vunpack.c.l.b16 %v3326
    %v3420 = vunpack.c.h.b16 %v3326
    %v3421 = vunpack.c.l.b16 %v3327
    %v3422 = vunpack.c.h.b16 %v3327
    %v3423 = vunpack.c.l.b16 %v3328
    %v3424 = vunpack.c.h.b16 %v3328
    %v3425 = vpack.c.b16 %v3361, %v3361
    %v3426 = vpack.c.b16 %v3362, %v3362
    %v3427 = vpack.c.b16 %v3363, %v3363
    %v3428 = vpack.c.b16 %v3364, %v3364
    %v3429 = vpack.c.b16 %v3365, %v3365
    %v3430 = vpack.c.b16 %v3366, %v3366
    %v3431 = vpack.c.b16 %v3367, %v3367
    %v3432 = vpack.c.b16 %v3368, %v3368
    %v3433 = vpack.c.b16 %v3369, %v3369
    %v3434 = vpack.c.b16 %v3370, %v3370
    %v3435 = vpack.c.b16 %v3371, %v3371
    %v3436 = vpack.c.b16 %v3372, %v3372
    %v3437 = vpack.c.b16 %v3373, %v3373
    %v3438 = vpack.c.b16 %v3374, %v3374
    %v3439 = vpack.c.b16 %v3375, %v3375
    %v3440 = vpack.c.b16 %v3376, %v3376
    %v3441 = vpack.c.b16 %v3377, %v3377
    %v3442 = vpack.c.b16 %v3378, %v3378
    %v3443 = vpack.c.b16 %v3379, %v3379
    %v3444 = vpack.c.b16 %v3380, %v3380
    %v3445 = vpack.c.b16 %v3381, %v3381
    %v3446 = vpack.c.b16 %v3382, %v3382
    %v3447 = vpack.c.b16 %v3383, %v3383
    %v3448 = vpack.c.b16 %v3384, %v3384
    %v3449 = vpack.c.b16 %v3385, %v3385
    %v3450 = vpack.c.b16 %v3386, %v3386
    %v3451 = vpack.c.b16 %v3387, %v3387
    %v3452 = vpack.c.b16 %v3388, %v3388
    %v3453 = vpack.c.b16 %v3389, %v3389
    %v3454 = vpack.c.b16 %v3390, %v3390
    %v3455 = vpack.c.b16 %v3391, %v3391
    %v3456 = vpack.c.b16 %v3392, %v3392
    %v3457 = vpack.c.b16 %v3393, %v3393
    %v3458 = vpack.c.b16 %v3394, %v3394
    %v3459 = vpack.c.b16 %v3395, %v3395
    %v3460 = vpack.c.b16 %v3396, %v3396
    %v3461 = vpack.c.b16 %v3397, %v3397
    %v3462 = vpack.c.b16 %v3398, %v3398
    %v3463 = vpack.c.b16 %v3399, %v3399
    %v3464 = vpack.c.b16 %v3400, %v3400
    %v3465 = vpack.c.b16 %v3401, %v3401
    %v3466 = vpack.c.b16 %v3402, %v3402
    %v3467 = vpack.c.b16 %v3403, %v3403
    %v3468 = vpack.c.b16 %v3404, %v3404
    %v3469 = vpack.c.b16 %v3405, %v3405
    %v3470 = vpack.c.b16 %v3406, %v3406
    %v3471 = vpack.c.b16 %v3407, %v3407
    %v3472 = vpack.c.b16 %v3408, %v3408
    %v3473 = vpack.c.b16 %v3409, %v3409
    %v3474 = vpack.c.b16 %v3410, %v3410
    %v3475 = vpack.c.b16 %v3411, %v3411
    %v3476 = vpack.c.b16 %v3412, %v3412
    %v3477 = vpack.c.b16 %v3413, %v3413
    %v3478 = vpack.c.b16 %v3414, %v3414
    %v3479 = vpack.c.b16 %v3415, %v3415
    %v3480 = vpack.c.b16 %v3416, %v3416
    %v3481 = vpack.c.b16 %v3417, %v3417
    %v3482 = vpack.c.b16 %v3418, %v3418
    %v3483 = vpack.c.b16 %v3419, %v3419
    %v3484 = vpack.c.b16 %v3420, %v3420
    %v3485 = vpack.c.b16 %v3421, %v3421
    %v3486 = vpack.c.b16 %v3422, %v3422
    %v3487 = vpack.c.b16 %v3423, %v3423
    %v3488 = vpack.c.b16 %v3424, %v3424
    %vm3553 = vcmask 93184
    %3554 = vst.msk [vmem:[#allocation8] sm:$0xf] %vm3553, %v3425
    %3555 = vst.msk [vmem:[#allocation8 + $0x4] sm:$0xf] %vm3553, %v3426
    %3556 = vst.msk [vmem:[#allocation8 + $0x8] sm:$0xf] %vm3553, %v3427
    %3557 = vst.msk [vmem:[#allocation8 + $0xc] sm:$0xf] %vm3553, %v3428
    %3558 = vst.msk [vmem:[#allocation8 + $0x10] sm:$0xf] %vm3553, %v3429
    %3559 = vst.msk [vmem:[#allocation8 + $0x14] sm:$0xf] %vm3553, %v3430
    %3560 = vst.msk [vmem:[#allocation8 + $0x18] sm:$0xf] %vm3553, %v3431
    %3561 = vst.msk [vmem:[#allocation8 + $0x1c] sm:$0xf] %vm3553, %v3432
    %3562 = vst.msk [vmem:[#allocation8 + $0x20] sm:$0xf] %vm3553, %v3433
    %3563 = vst.msk [vmem:[#allocation8 + $0x24] sm:$0xf] %vm3553, %v3434
    %3564 = vst.msk [vmem:[#allocation8 + $0x28] sm:$0xf] %vm3553, %v3435
    %3565 = vst.msk [vmem:[#allocation8 + $0x2c] sm:$0xf] %vm3553, %v3436
    %3566 = vst.msk [vmem:[#allocation8 + $0x30] sm:$0xf] %vm3553, %v3437
    %3567 = vst.msk [vmem:[#allocation8 + $0x34] sm:$0xf] %vm3553, %v3438
    %3568 = vst.msk [vmem:[#allocation8 + $0x38] sm:$0xf] %vm3553, %v3439
    %3569 = vst.msk [vmem:[#allocation8 + $0x3c] sm:$0xf] %vm3553, %v3440
    %3570 = vst.msk [vmem:[#allocation8 + $0x40] sm:$0xf] %vm3553, %v3441
    %3571 = vst.msk [vmem:[#allocation8 + $0x44] sm:$0xf] %vm3553, %v3442
    %3572 = vst.msk [vmem:[#allocation8 + $0x48] sm:$0xf] %vm3553, %v3443
    %3573 = vst.msk [vmem:[#allocation8 + $0x4c] sm:$0xf] %vm3553, %v3444
    %3574 = vst.msk [vmem:[#allocation8 + $0x50] sm:$0xf] %vm3553, %v3445
    %3575 = vst.msk [vmem:[#allocation8 + $0x54] sm:$0xf] %vm3553, %v3446
    %3576 = vst.msk [vmem:[#allocation8 + $0x58] sm:$0xf] %vm3553, %v3447
    %3577 = vst.msk [vmem:[#allocation8 + $0x5c] sm:$0xf] %vm3553, %v3448
    %3578 = vst.msk [vmem:[#allocation8 + $0x60] sm:$0xf] %vm3553, %v3449
    %3579 = vst.msk [vmem:[#allocation8 + $0x64] sm:$0xf] %vm3553, %v3450
    %3580 = vst.msk [vmem:[#allocation8 + $0x68] sm:$0xf] %vm3553, %v3451
    %3581 = vst.msk [vmem:[#allocation8 + $0x6c] sm:$0xf] %vm3553, %v3452
    %3582 = vst.msk [vmem:[#allocation8 + $0x70] sm:$0xf] %vm3553, %v3453
    %3583 = vst.msk [vmem:[#allocation8 + $0x74] sm:$0xf] %vm3553, %v3454
    %3584 = vst.msk [vmem:[#allocation8 + $0x78] sm:$0xf] %vm3553, %v3455
    %3585 = vst.msk [vmem:[#allocation8 + $0x7c] sm:$0xf] %vm3553, %v3456
    %3586 = vst.msk [vmem:[#allocation8 + $0x80] sm:$0xf] %vm3553, %v3457
    %3587 = vst.msk [vmem:[#allocation8 + $0x84] sm:$0xf] %vm3553, %v3458
    %3588 = vst.msk [vmem:[#allocation8 + $0x88] sm:$0xf] %vm3553, %v3459
    %3589 = vst.msk [vmem:[#allocation8 + $0x8c] sm:$0xf] %vm3553, %v3460
    %3590 = vst.msk [vmem:[#allocation8 + $0x90] sm:$0xf] %vm3553, %v3461
    %3591 = vst.msk [vmem:[#allocation8 + $0x94] sm:$0xf] %vm3553, %v3462
    %3592 = vst.msk [vmem:[#allocation8 + $0x98] sm:$0xf] %vm3553, %v3463
    %3593 = vst.msk [vmem:[#allocation8 + $0x9c] sm:$0xf] %vm3553, %v3464
    %3594 = vst.msk [vmem:[#allocation8 + $0xa0] sm:$0xf] %vm3553, %v3465
    %3595 = vst.msk [vmem:[#allocation8 + $0xa4] sm:$0xf] %vm3553, %v3466
    %3596 = vst.msk [vmem:[#allocation8 + $0xa8] sm:$0xf] %vm3553, %v3467
    %3597 = vst.msk [vmem:[#allocation8 + $0xac] sm:$0xf] %vm3553, %v3468
    %3598 = vst.msk [vmem:[#allocation8 + $0xb0] sm:$0xf] %vm3553, %v3469
    %3599 = vst.msk [vmem:[#allocation8 + $0xb4] sm:$0xf] %vm3553, %v3470
    %3600 = vst.msk [vmem:[#allocation8 + $0xb8] sm:$0xf] %vm3553, %v3471
    %3601 = vst.msk [vmem:[#allocation8 + $0xbc] sm:$0xf] %vm3553, %v3472
    %3602 = vst.msk [vmem:[#allocation8 + $0xc0] sm:$0xf] %vm3553, %v3473
    %3603 = vst.msk [vmem:[#allocation8 + $0xc4] sm:$0xf] %vm3553, %v3474
    %3604 = vst.msk [vmem:[#allocation8 + $0xc8] sm:$0xf] %vm3553, %v3475
    %3605 = vst.msk [vmem:[#allocation8 + $0xcc] sm:$0xf] %vm3553, %v3476
    %3606 = vst.msk [vmem:[#allocation8 + $0xd0] sm:$0xf] %vm3553, %v3477
    %3607 = vst.msk [vmem:[#allocation8 + $0xd4] sm:$0xf] %vm3553, %v3478
    %3608 = vst.msk [vmem:[#allocation8 + $0xd8] sm:$0xf] %vm3553, %v3479
    %3609 = vst.msk [vmem:[#allocation8 + $0xdc] sm:$0xf] %vm3553, %v3480
    %3610 = vst.msk [vmem:[#allocation8 + $0xe0] sm:$0xf] %vm3553, %v3481
    %3611 = vst.msk [vmem:[#allocation8 + $0xe4] sm:$0xf] %vm3553, %v3482
    %3612 = vst.msk [vmem:[#allocation8 + $0xe8] sm:$0xf] %vm3553, %v3483
    %3613 = vst.msk [vmem:[#allocation8 + $0xec] sm:$0xf] %vm3553, %v3484
    %3614 = vst.msk [vmem:[#allocation8 + $0xf0] sm:$0xf] %vm3553, %v3485
    %3615 = vst.msk [vmem:[#allocation8 + $0xf4] sm:$0xf] %vm3553, %v3486
    %3616 = vst.msk [vmem:[#allocation8 + $0xf8] sm:$0xf] %vm3553, %v3487
    %3617 = vst.msk [vmem:[#allocation8 + $0xfc] sm:$0xf] %vm3553, %v3488
    %v3618 = vsel %vm1721, %v3043, 0.0
    %v3619 = vsel %vm1721, %v3046, 0.0
    %v3620 = vadd.f32 %v3618, %v3619
    %v3621 = vsel %vm1721, %v3051, 0.0
    %v3622 = vadd.f32 %v3620, %v3621
    %v3623 = vsel %vm1721, %v3054, 0.0
    %v3624 = vadd.f32 %v3622, %v3623
    %v3625 = vsel %vm1721, %v3059, 0.0
    %v3626 = vadd.f32 %v3624, %v3625
    %v3627 = vsel %vm1721, %v3062, 0.0
    %v3628 = vadd.f32 %v3626, %v3627
    %v3629 = vsel %vm1721, %v3067, 0.0
    %v3630 = vadd.f32 %v3628, %v3629
    %v3631 = vsel %vm1721, %v3070, 0.0
    %v3632 = vadd.f32 %v3630, %v3631
    %v3633 = vsel %vm1721, %v3075, 0.0
    %v3634 = vadd.f32 %v3632, %v3633
    %v3635 = vsel %vm1721, %v3078, 0.0
    %v3636 = vadd.f32 %v3634, %v3635
    %v3637 = vsel %vm1721, %v3083, 0.0
    %v3638 = vadd.f32 %v3636, %v3637
    %v3639 = vsel %vm1721, %v3086, 0.0
    %v3640 = vadd.f32 %v3638, %v3639
    %v3641 = vsel %vm1721, %v3091, 0.0
    %v3642 = vadd.f32 %v3640, %v3641
    %v3643 = vsel %vm1721, %v3094, 0.0
    %v3644 = vadd.f32 %v3642, %v3643
    %v3645 = vsel %vm1721, %v3099, 0.0
    %v3646 = vadd.f32 %v3644, %v3645
    %v3647 = vsel %vm1721, %v3102, 0.0
    %v3648 = vadd.f32 %v3646, %v3647
    %v3649 = vsel %vm1721, %v3107, 0.0
    %v3650 = vadd.f32 %v3648, %v3649
    %v3651 = vsel %vm1721, %v3110, 0.0
    %v3652 = vadd.f32 %v3650, %v3651
    %v3653 = vsel %vm1721, %v3115, 0.0
    %v3654 = vadd.f32 %v3652, %v3653
    %v3655 = vsel %vm1721, %v3118, 0.0
    %v3656 = vadd.f32 %v3654, %v3655
    %v3657 = vsel %vm1721, %v3123, 0.0
    %v3658 = vadd.f32 %v3656, %v3657
    %v3659 = vsel %vm1721, %v3126, 0.0
    %v3660 = vadd.f32 %v3658, %v3659
    %v3661 = vsel %vm1721, %v3131, 0.0
    %v3662 = vadd.f32 %v3660, %v3661
    %v3663 = vsel %vm1721, %v3134, 0.0
    %v3664 = vadd.f32 %v3662, %v3663
    %v3665 = vsel %vm1721, %v3139, 0.0
    %v3666 = vadd.f32 %v3664, %v3665
    %v3667 = vsel %vm1721, %v3142, 0.0
    %v3668 = vadd.f32 %v3666, %v3667
    %v3669 = vsel %vm1721, %v3147, 0.0
    %v3670 = vadd.f32 %v3668, %v3669
    %v3671 = vsel %vm1721, %v3150, 0.0
    %v3672 = vadd.f32 %v3670, %v3671
    %v3673 = vsel %vm1721, %v3155, 0.0
    %v3674 = vadd.f32 %v3672, %v3673
    %v3675 = vsel %vm1721, %v3158, 0.0
    %v3676 = vadd.f32 %v3674, %v3675
    %v3677 = vsel %vm1721, %v3163, 0.0
    %v3678 = vadd.f32 %v3676, %v3677
    %v3679 = vsel %vm1721, %v3166, 0.0
    %v3680 = vadd.f32 %v3678, %v3679
    %v3681 = vsel %vm1721, %v3171, 0.0
    %v3682 = vadd.f32 %v3680, %v3681
    %v3683 = vsel %vm1721, %v3174, 0.0
    %v3684 = vadd.f32 %v3682, %v3683
    %v3685 = vsel %vm1721, %v3179, 0.0
    %v3686 = vadd.f32 %v3684, %v3685
    %v3687 = vsel %vm1721, %v3182, 0.0
    %v3688 = vadd.f32 %v3686, %v3687
    %v3689 = vsel %vm1721, %v3187, 0.0
    %v3690 = vadd.f32 %v3688, %v3689
    %v3691 = vsel %vm1721, %v3190, 0.0
    %v3692 = vadd.f32 %v3690, %v3691
    %v3693 = vsel %vm1721, %v3195, 0.0
    %v3694 = vadd.f32 %v3692, %v3693
    %v3695 = vsel %vm1721, %v3198, 0.0
    %v3696 = vadd.f32 %v3694, %v3695
    %v3697 = vsel %vm1721, %v3203, 0.0
    %v3698 = vadd.f32 %v3696, %v3697
    %v3699 = vsel %vm1721, %v3206, 0.0
    %v3700 = vadd.f32 %v3698, %v3699
    %v3701 = vsel %vm1721, %v3211, 0.0
    %v3702 = vadd.f32 %v3700, %v3701
    %v3703 = vsel %vm1721, %v3214, 0.0
    %v3704 = vadd.f32 %v3702, %v3703
    %v3705 = vsel %vm1721, %v3219, 0.0
    %v3706 = vadd.f32 %v3704, %v3705
    %v3707 = vsel %vm1721, %v3222, 0.0
    %v3708 = vadd.f32 %v3706, %v3707
    %v3709 = vsel %vm1721, %v3227, 0.0
    %v3710 = vadd.f32 %v3708, %v3709
    %v3711 = vsel %vm1721, %v3230, 0.0
    %v3712 = vadd.f32 %v3710, %v3711
    %v3713 = vsel %vm1721, %v3235, 0.0
    %v3714 = vadd.f32 %v3712, %v3713
    %v3715 = vsel %vm1721, %v3238, 0.0
    %v3716 = vadd.f32 %v3714, %v3715
    %v3717 = vsel %vm1721, %v3243, 0.0
    %v3718 = vadd.f32 %v3716, %v3717
    %v3719 = vsel %vm1721, %v3246, 0.0
    %v3720 = vadd.f32 %v3718, %v3719
    %v3721 = vsel %vm1721, %v3251, 0.0
    %v3722 = vadd.f32 %v3720, %v3721
    %v3723 = vsel %vm1721, %v3254, 0.0
    %v3724 = vadd.f32 %v3722, %v3723
    %v3725 = vsel %vm1721, %v3259, 0.0
    %v3726 = vadd.f32 %v3724, %v3725
    %v3727 = vsel %vm1721, %v3262, 0.0
    %v3728 = vadd.f32 %v3726, %v3727
    %v3729 = vsel %vm1721, %v3267, 0.0
    %v3730 = vadd.f32 %v3728, %v3729
    %v3731 = vsel %vm1721, %v3270, 0.0
    %v3732 = vadd.f32 %v3730, %v3731
    %v3733 = vsel %vm1721, %v3275, 0.0
    %v3734 = vadd.f32 %v3732, %v3733
    %v3735 = vsel %vm1721, %v3278, 0.0
    %v3736 = vadd.f32 %v3734, %v3735
    %v3737 = vsel %vm1721, %v3283, 0.0
    %v3738 = vadd.f32 %v3736, %v3737
    %v3739 = vsel %vm1721, %v3286, 0.0
    %v3740 = vadd.f32 %v3738, %v3739
    %v3741 = vsel %vm1721, %v3291, 0.0
    %v3742 = vadd.f32 %v3740, %v3741
    %v3743 = vsel %vm1721, %v3294, 0.0
    %v3744 = vadd.f32 %v3742, %v3743
    %v3745 = vrot.slane %v3744, 4
    %v3746 = vadd.f32 %v3744, %v3745
    %v3747 = vrot.slane %v3746, 2
    %v3748 = vadd.f32 %v3746, %v3747
    %v3749 = vrot.slane %v3748, 1
    %v3750 = vadd.f32 %v3748, %v3749
    %vm3751 = vcmask 90112
    %3752 = vst.msk [vmem:[#allocation9] sm:$0x1] %vm3751, %v3750
    %v3753 = vmul.f32 %v3043, %v3043
    %v3754 = vmul.f32 %v3046, %v3046
    %v3755 = vmul.f32 %v3051, %v3051
    %v3756 = vmul.f32 %v3054, %v3054
    %v3757 = vmul.f32 %v3059, %v3059
    %v3758 = vmul.f32 %v3062, %v3062
    %v3759 = vmul.f32 %v3067, %v3067
    %v3760 = vmul.f32 %v3070, %v3070
    %v3761 = vmul.f32 %v3075, %v3075
    %v3762 = vmul.f32 %v3078, %v3078
    %v3763 = vmul.f32 %v3083, %v3083
    %v3764 = vmul.f32 %v3086, %v3086
    %v3765 = vmul.f32 %v3091, %v3091
    %v3766 = vmul.f32 %v3094, %v3094
    %v3767 = vmul.f32 %v3099, %v3099
    %v3768 = vmul.f32 %v3102, %v3102
    %v3769 = vmul.f32 %v3107, %v3107
    %v3770 = vmul.f32 %v3110, %v3110
    %v3771 = vmul.f32 %v3115, %v3115
    %v3772 = vmul.f32 %v3118, %v3118
    %v3773 = vmul.f32 %v3123, %v3123
    %v3774 = vmul.f32 %v3126, %v3126
    %v3775 = vmul.f32 %v3131, %v3131
    %v3776 = vmul.f32 %v3134, %v3134
    %v3777 = vmul.f32 %v3139, %v3139
    %v3778 = vmul.f32 %v3142, %v3142
    %v3779 = vmul.f32 %v3147, %v3147
    %v3780 = vmul.f32 %v3150, %v3150
    %v3781 = vmul.f32 %v3155, %v3155
    %v3782 = vmul.f32 %v3158, %v3158
    %v3783 = vmul.f32 %v3163, %v3163
    %v3784 = vmul.f32 %v3166, %v3166
    %v3785 = vmul.f32 %v3171, %v3171
    %v3786 = vmul.f32 %v3174, %v3174
    %v3787 = vmul.f32 %v3179, %v3179
    %v3788 = vmul.f32 %v3182, %v3182
    %v3789 = vmul.f32 %v3187, %v3187
    %v3790 = vmul.f32 %v3190, %v3190
    %v3791 = vmul.f32 %v3195, %v3195
    %v3792 = vmul.f32 %v3198, %v3198
    %v3793 = vmul.f32 %v3203, %v3203
    %v3794 = vmul.f32 %v3206, %v3206
    %v3795 = vmul.f32 %v3211, %v3211
    %v3796 = vmul.f32 %v3214, %v3214
    %v3797 = vmul.f32 %v3219, %v3219
    %v3798 = vmul.f32 %v3222, %v3222
    %v3799 = vmul.f32 %v3227, %v3227
    %v3800 = vmul.f32 %v3230, %v3230
    %v3801 = vmul.f32 %v3235, %v3235
    %v3802 = vmul.f32 %v3238, %v3238
    %v3803 = vmul.f32 %v3243, %v3243
    %v3804 = vmul.f32 %v3246, %v3246
    %v3805 = vmul.f32 %v3251, %v3251
    %v3806 = vmul.f32 %v3254, %v3254
    %v3807 = vmul.f32 %v3259, %v3259
    %v3808 = vmul.f32 %v3262, %v3262
    %v3809 = vmul.f32 %v3267, %v3267
    %v3810 = vmul.f32 %v3270, %v3270
    %v3811 = vmul.f32 %v3275, %v3275
    %v3812 = vmul.f32 %v3278, %v3278
    %v3813 = vmul.f32 %v3283, %v3283
    %v3814 = vmul.f32 %v3286, %v3286
    %v3815 = vmul.f32 %v3291, %v3291
    %v3816 = vmul.f32 %v3294, %v3294
    %v3817 = vsel %vm1721, %v3753, 0.0
    %v3818 = vsel %vm1721, %v3754, 0.0
    %v3819 = vadd.f32 %v3817, %v3818
    %v3820 = vsel %vm1721, %v3755, 0.0
    %v3821 = vadd.f32 %v3819, %v3820
    %v3822 = vsel %vm1721, %v3756, 0.0
    %v3823 = vadd.f32 %v3821, %v3822
    %v3824 = vsel %vm1721, %v3757, 0.0
    %v3825 = vadd.f32 %v3823, %v3824
    %v3826 = vsel %vm1721, %v3758, 0.0
    %v3827 = vadd.f32 %v3825, %v3826
    %v3828 = vsel %vm1721, %v3759, 0.0
    %v3829 = vadd.f32 %v3827, %v3828
    %v3830 = vsel %vm1721, %v3760, 0.0
    %v3831 = vadd.f32 %v3829, %v3830
    %v3832 = vsel %vm1721, %v3761, 0.0
    %v3833 = vadd.f32 %v3831, %v3832
    %v3834 = vsel %vm1721, %v3762, 0.0
    %v3835 = vadd.f32 %v3833, %v3834
    %v3836 = vsel %vm1721, %v3763, 0.0
    %v3837 = vadd.f32 %v3835, %v3836
    %v3838 = vsel %vm1721, %v3764, 0.0
    %v3839 = vadd.f32 %v3837, %v3838
    %v3840 = vsel %vm1721, %v3765, 0.0
    %v3841 = vadd.f32 %v3839, %v3840
    %v3842 = vsel %vm1721, %v3766, 0.0
    %v3843 = vadd.f32 %v3841, %v3842
    %v3844 = vsel %vm1721, %v3767, 0.0
    %v3845 = vadd.f32 %v3843, %v3844
    %v3846 = vsel %vm1721, %v3768, 0.0
    %v3847 = vadd.f32 %v3845, %v3846
    %v3848 = vsel %vm1721, %v3769, 0.0
    %v3849 = vadd.f32 %v3847, %v3848
    %v3850 = vsel %vm1721, %v3770, 0.0
    %v3851 = vadd.f32 %v3849, %v3850
    %v3852 = vsel %vm1721, %v3771, 0.0
    %v3853 = vadd.f32 %v3851, %v3852
    %v3854 = vsel %vm1721, %v3772, 0.0
    %v3855 = vadd.f32 %v3853, %v3854
    %v3856 = vsel %vm1721, %v3773, 0.0
    %v3857 = vadd.f32 %v3855, %v3856
    %v3858 = vsel %vm1721, %v3774, 0.0
    %v3859 = vadd.f32 %v3857, %v3858
    %v3860 = vsel %vm1721, %v3775, 0.0
    %v3861 = vadd.f32 %v3859, %v3860
    %v3862 = vsel %vm1721, %v3776, 0.0
    %v3863 = vadd.f32 %v3861, %v3862
    %v3864 = vsel %vm1721, %v3777, 0.0
    %v3865 = vadd.f32 %v3863, %v3864
    %v3866 = vsel %vm1721, %v3778, 0.0
    %v3867 = vadd.f32 %v3865, %v3866
    %v3868 = vsel %vm1721, %v3779, 0.0
    %v3869 = vadd.f32 %v3867, %v3868
    %v3870 = vsel %vm1721, %v3780, 0.0
    %v3871 = vadd.f32 %v3869, %v3870
    %v3872 = vsel %vm1721, %v3781, 0.0
    %v3873 = vadd.f32 %v3871, %v3872
    %v3874 = vsel %vm1721, %v3782, 0.0
    %v3875 = vadd.f32 %v3873, %v3874
    %v3876 = vsel %vm1721, %v3783, 0.0
    %v3877 = vadd.f32 %v3875, %v3876
    %v3878 = vsel %vm1721, %v3784, 0.0
    %v3879 = vadd.f32 %v3877, %v3878
    %v3880 = vsel %vm1721, %v3785, 0.0
    %v3881 = vadd.f32 %v3879, %v3880
    %v3882 = vsel %vm1721, %v3786, 0.0
    %v3883 = vadd.f32 %v3881, %v3882
    %v3884 = vsel %vm1721, %v3787, 0.0
    %v3885 = vadd.f32 %v3883, %v3884
    %v3886 = vsel %vm1721, %v3788, 0.0
    %v3887 = vadd.f32 %v3885, %v3886
    %v3888 = vsel %vm1721, %v3789, 0.0
    %v3889 = vadd.f32 %v3887, %v3888
    %v3890 = vsel %vm1721, %v3790, 0.0
    %v3891 = vadd.f32 %v3889, %v3890
    %v3892 = vsel %vm1721, %v3791, 0.0
    %v3893 = vadd.f32 %v3891, %v3892
    %v3894 = vsel %vm1721, %v3792, 0.0
    %v3895 = vadd.f32 %v3893, %v3894
    %v3896 = vsel %vm1721, %v3793, 0.0
    %v3897 = vadd.f32 %v3895, %v3896
    %v3898 = vsel %vm1721, %v3794, 0.0
    %v3899 = vadd.f32 %v3897, %v3898
    %v3900 = vsel %vm1721, %v3795, 0.0
    %v3901 = vadd.f32 %v3899, %v3900
    %v3902 = vsel %vm1721, %v3796, 0.0
    %v3903 = vadd.f32 %v3901, %v3902
    %v3904 = vsel %vm1721, %v3797, 0.0
    %v3905 = vadd.f32 %v3903, %v3904
    %v3906 = vsel %vm1721, %v3798, 0.0
    %v3907 = vadd.f32 %v3905, %v3906
    %v3908 = vsel %vm1721, %v3799, 0.0
    %v3909 = vadd.f32 %v3907, %v3908
    %v3910 = vsel %vm1721, %v3800, 0.0
    %v3911 = vadd.f32 %v3909, %v3910
    %v3912 = vsel %vm1721, %v3801, 0.0
    %v3913 = vadd.f32 %v3911, %v3912
    %v3914 = vsel %vm1721, %v3802, 0.0
    %v3915 = vadd.f32 %v3913, %v3914
    %v3916 = vsel %vm1721, %v3803, 0.0
    %v3917 = vadd.f32 %v3915, %v3916
    %v3918 = vsel %vm1721, %v3804, 0.0
    %v3919 = vadd.f32 %v3917, %v3918
    %v3920 = vsel %vm1721, %v3805, 0.0
    %v3921 = vadd.f32 %v3919, %v3920
    %v3922 = vsel %vm1721, %v3806, 0.0
    %v3923 = vadd.f32 %v3921, %v3922
    %v3924 = vsel %vm1721, %v3807, 0.0
    %v3925 = vadd.f32 %v3923, %v3924
    %v3926 = vsel %vm1721, %v3808, 0.0
    %v3927 = vadd.f32 %v3925, %v3926
    %v3928 = vsel %vm1721, %v3809, 0.0
    %v3929 = vadd.f32 %v3927, %v3928
    %v3930 = vsel %vm1721, %v3810, 0.0
    %v3931 = vadd.f32 %v3929, %v3930
    %v3932 = vsel %vm1721, %v3811, 0.0
    %v3933 = vadd.f32 %v3931, %v3932
    %v3934 = vsel %vm1721, %v3812, 0.0
    %v3935 = vadd.f32 %v3933, %v3934
    %v3936 = vsel %vm1721, %v3813, 0.0
    %v3937 = vadd.f32 %v3935, %v3936
    %v3938 = vsel %vm1721, %v3814, 0.0
    %v3939 = vadd.f32 %v3937, %v3938
    %v3940 = vsel %vm1721, %v3815, 0.0
    %v3941 = vadd.f32 %v3939, %v3940
    %v3942 = vsel %vm1721, %v3816, 0.0
    %v3943 = vadd.f32 %v3941, %v3942
    %v3944 = vrot.slane %v3943, 4
    %v3945 = vadd.f32 %v3943, %v3944
    %v3946 = vrot.slane %v3945, 2
    %v3947 = vadd.f32 %v3945, %v3946
    %v3948 = vrot.slane %v3947, 1
    %v3949 = vadd.f32 %v3947, %v3948
    %3950 = vst.msk [vmem:[#allocation11] sm:$0x1] %vm3751, %v3949
    // Predicated region
    $region26: #{tpu_custom_call.1} parent=1 // pred_check
      _
    $region27: #{tpu_custom_call.1} parent=1 // pred_check_branch
      %3952 = sbr.rel (0) target = $region29
    $region28: #{tpu_custom_call.1} parent=1 // pred_region
      %s3954 = ssub.s32 4096, 4096
      %3955 = vsyncadd [#allocation4], %s3954
      %s3956 = sshll.u32 [#allocation8], 4
      %s3957 = int_to_ptr.vmem [resolvable:$true] %s3956
      %3962 = dma.vmem_to_hbm [thread:$0]  %s3957, 4096, %s3, [#allocation4], 64, 64, 4
    $region29: #{tpu_custom_call.1} parent=1 // pred_fallthru
      _
    // Predicated region
    $region30: #{tpu_custom_call.1} parent=1 // pred_check
      _
    $region31: #{tpu_custom_call.1} parent=1 // pred_check_branch
      %3964 = sbr.rel (0) target = $region33
    $region32: #{tpu_custom_call.1} parent=1 // pred_region
      %s3966 = ssub.s32 16, 16
      %3967 = vsyncadd [#allocation10], %s3966
      %s3969 = sshll.u32 [#allocation9], 4
      %s3970 = int_to_ptr.vmem [resolvable:$true] %s3969
      %3972 = dma.vmem_to_hbm [thread:$0]  %s3970, 16, %s4, [#allocation10]
    $region33: #{tpu_custom_call.1} parent=1 // pred_fallthru
      _
    // Predicated region
    $region34: #{tpu_custom_call.1} parent=1 // pred_check
      _
    $region35: #{tpu_custom_call.1} parent=1 // pred_check_branch
      %3974 = sbr.rel (0) target = $region37
    $region36: #{tpu_custom_call.1} parent=1 // pred_region
      %s3976 = ssub.s32 16, 16
      %3977 = vsyncadd [#allocation10], %s3976
      %s3979 = sshll.u32 [#allocation11], 4
      %s3980 = int_to_ptr.vmem [resolvable:$true] %s3979
      %3982 = dma.vmem_to_hbm [thread:$0]  %s3980, 16, %s5, [#allocation10]
    $region37: #{tpu_custom_call.1} parent=1 // pred_fallthru
      _
    // Predicated region
    $region38: #{tpu_custom_call.1} parent=1 // pred_check
      _
    $region39: #{tpu_custom_call.1} parent=1 // pred_check_branch
      %3984 = sbr.rel (0) target = $region41
    $region40: #{tpu_custom_call.1} parent=1 // pred_region
      %3985 = dma.done [#allocation4], 4096
    $region41: #{tpu_custom_call.1} parent=1 // pred_fallthru
      _
    // Predicated region
    $region42: #{tpu_custom_call.1} parent=1 // pred_check
      _
    $region43: #{tpu_custom_call.1} parent=1 // pred_check_branch
      %3987 = sbr.rel (0) target = $region45
    $region44: #{tpu_custom_call.1} parent=1 // pred_region
      %3988 = dma.done [#allocation10], 16
    $region45: #{tpu_custom_call.1} parent=1 // pred_fallthru
      _
    // Predicated region
    $region46: #{tpu_custom_call.1} parent=1 // pred_check
      _
    $region47: #{tpu_custom_call.1} parent=1 // pred_check_branch
      %3990 = sbr.rel (0) target = $region49
    $region48: #{tpu_custom_call.1} parent=1 // pred_region
      %3991 = dma.done [#allocation10], 16
    $region49: #{tpu_custom_call.1} parent=1 // pred_fallthru
      _
    %3992 = vsyncpa [#allocation3], 1
    %3993 = vsyncpa [#allocation6], 1
    %3994 = vsyncpa [#allocation4], 1
    %3995 = vsyncpa [#allocation10], 1

</llo_original>
